<compile_context>
chip_gen: v7x
topology: tpu7x:2x2x1
jax: 0.10.0
libtpu: 0.0.40
codegen_flags: <defaults>
</compile_context>

<pallas_src>
import jax
import jax.numpy as jnp
from jax.experimental import pallas as pl
from jax.experimental.pallas import tpu as pltpu


# ----------------------------------------------------------------------------
# Layer geometry
# ----------------------------------------------------------------------------
LAYER_DIMS = [(196, 64), (64, 128), (128, 256), (256, 256), (256, 576)]


def _pad128(c):
    return ((c + 127) // 128) * 128


PADDED_DIMS = [(_pad128(ci), _pad128(co)) for ci, co in LAYER_DIMS]
# "pre":  out = (A@X)@W_l + X@W_r + b      (A-matmul at width Cin)  -- Cout > Cin
# "post": Y = X@[W_l|W_r]; out = A@Y_l+Y_r+b (A-matmul at width Cout) -- Cout <= Cin
LAYER_MODES = ["pre" if co > ci else "post" for ci, co in PADDED_DIMS]

C_IN = LAYER_DIMS[0][0]               # 196
C_IN_PAD = PADDED_DIMS[0][0]          # 256
C_OUT_FINAL = LAYER_DIMS[-1][1]       # 576
C_OUT_FINAL_PAD = PADDED_DIMS[-1][1]  # 640

_BN_EPS = 1e-5


# ----------------------------------------------------------------------------
# Fused Pallas kernel (runs once per graph / grid step)
# ----------------------------------------------------------------------------
def _sage_post(h_f32, a_bf16, w_ref, b_ref, c_out_pad):
    """W = [W_l | W_r] (Cin_p, 2*Cout_p):  out = A @ (X@W_l) + X@W_r + b."""
    y = jnp.dot(h_f32.astype(jnp.bfloat16), w_ref[...],
                preferred_element_type=jnp.float32)
    aggr = jnp.dot(a_bf16, y[:, :c_out_pad].astype(jnp.bfloat16),
                   preferred_element_type=jnp.float32)
    return aggr + y[:, c_out_pad:] + b_ref[...]


def _sage_pre(h_f32, a_bf16, w_ref, b_ref, c_in_pad):
    """W = [[W_l];[W_r]] (2*Cin_p, Cout_p):  out = (A@X)@W_l + X@W_r + b."""
    h_bf = h_f32.astype(jnp.bfloat16)
    ax = jnp.dot(a_bf16, h_bf, preferred_element_type=jnp.float32)
    out = jnp.dot(ax.astype(jnp.bfloat16), w_ref[:c_in_pad, :],
                  preferred_element_type=jnp.float32)
    out = out + jnp.dot(h_bf, w_ref[c_in_pad:, :],
                        preferred_element_type=jnp.float32)
    return out + b_ref[...]


def _bn_relu(h, g_ref, be_ref):
    """Training-mode BatchNorm1d (biased two-pass variance) + ReLU, f32."""
    mean = jnp.mean(h, axis=0, keepdims=True)
    d = h - mean
    var = jnp.mean(d * d, axis=0, keepdims=True)
    y = d * jax.lax.rsqrt(var + _BN_EPS) * g_ref[...] + be_ref[...]
    return jnp.maximum(y, 0.0)


def mesh_encoder_kernel(a_ref, x_ref,
                        w1, b1, g1, be1,
                        w2, b2, g2, be2,
                        w3, b3, g3, be3,
                        w4, b4, g4, be4,
                        w5, b5,
                        o_ref):
    a_bf16 = a_ref[...]            # already bf16 (pre-cast host-side)
    h = x_ref[...]                 # f32, lane-padded to C_IN_PAD
    layer_params = [(w1, b1, g1, be1), (w2, b2, g2, be2), (w3, b3, g3, be3),
                    (w4, b4, g4, be4), (w5, b5, None, None)]
    for li, (w, b, g, be) in enumerate(layer_params):
        cin_p, cout_p = PADDED_DIMS[li]
        if LAYER_MODES[li] == "pre":
            h = _sage_pre(h, a_bf16, w, b, cin_p)
        else:
            h = _sage_post(h, a_bf16, w, b, cout_p)
        if g is not None:          # no BN/ReLU after layer 5
            h = _bn_relu(h, g, be)
    o_ref[...] = h.astype(o_ref.dtype)


# ----------------------------------------------------------------------------
# pallas_call wrapper: grid over graphs, weights VMEM-resident
# ----------------------------------------------------------------------------
def _per_graph_spec(shape):
    """Stream one graph's block per grid step; squeeze the batch dim."""
    nd = len(shape)
    return pl.BlockSpec((None,) + tuple(shape[1:]),
                        lambda b: (b,) + (0,) * (nd - 1))


def _resident_spec(shape):
    """Same block every grid step -> DMA'd once, stays resident in VMEM."""
    nd = len(shape)
    return pl.BlockSpec(tuple(shape), lambda b: (0,) * nd)


def mesh_encoder_pallas(a_bf16, x_pad, flat_params):
    bsz, n, _ = x_pad.shape
    inputs = (a_bf16, x_pad) + tuple(flat_params)
    in_specs = [_per_graph_spec(a_bf16.shape), _per_graph_spec(x_pad.shape)]
    in_specs += [_resident_spec(p.shape) for p in flat_params]
    return pl.pallas_call(
        mesh_encoder_kernel,
        out_shape=jax.ShapeDtypeStruct((bsz, n, C_OUT_FINAL_PAD), jnp.float32),
        grid=(bsz,),
        in_specs=in_specs,
        out_specs=_per_graph_spec((bsz, n, C_OUT_FINAL_PAD)),
        compiler_params=pltpu.CompilerParams(
            dimension_semantics=("parallel",),        # 2-TC sharding on v7x
            vmem_limit_bytes=32 * 1024 * 1024),
    )(*inputs)


# ----------------------------------------------------------------------------
# Parameter construction (deterministic, synthetic) with lane-aligned padding
# ----------------------------------------------------------------------------
def init_params(key):
    """Params at original dims, zero-padded to multiples of 128, with W_l/W_r
    merged per layer into the layout the kernel expects (bf16)."""
    flat = []
    for li, ((cin, cout), (cin_p, cout_p)) in enumerate(zip(LAYER_DIMS, PADDED_DIMS)):
        key, k1, k2, k3 = jax.random.split(key, 4)
        scale = 1.0 / jnp.sqrt(jnp.float32(cin))
        w_l = jax.random.uniform(k1, (cin, cout), jnp.float32, -scale, scale)
        b_l = jax.random.uniform(k2, (cout,), jnp.float32, -scale, scale)
        w_r = jax.random.uniform(k3, (cin, cout), jnp.float32, -scale, scale)

        w_l_p = jnp.zeros((cin_p, cout_p), jnp.float32).at[:cin, :cout].set(w_l)
        w_r_p = jnp.zeros((cin_p, cout_p), jnp.float32).at[:cin, :cout].set(w_r)
        if LAYER_MODES[li] == "pre":
            w = jnp.concatenate([w_l_p, w_r_p], axis=0)   # (2*Cin_p, Cout_p)
        else:
            w = jnp.concatenate([w_l_p, w_r_p], axis=1)   # (Cin_p, 2*Cout_p)
        w = w.astype(jnp.bfloat16)
        b = jnp.zeros((1, cout_p), jnp.float32).at[0, :cout].set(b_l)
        flat.extend([w, b])

        if li < len(LAYER_DIMS) - 1:   # BatchNorm1d defaults: gamma=1, beta=0
            flat.append(jnp.ones((1, cout_p), jnp.float32))
            flat.append(jnp.zeros((1, cout_p), jnp.float32))
    return flat


def edge_index_to_dense_mean_adj(edge_index, num_nodes):
    """Dense row-normalized adjacency in bf16: A[t, s] = 1/deg(t) if edge s->t."""
    src, dst = edge_index[0], edge_index[1]
    a = jnp.zeros((num_nodes, num_nodes), jnp.float32)
    a = a.at[dst, src].add(1.0)
    deg = jnp.sum(a, axis=1, keepdims=True)
    return (a / jnp.maximum(deg, 1.0)).astype(jnp.bfloat16)


# ----------------------------------------------------------------------------
# Forward pass (one launch for the whole batch of graphs)
# ----------------------------------------------------------------------------
@jax.jit
def mesh_encoder_forward(x, a_bf16, flat_params):
    bsz, n, c_in = x.shape
    x_pad = jnp.zeros((bsz, n, C_IN_PAD), jnp.float32).at[..., :c_in].set(x)
    out_pad = mesh_encoder_pallas(a_bf16, x_pad, flat_params)
    return out_pad[..., :C_OUT_FINAL]


if __name__ == "__main__":
    key = jax.random.PRNGKey(0)
    k_x, k_e, k_p = jax.random.split(key, 3)

    B = 2           # batch of graphs (grid axis; shards across TCs on v7x)
    N = 32          # nodes per mesh (small synthetic graph)
    E = 96          # directed edges per graph

    x = jax.random.normal(k_x, (B, N, C_IN), jnp.float32)
    edge_index = jax.random.randint(k_e, (B, 2, E), 0, N, jnp.int32)

    a_bf16 = jnp.stack([edge_index_to_dense_mean_adj(edge_index[b], N)
                        for b in range(B)])
    flat_params = init_params(k_p)

    out = mesh_encoder_forward(x, a_bf16, flat_params)
    out = jax.block_until_ready(out)

    assert out.shape == (B, N, 576), out.shape
    assert bool(jnp.all(jnp.isfinite(out)))
    print("KERNEL_OK")
</pallas_src>

<mosaic_0001>
module attributes {stable_mosaic.version = 11 : i64} {
  func.func @mesh_encoder_kernel(%arg0: i32, %arg1: memref<1x32x32xbf16, #tpu.memory_space<vmem>>, %arg2: memref<1x32x256xf32, #tpu.memory_space<vmem>>, %arg3: memref<256x256xbf16, #tpu.memory_space<vmem>>, %arg4: memref<1x128xf32, #tpu.memory_space<vmem>>, %arg5: memref<1x128xf32, #tpu.memory_space<vmem>>, %arg6: memref<1x128xf32, #tpu.memory_space<vmem>>, %arg7: memref<128x256xbf16, #tpu.memory_space<vmem>>, %arg8: memref<1x128xf32, #tpu.memory_space<vmem>>, %arg9: memref<1x128xf32, #tpu.memory_space<vmem>>, %arg10: memref<1x128xf32, #tpu.memory_space<vmem>>, %arg11: memref<256x256xbf16, #tpu.memory_space<vmem>>, %arg12: memref<1x256xf32, #tpu.memory_space<vmem>>, %arg13: memref<1x256xf32, #tpu.memory_space<vmem>>, %arg14: memref<1x256xf32, #tpu.memory_space<vmem>>, %arg15: memref<256x512xbf16, #tpu.memory_space<vmem>>, %arg16: memref<1x256xf32, #tpu.memory_space<vmem>>, %arg17: memref<1x256xf32, #tpu.memory_space<vmem>>, %arg18: memref<1x256xf32, #tpu.memory_space<vmem>>, %arg19: memref<512x640xbf16, #tpu.memory_space<vmem>>, %arg20: memref<1x640xf32, #tpu.memory_space<vmem>>, %arg21: memref<1x32x640xf32, #tpu.memory_space<vmem>>) attributes {dimension_semantics = [#tpu.dimension_semantics<parallel>], iteration_bounds = array<i64: 2>, scalar_prefetch = 0 : i64, scratch_operands = 0 : i64, tpu.core_type = #tpu.core_type<tc>, window_params = [{transform_indices = @transform_0, window_bounds = array<i64: 1, 32, 32>}, {transform_indices = @transform_1, window_bounds = array<i64: 1, 32, 256>}, {pipeline_mode = #tpu.pipeline_mode<synchronous>, transform_indices = @transform_2, window_bounds = array<i64: 256, 256>}, {pipeline_mode = #tpu.pipeline_mode<synchronous>, transform_indices = @transform_3, window_bounds = array<i64: 1, 128>}, {pipeline_mode = #tpu.pipeline_mode<synchronous>, transform_indices = @transform_4, window_bounds = array<i64: 1, 128>}, {pipeline_mode = #tpu.pipeline_mode<synchronous>, transform_indices = @transform_5, window_bounds = array<i64: 1, 128>}, {pipeline_mode = #tpu.pipeline_mode<synchronous>, transform_indices = @transform_6, window_bounds = array<i64: 128, 256>}, {pipeline_mode = #tpu.pipeline_mode<synchronous>, transform_indices = @transform_7, window_bounds = array<i64: 1, 128>}, {pipeline_mode = #tpu.pipeline_mode<synchronous>, transform_indices = @transform_8, window_bounds = array<i64: 1, 128>}, {pipeline_mode = #tpu.pipeline_mode<synchronous>, transform_indices = @transform_9, window_bounds = array<i64: 1, 128>}, {pipeline_mode = #tpu.pipeline_mode<synchronous>, transform_indices = @transform_10, window_bounds = array<i64: 256, 256>}, {pipeline_mode = #tpu.pipeline_mode<synchronous>, transform_indices = @transform_11, window_bounds = array<i64: 1, 256>}, {pipeline_mode = #tpu.pipeline_mode<synchronous>, transform_indices = @transform_12, window_bounds = array<i64: 1, 256>}, {pipeline_mode = #tpu.pipeline_mode<synchronous>, transform_indices = @transform_13, window_bounds = array<i64: 1, 256>}, {pipeline_mode = #tpu.pipeline_mode<synchronous>, transform_indices = @transform_14, window_bounds = array<i64: 256, 512>}, {pipeline_mode = #tpu.pipeline_mode<synchronous>, transform_indices = @transform_15, window_bounds = array<i64: 1, 256>}, {pipeline_mode = #tpu.pipeline_mode<synchronous>, transform_indices = @transform_16, window_bounds = array<i64: 1, 256>}, {pipeline_mode = #tpu.pipeline_mode<synchronous>, transform_indices = @transform_17, window_bounds = array<i64: 1, 256>}, {pipeline_mode = #tpu.pipeline_mode<synchronous>, transform_indices = @transform_18, window_bounds = array<i64: 512, 640>}, {pipeline_mode = #tpu.pipeline_mode<synchronous>, transform_indices = @transform_19, window_bounds = array<i64: 1, 640>}, {transform_indices = @transform_20, window_bounds = array<i64: 1, 32, 640>}]} {
    %c0 = arith.constant 0 : index
    %c0_0 = arith.constant 0 : index
    %c0_1 = arith.constant 0 : index
    %0 = vector.load %arg1[%c0, %c0_0, %c0_1] : memref<1x32x32xbf16, #tpu.memory_space<vmem>>, vector<1x32x32xbf16>
    %1 = vector.shape_cast %0 : vector<1x32x32xbf16> to vector<32x32xbf16>
    %c0_2 = arith.constant 0 : index
    %c0_3 = arith.constant 0 : index
    %c0_4 = arith.constant 0 : index
    %2 = vector.load %arg2[%c0_2, %c0_3, %c0_4] : memref<1x32x256xf32, #tpu.memory_space<vmem>>, vector<1x32x256xf32>
    %3 = vector.shape_cast %2 : vector<1x32x256xf32> to vector<32x256xf32>
    %4 = arith.truncf %3 : vector<32x256xf32> to vector<32x256xbf16>
    %c0_5 = arith.constant 0 : index
    %c0_6 = arith.constant 0 : index
    %5 = vector.load %arg3[%c0_5, %c0_6] : memref<256x256xbf16, #tpu.memory_space<vmem>>, vector<256x256xbf16>
    %cst = arith.constant dense<0.000000e+00> : vector<32x256xf32>
    %6 = tpu.matmul %4, %5, %cst {dimension_numbers = #tpu.dot_dimension_numbers<[1], [0], [0], [1], [0, 0, 1, 1], [], []>} : vector<32x256xbf16>, vector<256x256xbf16>, vector<32x256xf32> -> vector<32x256xf32>
    %7 = vector.extract_strided_slice %6 {offsets = [0, 0], sizes = [32, 128], strides = [1, 1]} : vector<32x256xf32> to vector<32x128xf32>
    %8 = arith.truncf %7 : vector<32x128xf32> to vector<32x128xbf16>
    %cst_7 = arith.constant dense<0.000000e+00> : vector<32x128xf32>
    %9 = tpu.matmul %1, %8, %cst_7 {dimension_numbers = #tpu.dot_dimension_numbers<[1], [0], [0], [1], [0, 0, 1, 1], [], []>} : vector<32x32xbf16>, vector<32x128xbf16>, vector<32x128xf32> -> vector<32x128xf32>
    %10 = vector.extract_strided_slice %6 {offsets = [0, 128], sizes = [32, 128], strides = [1, 1]} : vector<32x256xf32> to vector<32x128xf32>
    %11 = arith.addf %9, %10 : vector<32x128xf32>
    %c0_8 = arith.constant 0 : index
    %c0_9 = arith.constant 0 : index
    %12 = vector.load %arg4[%c0_8, %c0_9] : memref<1x128xf32, #tpu.memory_space<vmem>>, vector<1x128xf32>
    %13 = vector.broadcast %12 : vector<1x128xf32> to vector<32x128xf32>
    %14 = arith.addf %11, %13 : vector<32x128xf32>
    %cst_10 = arith.constant dense<0.000000e+00> : vector<128xf32>
    %15 = vector.multi_reduction <add>, %14, %cst_10 [0] : vector<32x128xf32> to vector<128xf32>
    %16 = vector.shape_cast %15 : vector<128xf32> to vector<1x128xf32>
    %cst_11 = arith.constant 3.200000e+01 : f32
    %17 = vector.broadcast %cst_11 : f32 to vector<1x128xf32>
    %18 = arith.divf %16, %17 : vector<1x128xf32>
    %19 = vector.broadcast %18 : vector<1x128xf32> to vector<32x128xf32>
    %20 = arith.subf %14, %19 : vector<32x128xf32>
    %21 = arith.mulf %20, %20 : vector<32x128xf32>
    %cst_12 = arith.constant dense<0.000000e+00> : vector<128xf32>
    %22 = vector.multi_reduction <add>, %21, %cst_12 [0] : vector<32x128xf32> to vector<128xf32>
    %23 = vector.shape_cast %22 : vector<128xf32> to vector<1x128xf32>
    %cst_13 = arith.constant 3.200000e+01 : f32
    %24 = vector.broadcast %cst_13 : f32 to vector<1x128xf32>
    %25 = arith.divf %23, %24 : vector<1x128xf32>
    %cst_14 = arith.constant 9.99999974E-6 : f32
    %26 = vector.broadcast %cst_14 : f32 to vector<1x128xf32>
    %27 = arith.addf %25, %26 : vector<1x128xf32>
    %28 = math.rsqrt %27 : vector<1x128xf32>
    %29 = vector.broadcast %28 : vector<1x128xf32> to vector<32x128xf32>
    %30 = arith.mulf %20, %29 : vector<32x128xf32>
    %c0_15 = arith.constant 0 : index
    %c0_16 = arith.constant 0 : index
    %31 = vector.load %arg5[%c0_15, %c0_16] : memref<1x128xf32, #tpu.memory_space<vmem>>, vector<1x128xf32>
    %32 = vector.broadcast %31 : vector<1x128xf32> to vector<32x128xf32>
    %33 = arith.mulf %30, %32 : vector<32x128xf32>
    %c0_17 = arith.constant 0 : index
    %c0_18 = arith.constant 0 : index
    %34 = vector.load %arg6[%c0_17, %c0_18] : memref<1x128xf32, #tpu.memory_space<vmem>>, vector<1x128xf32>
    %35 = vector.broadcast %34 : vector<1x128xf32> to vector<32x128xf32>
    %36 = arith.addf %33, %35 : vector<32x128xf32>
    %cst_19 = arith.constant 0.000000e+00 : f32
    %37 = vector.broadcast %cst_19 : f32 to vector<32x128xf32>
    %38 = arith.maximumf %36, %37 : vector<32x128xf32>
    %39 = arith.truncf %38 : vector<32x128xf32> to vector<32x128xbf16>
    %c0_20 = arith.constant 0 : index
    %c0_21 = arith.constant 0 : index
    %40 = vector.load %arg7[%c0_20, %c0_21] : memref<128x256xbf16, #tpu.memory_space<vmem>>, vector<128x256xbf16>
    %cst_22 = arith.constant dense<0.000000e+00> : vector<32x256xf32>
    %41 = tpu.matmul %39, %40, %cst_22 {dimension_numbers = #tpu.dot_dimension_numbers<[1], [0], [0], [1], [0, 0, 1, 1], [], []>} : vector<32x128xbf16>, vector<128x256xbf16>, vector<32x256xf32> -> vector<32x256xf32>
    %42 = vector.extract_strided_slice %41 {offsets = [0, 0], sizes = [32, 128], strides = [1, 1]} : vector<32x256xf32> to vector<32x128xf32>
    %43 = arith.truncf %42 : vector<32x128xf32> to vector<32x128xbf16>
    %cst_23 = arith.constant dense<0.000000e+00> : vector<32x128xf32>
    %44 = tpu.matmul %1, %43, %cst_23 {dimension_numbers = #tpu.dot_dimension_numbers<[1], [0], [0], [1], [0, 0, 1, 1], [], []>} : vector<32x32xbf16>, vector<32x128xbf16>, vector<32x128xf32> -> vector<32x128xf32>
    %45 = vector.extract_strided_slice %41 {offsets = [0, 128], sizes = [32, 128], strides = [1, 1]} : vector<32x256xf32> to vector<32x128xf32>
    %46 = arith.addf %44, %45 : vector<32x128xf32>
    %c0_24 = arith.constant 0 : index
    %c0_25 = arith.constant 0 : index
    %47 = vector.load %arg8[%c0_24, %c0_25] : memref<1x128xf32, #tpu.memory_space<vmem>>, vector<1x128xf32>
    %48 = vector.broadcast %47 : vector<1x128xf32> to vector<32x128xf32>
    %49 = arith.addf %46, %48 : vector<32x128xf32>
    %cst_26 = arith.constant dense<0.000000e+00> : vector<128xf32>
    %50 = vector.multi_reduction <add>, %49, %cst_26 [0] : vector<32x128xf32> to vector<128xf32>
    %51 = vector.shape_cast %50 : vector<128xf32> to vector<1x128xf32>
    %cst_27 = arith.constant 3.200000e+01 : f32
    %52 = vector.broadcast %cst_27 : f32 to vector<1x128xf32>
    %53 = arith.divf %51, %52 : vector<1x128xf32>
    %54 = vector.broadcast %53 : vector<1x128xf32> to vector<32x128xf32>
    %55 = arith.subf %49, %54 : vector<32x128xf32>
    %56 = arith.mulf %55, %55 : vector<32x128xf32>
    %cst_28 = arith.constant dense<0.000000e+00> : vector<128xf32>
    %57 = vector.multi_reduction <add>, %56, %cst_28 [0] : vector<32x128xf32> to vector<128xf32>
    %58 = vector.shape_cast %57 : vector<128xf32> to vector<1x128xf32>
    %cst_29 = arith.constant 3.200000e+01 : f32
    %59 = vector.broadcast %cst_29 : f32 to vector<1x128xf32>
    %60 = arith.divf %58, %59 : vector<1x128xf32>
    %cst_30 = arith.constant 9.99999974E-6 : f32
    %61 = vector.broadcast %cst_30 : f32 to vector<1x128xf32>
    %62 = arith.addf %60, %61 : vector<1x128xf32>
    %63 = math.rsqrt %62 : vector<1x128xf32>
    %64 = vector.broadcast %63 : vector<1x128xf32> to vector<32x128xf32>
    %65 = arith.mulf %55, %64 : vector<32x128xf32>
    %c0_31 = arith.constant 0 : index
    %c0_32 = arith.constant 0 : index
    %66 = vector.load %arg9[%c0_31, %c0_32] : memref<1x128xf32, #tpu.memory_space<vmem>>, vector<1x128xf32>
    %67 = vector.broadcast %66 : vector<1x128xf32> to vector<32x128xf32>
    %68 = arith.mulf %65, %67 : vector<32x128xf32>
    %c0_33 = arith.constant 0 : index
    %c0_34 = arith.constant 0 : index
    %69 = vector.load %arg10[%c0_33, %c0_34] : memref<1x128xf32, #tpu.memory_space<vmem>>, vector<1x128xf32>
    %70 = vector.broadcast %69 : vector<1x128xf32> to vector<32x128xf32>
    %71 = arith.addf %68, %70 : vector<32x128xf32>
    %cst_35 = arith.constant 0.000000e+00 : f32
    %72 = vector.broadcast %cst_35 : f32 to vector<32x128xf32>
    %73 = arith.maximumf %71, %72 : vector<32x128xf32>
    %74 = arith.truncf %73 : vector<32x128xf32> to vector<32x128xbf16>
    %cst_36 = arith.constant dense<0.000000e+00> : vector<32x128xf32>
    %75 = tpu.matmul %1, %74, %cst_36 {dimension_numbers = #tpu.dot_dimension_numbers<[1], [0], [0], [1], [0, 0, 1, 1], [], []>} : vector<32x32xbf16>, vector<32x128xbf16>, vector<32x128xf32> -> vector<32x128xf32>
    %76 = arith.truncf %75 : vector<32x128xf32> to vector<32x128xbf16>
    %c0_37 = arith.constant 0 : index
    %c0_38 = arith.constant 0 : index
    %77 = vector.load %arg11[%c0_37, %c0_38] : memref<256x256xbf16, #tpu.memory_space<vmem>>, vector<128x256xbf16>
    %cst_39 = arith.constant dense<0.000000e+00> : vector<32x256xf32>
    %78 = tpu.matmul %76, %77, %cst_39 {dimension_numbers = #tpu.dot_dimension_numbers<[1], [0], [0], [1], [0, 0, 1, 1], [], []>} : vector<32x128xbf16>, vector<128x256xbf16>, vector<32x256xf32> -> vector<32x256xf32>
    %c128 = arith.constant 128 : index
    %c0_40 = arith.constant 0 : index
    %79 = vector.load %arg11[%c128, %c0_40] : memref<256x256xbf16, #tpu.memory_space<vmem>>, vector<128x256xbf16>
    %cst_41 = arith.constant dense<0.000000e+00> : vector<32x256xf32>
    %80 = tpu.matmul %74, %79, %cst_41 {dimension_numbers = #tpu.dot_dimension_numbers<[1], [0], [0], [1], [0, 0, 1, 1], [], []>} : vector<32x128xbf16>, vector<128x256xbf16>, vector<32x256xf32> -> vector<32x256xf32>
    %81 = arith.addf %78, %80 : vector<32x256xf32>
    %c0_42 = arith.constant 0 : index
    %c0_43 = arith.constant 0 : index
    %82 = vector.load %arg12[%c0_42, %c0_43] : memref<1x256xf32, #tpu.memory_space<vmem>>, vector<1x256xf32>
    %83 = vector.broadcast %82 : vector<1x256xf32> to vector<32x256xf32>
    %84 = arith.addf %81, %83 : vector<32x256xf32>
    %cst_44 = arith.constant dense<0.000000e+00> : vector<256xf32>
    %85 = vector.multi_reduction <add>, %84, %cst_44 [0] : vector<32x256xf32> to vector<256xf32>
    %86 = vector.shape_cast %85 : vector<256xf32> to vector<1x256xf32>
    %cst_45 = arith.constant 3.200000e+01 : f32
    %87 = vector.broadcast %cst_45 : f32 to vector<1x256xf32>
    %88 = arith.divf %86, %87 : vector<1x256xf32>
    %89 = vector.broadcast %88 : vector<1x256xf32> to vector<32x256xf32>
    %90 = arith.subf %84, %89 : vector<32x256xf32>
    %91 = arith.mulf %90, %90 : vector<32x256xf32>
    %cst_46 = arith.constant dense<0.000000e+00> : vector<256xf32>
    %92 = vector.multi_reduction <add>, %91, %cst_46 [0] : vector<32x256xf32> to vector<256xf32>
    %93 = vector.shape_cast %92 : vector<256xf32> to vector<1x256xf32>
    %cst_47 = arith.constant 3.200000e+01 : f32
    %94 = vector.broadcast %cst_47 : f32 to vector<1x256xf32>
    %95 = arith.divf %93, %94 : vector<1x256xf32>
    %cst_48 = arith.constant 9.99999974E-6 : f32
    %96 = vector.broadcast %cst_48 : f32 to vector<1x256xf32>
    %97 = arith.addf %95, %96 : vector<1x256xf32>
    %98 = math.rsqrt %97 : vector<1x256xf32>
    %99 = vector.broadcast %98 : vector<1x256xf32> to vector<32x256xf32>
    %100 = arith.mulf %90, %99 : vector<32x256xf32>
    %c0_49 = arith.constant 0 : index
    %c0_50 = arith.constant 0 : index
    %101 = vector.load %arg13[%c0_49, %c0_50] : memref<1x256xf32, #tpu.memory_space<vmem>>, vector<1x256xf32>
    %102 = vector.broadcast %101 : vector<1x256xf32> to vector<32x256xf32>
    %103 = arith.mulf %100, %102 : vector<32x256xf32>
    %c0_51 = arith.constant 0 : index
    %c0_52 = arith.constant 0 : index
    %104 = vector.load %arg14[%c0_51, %c0_52] : memref<1x256xf32, #tpu.memory_space<vmem>>, vector<1x256xf32>
    %105 = vector.broadcast %104 : vector<1x256xf32> to vector<32x256xf32>
    %106 = arith.addf %103, %105 : vector<32x256xf32>
    %cst_53 = arith.constant 0.000000e+00 : f32
    %107 = vector.broadcast %cst_53 : f32 to vector<32x256xf32>
    %108 = arith.maximumf %106, %107 : vector<32x256xf32>
    %109 = arith.truncf %108 : vector<32x256xf32> to vector<32x256xbf16>
    %c0_54 = arith.constant 0 : index
    %c0_55 = arith.constant 0 : index
    %110 = vector.load %arg15[%c0_54, %c0_55] : memref<256x512xbf16, #tpu.memory_space<vmem>>, vector<256x512xbf16>
    %cst_56 = arith.constant dense<0.000000e+00> : vector<32x512xf32>
    %111 = tpu.matmul %109, %110, %cst_56 {dimension_numbers = #tpu.dot_dimension_numbers<[1], [0], [0], [1], [0, 0, 1, 1], [], []>} : vector<32x256xbf16>, vector<256x512xbf16>, vector<32x512xf32> -> vector<32x512xf32>
    %112 = vector.extract_strided_slice %111 {offsets = [0, 0], sizes = [32, 256], strides = [1, 1]} : vector<32x512xf32> to vector<32x256xf32>
    %113 = arith.truncf %112 : vector<32x256xf32> to vector<32x256xbf16>
    %cst_57 = arith.constant dense<0.000000e+00> : vector<32x256xf32>
    %114 = tpu.matmul %1, %113, %cst_57 {dimension_numbers = #tpu.dot_dimension_numbers<[1], [0], [0], [1], [0, 0, 1, 1], [], []>} : vector<32x32xbf16>, vector<32x256xbf16>, vector<32x256xf32> -> vector<32x256xf32>
    %115 = vector.extract_strided_slice %111 {offsets = [0, 256], sizes = [32, 256], strides = [1, 1]} : vector<32x512xf32> to vector<32x256xf32>
    %116 = arith.addf %114, %115 : vector<32x256xf32>
    %c0_58 = arith.constant 0 : index
    %c0_59 = arith.constant 0 : index
    %117 = vector.load %arg16[%c0_58, %c0_59] : memref<1x256xf32, #tpu.memory_space<vmem>>, vector<1x256xf32>
    %118 = vector.broadcast %117 : vector<1x256xf32> to vector<32x256xf32>
    %119 = arith.addf %116, %118 : vector<32x256xf32>
    %cst_60 = arith.constant dense<0.000000e+00> : vector<256xf32>
    %120 = vector.multi_reduction <add>, %119, %cst_60 [0] : vector<32x256xf32> to vector<256xf32>
    %121 = vector.shape_cast %120 : vector<256xf32> to vector<1x256xf32>
    %cst_61 = arith.constant 3.200000e+01 : f32
    %122 = vector.broadcast %cst_61 : f32 to vector<1x256xf32>
    %123 = arith.divf %121, %122 : vector<1x256xf32>
    %124 = vector.broadcast %123 : vector<1x256xf32> to vector<32x256xf32>
    %125 = arith.subf %119, %124 : vector<32x256xf32>
    %126 = arith.mulf %125, %125 : vector<32x256xf32>
    %cst_62 = arith.constant dense<0.000000e+00> : vector<256xf32>
    %127 = vector.multi_reduction <add>, %126, %cst_62 [0] : vector<32x256xf32> to vector<256xf32>
    %128 = vector.shape_cast %127 : vector<256xf32> to vector<1x256xf32>
    %cst_63 = arith.constant 3.200000e+01 : f32
    %129 = vector.broadcast %cst_63 : f32 to vector<1x256xf32>
    %130 = arith.divf %128, %129 : vector<1x256xf32>
    %cst_64 = arith.constant 9.99999974E-6 : f32
    %131 = vector.broadcast %cst_64 : f32 to vector<1x256xf32>
    %132 = arith.addf %130, %131 : vector<1x256xf32>
    %133 = math.rsqrt %132 : vector<1x256xf32>
    %134 = vector.broadcast %133 : vector<1x256xf32> to vector<32x256xf32>
    %135 = arith.mulf %125, %134 : vector<32x256xf32>
    %c0_65 = arith.constant 0 : index
    %c0_66 = arith.constant 0 : index
    %136 = vector.load %arg17[%c0_65, %c0_66] : memref<1x256xf32, #tpu.memory_space<vmem>>, vector<1x256xf32>
    %137 = vector.broadcast %136 : vector<1x256xf32> to vector<32x256xf32>
    %138 = arith.mulf %135, %137 : vector<32x256xf32>
    %c0_67 = arith.constant 0 : index
    %c0_68 = arith.constant 0 : index
    %139 = vector.load %arg18[%c0_67, %c0_68] : memref<1x256xf32, #tpu.memory_space<vmem>>, vector<1x256xf32>
    %140 = vector.broadcast %139 : vector<1x256xf32> to vector<32x256xf32>
    %141 = arith.addf %138, %140 : vector<32x256xf32>
    %cst_69 = arith.constant 0.000000e+00 : f32
    %142 = vector.broadcast %cst_69 : f32 to vector<32x256xf32>
    %143 = arith.maximumf %141, %142 : vector<32x256xf32>
    %144 = arith.truncf %143 : vector<32x256xf32> to vector<32x256xbf16>
    %cst_70 = arith.constant dense<0.000000e+00> : vector<32x256xf32>
    %145 = tpu.matmul %1, %144, %cst_70 {dimension_numbers = #tpu.dot_dimension_numbers<[1], [0], [0], [1], [0, 0, 1, 1], [], []>} : vector<32x32xbf16>, vector<32x256xbf16>, vector<32x256xf32> -> vector<32x256xf32>
    %146 = arith.truncf %145 : vector<32x256xf32> to vector<32x256xbf16>
    %c0_71 = arith.constant 0 : index
    %c0_72 = arith.constant 0 : index
    %147 = vector.load %arg19[%c0_71, %c0_72] : memref<512x640xbf16, #tpu.memory_space<vmem>>, vector<256x640xbf16>
    %cst_73 = arith.constant dense<0.000000e+00> : vector<32x640xf32>
    %148 = tpu.matmul %146, %147, %cst_73 {dimension_numbers = #tpu.dot_dimension_numbers<[1], [0], [0], [1], [0, 0, 1, 1], [], []>} : vector<32x256xbf16>, vector<256x640xbf16>, vector<32x640xf32> -> vector<32x640xf32>
    %c256 = arith.constant 256 : index
    %c0_74 = arith.constant 0 : index
    %149 = vector.load %arg19[%c256, %c0_74] : memref<512x640xbf16, #tpu.memory_space<vmem>>, vector<256x640xbf16>
    %cst_75 = arith.constant dense<0.000000e+00> : vector<32x640xf32>
    %150 = tpu.matmul %144, %149, %cst_75 {dimension_numbers = #tpu.dot_dimension_numbers<[1], [0], [0], [1], [0, 0, 1, 1], [], []>} : vector<32x256xbf16>, vector<256x640xbf16>, vector<32x640xf32> -> vector<32x640xf32>
    %151 = arith.addf %148, %150 : vector<32x640xf32>
    %c0_76 = arith.constant 0 : index
    %c0_77 = arith.constant 0 : index
    %152 = vector.load %arg20[%c0_76, %c0_77] : memref<1x640xf32, #tpu.memory_space<vmem>>, vector<1x640xf32>
    %153 = vector.broadcast %152 : vector<1x640xf32> to vector<32x640xf32>
    %154 = arith.addf %151, %153 : vector<32x640xf32>
    %c0_78 = arith.constant 0 : index
    %c0_79 = arith.constant 0 : index
    %c0_80 = arith.constant 0 : index
    %155 = vector.load %arg21[%c0_78, %c0_79, %c0_80] : memref<1x32x640xf32, #tpu.memory_space<vmem>>, vector<1x32x640xf32>
    %156 = vector.shape_cast %155 : vector<1x32x640xf32> to vector<32x640xf32>
    %157 = vector.shape_cast %154 : vector<32x640xf32> to vector<1x32x640xf32>
    tpu.vector_store %arg21[%c0_78, %c0_79, %c0_80], %157 {strides = array<i32>} : memref<1x32x640xf32, #tpu.memory_space<vmem>>, vector<1x32x640xf32>,
    return
  }
  func.func @transform_0(%arg0: i32) -> (i32, i32, i32) {
    %c0_i32 = arith.constant 0 : i32
    %c0_i32_0 = arith.constant 0 : i32
    %c0_i32_1 = arith.constant 0 : i32
    return %arg0, %c0_i32, %c0_i32_0 : i32, i32, i32
  }
  func.func @transform_1(%arg0: i32) -> (i32, i32, i32) {
    %c0_i32 = arith.constant 0 : i32
    %c0_i32_0 = arith.constant 0 : i32
    %c0_i32_1 = arith.constant 0 : i32
    return %arg0, %c0_i32, %c0_i32_0 : i32, i32, i32
  }
  func.func @transform_2(%arg0: i32) -> (i32, i32) {
    %c0_i32 = arith.constant 0 : i32
    %c0_i32_0 = arith.constant 0 : i32
    %c0_i32_1 = arith.constant 0 : i32
    return %c0_i32, %c0_i32_0 : i32, i32
  }
  func.func @transform_3(%arg0: i32) -> (i32, i32) {
    %c0_i32 = arith.constant 0 : i32
    %c0_i32_0 = arith.constant 0 : i32
    %c0_i32_1 = arith.constant 0 : i32
    return %c0_i32, %c0_i32_0 : i32, i32
  }
  func.func @transform_4(%arg0: i32) -> (i32, i32) {
    %c0_i32 = arith.constant 0 : i32
    %c0_i32_0 = arith.constant 0 : i32
    %c0_i32_1 = arith.constant 0 : i32
    return %c0_i32, %c0_i32_0 : i32, i32
  }
  func.func @transform_5(%arg0: i32) -> (i32, i32) {
    %c0_i32 = arith.constant 0 : i32
    %c0_i32_0 = arith.constant 0 : i32
    %c0_i32_1 = arith.constant 0 : i32
    return %c0_i32, %c0_i32_0 : i32, i32
  }
  func.func @transform_6(%arg0: i32) -> (i32, i32) {
    %c0_i32 = arith.constant 0 : i32
    %c0_i32_0 = arith.constant 0 : i32
    %c0_i32_1 = arith.constant 0 : i32
    return %c0_i32, %c0_i32_0 : i32, i32
  }
  func.func @transform_7(%arg0: i32) -> (i32, i32) {
    %c0_i32 = arith.constant 0 : i32
    %c0_i32_0 = arith.constant 0 : i32
    %c0_i32_1 = arith.constant 0 : i32
    return %c0_i32, %c0_i32_0 : i32, i32
  }
  func.func @transform_8(%arg0: i32) -> (i32, i32) {
    %c0_i32 = arith.constant 0 : i32
    %c0_i32_0 = arith.constant 0 : i32
    %c0_i32_1 = arith.constant 0 : i32
    return %c0_i32, %c0_i32_0 : i32, i32
  }
  func.func @transform_9(%arg0: i32) -> (i32, i32) {
    %c0_i32 = arith.constant 0 : i32
    %c0_i32_0 = arith.constant 0 : i32
    %c0_i32_1 = arith.constant 0 : i32
    return %c0_i32, %c0_i32_0 : i32, i32
  }
  func.func @transform_10(%arg0: i32) -> (i32, i32) {
    %c0_i32 = arith.constant 0 : i32
    %c0_i32_0 = arith.constant 0 : i32
    %c0_i32_1 = arith.constant 0 : i32
    return %c0_i32, %c0_i32_0 : i32, i32
  }
  func.func @transform_11(%arg0: i32) -> (i32, i32) {
    %c0_i32 = arith.constant 0 : i32
    %c0_i32_0 = arith.constant 0 : i32
    %c0_i32_1 = arith.constant 0 : i32
    return %c0_i32, %c0_i32_0 : i32, i32
  }
  func.func @transform_12(%arg0: i32) -> (i32, i32) {
    %c0_i32 = arith.constant 0 : i32
    %c0_i32_0 = arith.constant 0 : i32
    %c0_i32_1 = arith.constant 0 : i32
    return %c0_i32, %c0_i32_0 : i32, i32
  }
  func.func @transform_13(%arg0: i32) -> (i32, i32) {
    %c0_i32 = arith.constant 0 : i32
    %c0_i32_0 = arith.constant 0 : i32
    %c0_i32_1 = arith.constant 0 : i32
    return %c0_i32, %c0_i32_0 : i32, i32
  }
  func.func @transform_14(%arg0: i32) -> (i32, i32) {
    %c0_i32 = arith.constant 0 : i32
    %c0_i32_0 = arith.constant 0 : i32
    %c0_i32_1 = arith.constant 0 : i32
    return %c0_i32, %c0_i32_0 : i32, i32
  }
  func.func @transform_15(%arg0: i32) -> (i32, i32) {
    %c0_i32 = arith.constant 0 : i32
    %c0_i32_0 = arith.constant 0 : i32
    %c0_i32_1 = arith.constant 0 : i32
    return %c0_i32, %c0_i32_0 : i32, i32
  }
  func.func @transform_16(%arg0: i32) -> (i32, i32) {
    %c0_i32 = arith.constant 0 : i32
    %c0_i32_0 = arith.constant 0 : i32
    %c0_i32_1 = arith.constant 0 : i32
    return %c0_i32, %c0_i32_0 : i32, i32
  }
  func.func @transform_17(%arg0: i32) -> (i32, i32) {
    %c0_i32 = arith.constant 0 : i32
    %c0_i32_0 = arith.constant 0 : i32
    %c0_i32_1 = arith.constant 0 : i32
    return %c0_i32, %c0_i32_0 : i32, i32
  }
  func.func @transform_18(%arg0: i32) -> (i32, i32) {
    %c0_i32 = arith.constant 0 : i32
    %c0_i32_0 = arith.constant 0 : i32
    %c0_i32_1 = arith.constant 0 : i32
    return %c0_i32, %c0_i32_0 : i32, i32
  }
  func.func @transform_19(%arg0: i32) -> (i32, i32) {
    %c0_i32 = arith.constant 0 : i32
    %c0_i32_0 = arith.constant 0 : i32
    %c0_i32_1 = arith.constant 0 : i32
    return %c0_i32, %c0_i32_0 : i32, i32
  }
  func.func @transform_20(%arg0: i32) -> (i32, i32, i32) {
    %c0_i32 = arith.constant 0 : i32
    %c0_i32_0 = arith.constant 0 : i32
    %c0_i32_1 = arith.constant 0 : i32
    return %arg0, %c0_i32, %c0_i32_0 : i32, i32, i32
  }
}

</mosaic_0001>

<llo_original>
// kernel: mesh_encoder_forward.1
$region0: #{mesh_encoder_forward.1}
  #allocation0 [shape = 'u32[]', space=smem, size = 0x4, offset = 0x4, fixed_abs, tag = 'smem constant byte address 0x4 - core index']
  #allocation1 [shape = 'u32[144,128]{1,0:T(1,128)}', space=vmem, size = 0x12000, scoped, tag = 'internal scratch']
  %s0 = inlined_call_operand.hbm [shape: bf16[2,32,32], index: 0, kind: input, shape index: {}]
  %s1 = inlined_call_operand.vmem [shape: f32[2,32,256], index: 1, kind: input, shape index: {}]
  %s2 = inlined_call_operand.vmem [shape: bf16[256,256], index: 2, kind: input, shape index: {}]
  %s3 = inlined_call_operand.vmem [shape: f32[1,128], index: 3, kind: input, shape index: {}]
  %s4 = inlined_call_operand.hbm [shape: f32[1,128], index: 4, kind: input, shape index: {}]
  %s5 = inlined_call_operand.vmem [shape: f32[1,128], index: 5, kind: input, shape index: {}]
  %s6 = inlined_call_operand.hbm [shape: bf16[128,256], index: 6, kind: input, shape index: {}]
  %s7 = inlined_call_operand.vmem [shape: f32[1,128], index: 7, kind: input, shape index: {}]
  %s8 = inlined_call_operand.vmem [shape: f32[1,128], index: 8, kind: input, shape index: {}]
  %s9 = inlined_call_operand.vmem [shape: f32[1,128], index: 9, kind: input, shape index: {}]
  %s10 = inlined_call_operand.hbm [shape: bf16[256,256], index: 10, kind: input, shape index: {}]
  %s11 = inlined_call_operand.vmem [shape: f32[1,256], index: 11, kind: input, shape index: {}]
  %s12 = inlined_call_operand.vmem [shape: f32[1,256], index: 12, kind: input, shape index: {}]
  %s13 = inlined_call_operand.vmem [shape: f32[1,256], index: 13, kind: input, shape index: {}]
  %s14 = inlined_call_operand.hbm [shape: bf16[256,512], index: 14, kind: input, shape index: {}]
  %s15 = inlined_call_operand.vmem [shape: f32[1,256], index: 15, kind: input, shape index: {}]
  %s16 = inlined_call_operand.vmem [shape: f32[1,256], index: 16, kind: input, shape index: {}]
  %s17 = inlined_call_operand.vmem [shape: f32[1,256], index: 17, kind: input, shape index: {}]
  %s18 = inlined_call_operand.hbm [shape: bf16[512,640], index: 18, kind: input, shape index: {}]
  %s19 = inlined_call_operand.vmem [shape: f32[1,640], index: 19, kind: input, shape index: {}]
  %s20 = inlined_call_operand.hbm [shape: f32[2,32,640], index: 20, kind: output, shape index: {}]
  %s21 = sld [smem:[#allocation0]]
  $region137: #{mesh_encoder_forward.1} parent=0
    _
  %s23 = ssub.s32 1, %s21
  %s24 = scalar_select 0, %s23, %s21
  $region1: #{mesh_encoder_forward.1} parent=0
    #allocation2 [shape = 'u8[16384]{0}', space=vmem, size = 0x4000, scoped, tag = 'input window, operand 0']
    #allocation3 [shape = 's32[2]{0}', space=sflag, size = 0x8, scoped, tag = 'scoped memory for mesh_encoder_forward.1']
    #allocation4 [shape = 's32[2]{0}', space=sflag, size = 0x8, scoped, tag = 'scoped memory for mesh_encoder_forward.1']
    #allocation5 [shape = 'u8[512]{0}', space=vmem, size = 0x400, scoped, tag = 'input window, operand 4, single buffered']
    #allocation6 [shape = 's32[1]{0}', space=sflag, size = 0x4, scoped, tag = 'scoped memory for mesh_encoder_forward.1']
    #allocation7 [shape = 'u8[65536]{0}', space=vmem, size = 0x10000, scoped, tag = 'input window, operand 6, single buffered']
    #allocation8 [shape = 'u8[131072]{0}', space=vmem, size = 0x20000, scoped, tag = 'input window, operand 10, single buffered']
    #allocation9 [shape = 's32[1]{0}', space=sflag, size = 0x4, scoped, tag = 'scoped memory for mesh_encoder_forward.1']
    #allocation10 [shape = 'u8[262144]{0}', space=vmem, size = 0x40000, scoped, tag = 'input window, operand 14, single buffered']
    #allocation11 [shape = 'u8[655360]{0}', space=vmem, size = 0xa0000, scoped, tag = 'input window, operand 18, single buffered']
    #allocation12 [shape = 's32[1]{0}', space=sflag, size = 0x4, scoped, tag = 'scoped memory for mesh_encoder_forward.1']
    #allocation13 [shape = 'u8[163840]{0}', space=vmem, size = 0x28000, scoped, tag = 'output window, operand 0']
    %25 = vsyncpa [#allocation3], 0
    %s26 = scalar_lea.sflag [#allocation3], 1
    %27 = vsyncpa %s26, 0
    %28 = vsyncpa [#allocation6], 0
    %29 = vsyncpa [#allocation9], 0
    %30 = vsyncpa [#allocation12], 0
    %31 = vsyncpa [#allocation4], 0
    %s32 = scalar_lea.sflag [#allocation4], 1
    %33 = vsyncpa %s32, 0
    loop: start=0, step=1, limit=4
    $region2: #{mesh_encoder_forward.1} parent=1 // loop_pre_header
      _
    $region3: #{mesh_encoder_forward.1} parent=1 // loop_header
      %s35 = sphi 0, %s39
      %p36 = scmp.ge.s32.totalorder %s35, 4
      %s45 = sphi 0, %s47
      %s48 = sphi 0, %s45
      %s49 = sphi 0, %s48
      %s65 = sphi 0, %s49
      %s71 = sphi 0, %s73
      %s74 = sphi 0, %s71
      %s75 = sphi 0, %s74
      %s91 = sphi 0, %s75
      %s95 = sphi 0, %s95
      %s97 = sphi 0, %s95
      %s98 = sphi 0, %s97
      %s112 = sphi 0, %s98
      %s116 = sphi 0, %s116
      %s118 = sphi 0, %s116
      %s119 = sphi 0, %s118
      %s133 = sphi 0, %s119
      %s137 = sphi 0, %s137
      %s139 = sphi 0, %s137
      %s140 = sphi 0, %s139
      %s154 = sphi 0, %s140
      %s158 = sphi 0, %s158
      %s160 = sphi 0, %s158
      %s161 = sphi 0, %s160
      %s175 = sphi 0, %s161
      %s179 = sphi 0, %s179
      %s181 = sphi 0, %s179
      %s182 = sphi 0, %s181
      %s196 = sphi 0, %s182
      %s200 = sphi 0, %s200
      %s202 = sphi 0, %s200
      %s203 = sphi 0, %s202
      %s217 = sphi 0, %s203
      %s221 = sphi 0, %s221
      %s223 = sphi 0, %s221
      %s224 = sphi 0, %s223
      %s238 = sphi 0, %s224
      %s242 = sphi 0, %s242
      %s244 = sphi 0, %s242
      %s245 = sphi 0, %s244
      %s259 = sphi 0, %s245
      %s263 = sphi 0, %s263
      %s265 = sphi 0, %s263
      %s266 = sphi 0, %s265
      %s280 = sphi 0, %s266
      %s284 = sphi 0, %s284
      %s286 = sphi 0, %s284
      %s287 = sphi 0, %s286
      %s301 = sphi 0, %s287
      %s305 = sphi 0, %s305
      %s307 = sphi 0, %s305
      %s308 = sphi 0, %s307
      %s322 = sphi 0, %s308
      %s326 = sphi 0, %s326
      %s328 = sphi 0, %s326
      %s329 = sphi 0, %s328
      %s343 = sphi 0, %s329
      %s347 = sphi 0, %s347
      %s349 = sphi 0, %s347
      %s350 = sphi 0, %s349
      %s364 = sphi 0, %s350
      %s368 = sphi 0, %s368
      %s370 = sphi 0, %s368
      %s371 = sphi 0, %s370
      %s385 = sphi 0, %s371
      %s389 = sphi 0, %s389
      %s391 = sphi 0, %s389
      %s392 = sphi 0, %s391
      %s406 = sphi 0, %s392
      %s410 = sphi 0, %s410
      %s412 = sphi 0, %s410
      %s413 = sphi 0, %s412
      %s427 = sphi 0, %s413
      %s431 = sphi 0, %s431
      %s433 = sphi 0, %s431
      %s434 = sphi 0, %s433
      %s448 = sphi 0, %s434
      %s452 = sphi 0, %s452
      %s454 = sphi 0, %s452
      %s455 = sphi 0, %s454
      %s469 = sphi 0, %s455
      %s475 = sphi 0, %s477
      %s478 = sphi 0, %s475
      %s479 = sphi 0, %s478
      %s495 = sphi 0, %s479
    $region4: #{mesh_encoder_forward.1} parent=1 // loop_header_branch
      %38 = sbr.rel (%p36) target = $region8
    $region5: #{mesh_encoder_forward.1} parent=1 // loop_body
      %s40 = ssub.s32 %s35, 1
      %s41 = ssub.s32 %s35, 2
      %s42 = sadd.s32 %s35, 1
      %s43 = ssub.s32 %s35, %s42
      %p44 = scmp.eq.s32.totalorder %s43, 0
      %s46 = sadd.s32 %s45, 1
      %s47 = scalar_select %p44, %s45, %s46
      %p50 = pneg %p44
      %p51 = scmp.eq.s32.totalorder %s35, 1
      %p52 = por %p50, %p51
      %p53 = scmp.ne.s32.totalorder %s45, %s48
      %p54 = scmp.eq.s32.totalorder %s35, 0
      %p55 = por %p53, %p54
      %p56 = scmp.ne.s32.totalorder %s45, %s48
      %p57 = scmp.eq.s32.totalorder %s40, 1
      %p58 = por %p56, %p57
      %p59 = scmp.ne.s32.totalorder %s48, %s49
      %p60 = scmp.eq.s32.totalorder %s40, 0
      %p61 = por %p59, %p60
      %p62 = scmp.ne.s32.totalorder %s48, %s49
      %p63 = scmp.eq.s32.totalorder %s41, 1
      %p64 = por %p62, %p63
      %p66 = scmp.ne.s32.totalorder %s49, %s65
      %p67 = scmp.eq.s32.totalorder %s41, 0
      %p68 = por %p66, %p67
      %s69 = ssub.s32 %s35, %s42
      %p70 = scmp.eq.s32.totalorder %s69, 0
      %s72 = sadd.s32 %s71, 1
      %s73 = scalar_select %p70, %s71, %s72
      %p76 = pneg %p70
      %p77 = scmp.eq.s32.totalorder %s35, 1
      %p78 = por %p76, %p77
      %p79 = scmp.ne.s32.totalorder %s71, %s74
      %p80 = scmp.eq.s32.totalorder %s35, 0
      %p81 = por %p79, %p80
      %p82 = scmp.ne.s32.totalorder %s71, %s74
      %p83 = scmp.eq.s32.totalorder %s40, 1
      %p84 = por %p82, %p83
      %p85 = scmp.ne.s32.totalorder %s74, %s75
      %p86 = scmp.eq.s32.totalorder %s40, 0
      %p87 = por %p85, %p86
      %p88 = scmp.ne.s32.totalorder %s74, %s75
      %p89 = scmp.eq.s32.totalorder %s41, 1
      %p90 = por %p88, %p89
      %p92 = scmp.ne.s32.totalorder %s75, %s91
      %p93 = scmp.eq.s32.totalorder %s41, 0
      %p94 = por %p92, %p93
      %s96 = sadd.s32 %s95, 1
      %p99 = scmp.eq.s32.totalorder %s35, 1
      %p100 = scmp.ne.s32.totalorder %s95, %s97
      %p101 = scmp.eq.s32.totalorder %s35, 0
      %p102 = por %p100, %p101
      %p103 = scmp.ne.s32.totalorder %s95, %s97
      %p104 = scmp.eq.s32.totalorder %s40, 1
      %p105 = por %p103, %p104
      %p106 = scmp.ne.s32.totalorder %s97, %s98
      %p107 = scmp.eq.s32.totalorder %s40, 0
      %p108 = por %p106, %p107
      %p109 = scmp.ne.s32.totalorder %s97, %s98
      %p110 = scmp.eq.s32.totalorder %s41, 1
      %p111 = por %p109, %p110
      %p113 = scmp.ne.s32.totalorder %s98, %s112
      %p114 = scmp.eq.s32.totalorder %s41, 0
      %p115 = por %p113, %p114
      %s117 = sadd.s32 %s116, 1
      %p120 = scmp.eq.s32.totalorder %s35, 1
      %p121 = scmp.ne.s32.totalorder %s116, %s118
      %p122 = scmp.eq.s32.totalorder %s35, 0
      %p123 = por %p121, %p122
      %p124 = scmp.ne.s32.totalorder %s116, %s118
      %p125 = scmp.eq.s32.totalorder %s40, 1
      %p126 = por %p124, %p125
      %p127 = scmp.ne.s32.totalorder %s118, %s119
      %p128 = scmp.eq.s32.totalorder %s40, 0
      %p129 = por %p127, %p128
      %p130 = scmp.ne.s32.totalorder %s118, %s119
      %p131 = scmp.eq.s32.totalorder %s41, 1
      %p132 = por %p130, %p131
      %p134 = scmp.ne.s32.totalorder %s119, %s133
      %p135 = scmp.eq.s32.totalorder %s41, 0
      %p136 = por %p134, %p135
      %s138 = sadd.s32 %s137, 1
      %p141 = scmp.eq.s32.totalorder %s35, 1
      %p142 = scmp.ne.s32.totalorder %s137, %s139
      %p143 = scmp.eq.s32.totalorder %s35, 0
      %p144 = por %p142, %p143
      %p145 = scmp.ne.s32.totalorder %s137, %s139
      %p146 = scmp.eq.s32.totalorder %s40, 1
      %p147 = por %p145, %p146
      %p148 = scmp.ne.s32.totalorder %s139, %s140
      %p149 = scmp.eq.s32.totalorder %s40, 0
      %p150 = por %p148, %p149
      %p151 = scmp.ne.s32.totalorder %s139, %s140
      %p152 = scmp.eq.s32.totalorder %s41, 1
      %p153 = por %p151, %p152
      %p155 = scmp.ne.s32.totalorder %s140, %s154
      %p156 = scmp.eq.s32.totalorder %s41, 0
      %p157 = por %p155, %p156
      %s159 = sadd.s32 %s158, 1
      %p162 = scmp.eq.s32.totalorder %s35, 1
      %p163 = scmp.ne.s32.totalorder %s158, %s160
      %p164 = scmp.eq.s32.totalorder %s35, 0
      %p165 = por %p163, %p164
      %p166 = scmp.ne.s32.totalorder %s158, %s160
      %p167 = scmp.eq.s32.totalorder %s40, 1
      %p168 = por %p166, %p167
      %p169 = scmp.ne.s32.totalorder %s160, %s161
      %p170 = scmp.eq.s32.totalorder %s40, 0
      %p171 = por %p169, %p170
      %p172 = scmp.ne.s32.totalorder %s160, %s161
      %p173 = scmp.eq.s32.totalorder %s41, 1
      %p174 = por %p172, %p173
      %p176 = scmp.ne.s32.totalorder %s161, %s175
      %p177 = scmp.eq.s32.totalorder %s41, 0
      %p178 = por %p176, %p177
      %s180 = sadd.s32 %s179, 1
      %p183 = scmp.eq.s32.totalorder %s35, 1
      %p184 = scmp.ne.s32.totalorder %s179, %s181
      %p185 = scmp.eq.s32.totalorder %s35, 0
      %p186 = por %p184, %p185
      %p187 = scmp.ne.s32.totalorder %s179, %s181
      %p188 = scmp.eq.s32.totalorder %s40, 1
      %p189 = por %p187, %p188
      %p190 = scmp.ne.s32.totalorder %s181, %s182
      %p191 = scmp.eq.s32.totalorder %s40, 0
      %p192 = por %p190, %p191
      %p193 = scmp.ne.s32.totalorder %s181, %s182
      %p194 = scmp.eq.s32.totalorder %s41, 1
      %p195 = por %p193, %p194
      %p197 = scmp.ne.s32.totalorder %s182, %s196
      %p198 = scmp.eq.s32.totalorder %s41, 0
      %p199 = por %p197, %p198
      %s201 = sadd.s32 %s200, 1
      %p204 = scmp.eq.s32.totalorder %s35, 1
      %p205 = scmp.ne.s32.totalorder %s200, %s202
      %p206 = scmp.eq.s32.totalorder %s35, 0
      %p207 = por %p205, %p206
      %p208 = scmp.ne.s32.totalorder %s200, %s202
      %p209 = scmp.eq.s32.totalorder %s40, 1
      %p210 = por %p208, %p209
      %p211 = scmp.ne.s32.totalorder %s202, %s203
      %p212 = scmp.eq.s32.totalorder %s40, 0
      %p213 = por %p211, %p212
      %p214 = scmp.ne.s32.totalorder %s202, %s203
      %p215 = scmp.eq.s32.totalorder %s41, 1
      %p216 = por %p214, %p215
      %p218 = scmp.ne.s32.totalorder %s203, %s217
      %p219 = scmp.eq.s32.totalorder %s41, 0
      %p220 = por %p218, %p219
      %s222 = sadd.s32 %s221, 1
      %p225 = scmp.eq.s32.totalorder %s35, 1
      %p226 = scmp.ne.s32.totalorder %s221, %s223
      %p227 = scmp.eq.s32.totalorder %s35, 0
      %p228 = por %p226, %p227
      %p229 = scmp.ne.s32.totalorder %s221, %s223
      %p230 = scmp.eq.s32.totalorder %s40, 1
      %p231 = por %p229, %p230
      %p232 = scmp.ne.s32.totalorder %s223, %s224
      %p233 = scmp.eq.s32.totalorder %s40, 0
      %p234 = por %p232, %p233
      %p235 = scmp.ne.s32.totalorder %s223, %s224
      %p236 = scmp.eq.s32.totalorder %s41, 1
      %p237 = por %p235, %p236
      %p239 = scmp.ne.s32.totalorder %s224, %s238
      %p240 = scmp.eq.s32.totalorder %s41, 0
      %p241 = por %p239, %p240
      %s243 = sadd.s32 %s242, 1
      %p246 = scmp.eq.s32.totalorder %s35, 1
      %p247 = scmp.ne.s32.totalorder %s242, %s244
      %p248 = scmp.eq.s32.totalorder %s35, 0
      %p249 = por %p247, %p248
      %p250 = scmp.ne.s32.totalorder %s242, %s244
      %p251 = scmp.eq.s32.totalorder %s40, 1
      %p252 = por %p250, %p251
      %p253 = scmp.ne.s32.totalorder %s244, %s245
      %p254 = scmp.eq.s32.totalorder %s40, 0
      %p255 = por %p253, %p254
      %p256 = scmp.ne.s32.totalorder %s244, %s245
      %p257 = scmp.eq.s32.totalorder %s41, 1
      %p258 = por %p256, %p257
      %p260 = scmp.ne.s32.totalorder %s245, %s259
      %p261 = scmp.eq.s32.totalorder %s41, 0
      %p262 = por %p260, %p261
      %s264 = sadd.s32 %s263, 1
      %p267 = scmp.eq.s32.totalorder %s35, 1
      %p268 = scmp.ne.s32.totalorder %s263, %s265
      %p269 = scmp.eq.s32.totalorder %s35, 0
      %p270 = por %p268, %p269
      %p271 = scmp.ne.s32.totalorder %s263, %s265
      %p272 = scmp.eq.s32.totalorder %s40, 1
      %p273 = por %p271, %p272
      %p274 = scmp.ne.s32.totalorder %s265, %s266
      %p275 = scmp.eq.s32.totalorder %s40, 0
      %p276 = por %p274, %p275
      %p277 = scmp.ne.s32.totalorder %s265, %s266
      %p278 = scmp.eq.s32.totalorder %s41, 1
      %p279 = por %p277, %p278
      %p281 = scmp.ne.s32.totalorder %s266, %s280
      %p282 = scmp.eq.s32.totalorder %s41, 0
      %p283 = por %p281, %p282
      %s285 = sadd.s32 %s284, 1
      %p288 = scmp.eq.s32.totalorder %s35, 1
      %p289 = scmp.ne.s32.totalorder %s284, %s286
      %p290 = scmp.eq.s32.totalorder %s35, 0
      %p291 = por %p289, %p290
      %p292 = scmp.ne.s32.totalorder %s284, %s286
      %p293 = scmp.eq.s32.totalorder %s40, 1
      %p294 = por %p292, %p293
      %p295 = scmp.ne.s32.totalorder %s286, %s287
      %p296 = scmp.eq.s32.totalorder %s40, 0
      %p297 = por %p295, %p296
      %p298 = scmp.ne.s32.totalorder %s286, %s287
      %p299 = scmp.eq.s32.totalorder %s41, 1
      %p300 = por %p298, %p299
      %p302 = scmp.ne.s32.totalorder %s287, %s301
      %p303 = scmp.eq.s32.totalorder %s41, 0
      %p304 = por %p302, %p303
      %s306 = sadd.s32 %s305, 1
      %p309 = scmp.eq.s32.totalorder %s35, 1
      %p310 = scmp.ne.s32.totalorder %s305, %s307
      %p311 = scmp.eq.s32.totalorder %s35, 0
      %p312 = por %p310, %p311
      %p313 = scmp.ne.s32.totalorder %s305, %s307
      %p314 = scmp.eq.s32.totalorder %s40, 1
      %p315 = por %p313, %p314
      %p316 = scmp.ne.s32.totalorder %s307, %s308
      %p317 = scmp.eq.s32.totalorder %s40, 0
      %p318 = por %p316, %p317
      %p319 = scmp.ne.s32.totalorder %s307, %s308
      %p320 = scmp.eq.s32.totalorder %s41, 1
      %p321 = por %p319, %p320
      %p323 = scmp.ne.s32.totalorder %s308, %s322
      %p324 = scmp.eq.s32.totalorder %s41, 0
      %p325 = por %p323, %p324
      %s327 = sadd.s32 %s326, 1
      %p330 = scmp.eq.s32.totalorder %s35, 1
      %p331 = scmp.ne.s32.totalorder %s326, %s328
      %p332 = scmp.eq.s32.totalorder %s35, 0
      %p333 = por %p331, %p332
      %p334 = scmp.ne.s32.totalorder %s326, %s328
      %p335 = scmp.eq.s32.totalorder %s40, 1
      %p336 = por %p334, %p335
      %p337 = scmp.ne.s32.totalorder %s328, %s329
      %p338 = scmp.eq.s32.totalorder %s40, 0
      %p339 = por %p337, %p338
      %p340 = scmp.ne.s32.totalorder %s328, %s329
      %p341 = scmp.eq.s32.totalorder %s41, 1
      %p342 = por %p340, %p341
      %p344 = scmp.ne.s32.totalorder %s329, %s343
      %p345 = scmp.eq.s32.totalorder %s41, 0
      %p346 = por %p344, %p345
      %s348 = sadd.s32 %s347, 1
      %p351 = scmp.eq.s32.totalorder %s35, 1
      %p352 = scmp.ne.s32.totalorder %s347, %s349
      %p353 = scmp.eq.s32.totalorder %s35, 0
      %p354 = por %p352, %p353
      %p355 = scmp.ne.s32.totalorder %s347, %s349
      %p356 = scmp.eq.s32.totalorder %s40, 1
      %p357 = por %p355, %p356
      %p358 = scmp.ne.s32.totalorder %s349, %s350
      %p359 = scmp.eq.s32.totalorder %s40, 0
      %p360 = por %p358, %p359
      %p361 = scmp.ne.s32.totalorder %s349, %s350
      %p362 = scmp.eq.s32.totalorder %s41, 1
      %p363 = por %p361, %p362
      %p365 = scmp.ne.s32.totalorder %s350, %s364
      %p366 = scmp.eq.s32.totalorder %s41, 0
      %p367 = por %p365, %p366
      %s369 = sadd.s32 %s368, 1
      %p372 = scmp.eq.s32.totalorder %s35, 1
      %p373 = scmp.ne.s32.totalorder %s368, %s370
      %p374 = scmp.eq.s32.totalorder %s35, 0
      %p375 = por %p373, %p374
      %p376 = scmp.ne.s32.totalorder %s368, %s370
      %p377 = scmp.eq.s32.totalorder %s40, 1
      %p378 = por %p376, %p377
      %p379 = scmp.ne.s32.totalorder %s370, %s371
      %p380 = scmp.eq.s32.totalorder %s40, 0
      %p381 = por %p379, %p380
      %p382 = scmp.ne.s32.totalorder %s370, %s371
      %p383 = scmp.eq.s32.totalorder %s41, 1
      %p384 = por %p382, %p383
      %p386 = scmp.ne.s32.totalorder %s371, %s385
      %p387 = scmp.eq.s32.totalorder %s41, 0
      %p388 = por %p386, %p387
      %s390 = sadd.s32 %s389, 1
      %p393 = scmp.eq.s32.totalorder %s35, 1
      %p394 = scmp.ne.s32.totalorder %s389, %s391
      %p395 = scmp.eq.s32.totalorder %s35, 0
      %p396 = por %p394, %p395
      %p397 = scmp.ne.s32.totalorder %s389, %s391
      %p398 = scmp.eq.s32.totalorder %s40, 1
      %p399 = por %p397, %p398
      %p400 = scmp.ne.s32.totalorder %s391, %s392
      %p401 = scmp.eq.s32.totalorder %s40, 0
      %p402 = por %p400, %p401
      %p403 = scmp.ne.s32.totalorder %s391, %s392
      %p404 = scmp.eq.s32.totalorder %s41, 1
      %p405 = por %p403, %p404
      %p407 = scmp.ne.s32.totalorder %s392, %s406
      %p408 = scmp.eq.s32.totalorder %s41, 0
      %p409 = por %p407, %p408
      %s411 = sadd.s32 %s410, 1
      %p414 = scmp.eq.s32.totalorder %s35, 1
      %p415 = scmp.ne.s32.totalorder %s410, %s412
      %p416 = scmp.eq.s32.totalorder %s35, 0
      %p417 = por %p415, %p416
      %p418 = scmp.ne.s32.totalorder %s410, %s412
      %p419 = scmp.eq.s32.totalorder %s40, 1
      %p420 = por %p418, %p419
      %p421 = scmp.ne.s32.totalorder %s412, %s413
      %p422 = scmp.eq.s32.totalorder %s40, 0
      %p423 = por %p421, %p422
      %p424 = scmp.ne.s32.totalorder %s412, %s413
      %p425 = scmp.eq.s32.totalorder %s41, 1
      %p426 = por %p424, %p425
      %p428 = scmp.ne.s32.totalorder %s413, %s427
      %p429 = scmp.eq.s32.totalorder %s41, 0
      %p430 = por %p428, %p429
      %s432 = sadd.s32 %s431, 1
      %p435 = scmp.eq.s32.totalorder %s35, 1
      %p436 = scmp.ne.s32.totalorder %s431, %s433
      %p437 = scmp.eq.s32.totalorder %s35, 0
      %p438 = por %p436, %p437
      %p439 = scmp.ne.s32.totalorder %s431, %s433
      %p440 = scmp.eq.s32.totalorder %s40, 1
      %p441 = por %p439, %p440
      %p442 = scmp.ne.s32.totalorder %s433, %s434
      %p443 = scmp.eq.s32.totalorder %s40, 0
      %p444 = por %p442, %p443
      %p445 = scmp.ne.s32.totalorder %s433, %s434
      %p446 = scmp.eq.s32.totalorder %s41, 1
      %p447 = por %p445, %p446
      %p449 = scmp.ne.s32.totalorder %s434, %s448
      %p450 = scmp.eq.s32.totalorder %s41, 0
      %p451 = por %p449, %p450
      %s453 = sadd.s32 %s452, 1
      %p456 = scmp.eq.s32.totalorder %s35, 1
      %p457 = scmp.ne.s32.totalorder %s452, %s454
      %p458 = scmp.eq.s32.totalorder %s35, 0
      %p459 = por %p457, %p458
      %p460 = scmp.ne.s32.totalorder %s452, %s454
      %p461 = scmp.eq.s32.totalorder %s40, 1
      %p462 = por %p460, %p461
      %p463 = scmp.ne.s32.totalorder %s454, %s455
      %p464 = scmp.eq.s32.totalorder %s40, 0
      %p465 = por %p463, %p464
      %p466 = scmp.ne.s32.totalorder %s454, %s455
      %p467 = scmp.eq.s32.totalorder %s41, 1
      %p468 = por %p466, %p467
      %p470 = scmp.ne.s32.totalorder %s455, %s469
      %p471 = scmp.eq.s32.totalorder %s41, 0
      %p472 = por %p470, %p471
      %s473 = ssub.s32 %s35, %s42
      %p474 = scmp.eq.s32.totalorder %s473, 0
      %s476 = sadd.s32 %s475, 1
      %s477 = scalar_select %p474, %s475, %s476
      %p480 = pneg %p474
      %p481 = scmp.eq.s32.totalorder %s35, 1
      %p482 = por %p480, %p481
      %p483 = scmp.ne.s32.totalorder %s475, %s478
      %p484 = scmp.eq.s32.totalorder %s35, 0
      %p485 = por %p483, %p484
      %p486 = scmp.ne.s32.totalorder %s475, %s478
      %p487 = scmp.eq.s32.totalorder %s40, 1
      %p488 = por %p486, %p487
      %p489 = scmp.ne.s32.totalorder %s478, %s479
      %p490 = scmp.eq.s32.totalorder %s40, 0
      %p491 = por %p489, %p490
      %p492 = scmp.ne.s32.totalorder %s478, %s479
      %p493 = scmp.eq.s32.totalorder %s41, 1
      %p494 = por %p492, %p493
      %p496 = scmp.ne.s32.totalorder %s479, %s495
      %p497 = scmp.eq.s32.totalorder %s41, 0
      %p498 = por %p496, %p497
      %p499 = scmp.le.s32.totalorder 1, %s35
      %p500 = scmp.lt.s32.totalorder %s35, 3
      %p501 = pnand %p499, %p500
      %p502 = pneg %p501
      // Predicated region
      $region9: #{mesh_encoder_forward.1} parent=5 // pred_check
        _
      $region10: #{mesh_encoder_forward.1} parent=5 // pred_check_branch
        %504 = sbr.rel (%p501) target = $region12
      $region11: #{mesh_encoder_forward.1} parent=5 // pred_region
        %s505 = ssub.s32 %s35, 1
        // Predicated region
        $region13: #{mesh_encoder_forward.1} parent=11 // pred_check
          %p506 = pneg %p108
        $region14: #{mesh_encoder_forward.1} parent=11 // pred_check_branch
          %508 = sbr.rel (%p506) target = $region16
        $region15: #{mesh_encoder_forward.1} parent=11 // pred_region
          _
        $region16: #{mesh_encoder_forward.1} parent=11 // pred_fallthru
          _
        // Predicated region
        $region17: #{mesh_encoder_forward.1} parent=11 // pred_check
          %p509 = pneg %p129
        $region18: #{mesh_encoder_forward.1} parent=11 // pred_check_branch
          %511 = sbr.rel (%p509) target = $region20
        $region19: #{mesh_encoder_forward.1} parent=11 // pred_region
          _
        $region20: #{mesh_encoder_forward.1} parent=11 // pred_fallthru
          _
        // Predicated region
        $region21: #{mesh_encoder_forward.1} parent=11 // pred_check
          %p512 = pneg %p150
        $region22: #{mesh_encoder_forward.1} parent=11 // pred_check_branch
          %514 = sbr.rel (%p512) target = $region24
        $region23: #{mesh_encoder_forward.1} parent=11 // pred_region
          %s516 = ssub.s32 16, 16
          %517 = vsyncadd [#allocation6], %s516
          %s519 = sshll.u32 [#allocation5], 4
          %s520 = int_to_ptr.vmem [resolvable:$true] %s519
          %522 = dma.hbm_to_vmem [thread:$0]  %s4, 16, %s520, [#allocation6]
        $region24: #{mesh_encoder_forward.1} parent=11 // pred_fallthru
          _
        // Predicated region
        $region25: #{mesh_encoder_forward.1} parent=11 // pred_check
          %p523 = pneg %p171
        $region26: #{mesh_encoder_forward.1} parent=11 // pred_check_branch
          %525 = sbr.rel (%p523) target = $region28
        $region27: #{mesh_encoder_forward.1} parent=11 // pred_region
          _
        $region28: #{mesh_encoder_forward.1} parent=11 // pred_fallthru
          _
        // Predicated region
        $region29: #{mesh_encoder_forward.1} parent=11 // pred_check
          %p526 = pneg %p192
        $region30: #{mesh_encoder_forward.1} parent=11 // pred_check_branch
          %528 = sbr.rel (%p526) target = $region32
        $region31: #{mesh_encoder_forward.1} parent=11 // pred_region
          %s530 = ssub.s32 2048, 2048
          %531 = vsyncadd [#allocation6], %s530
          %s532 = sshll.u32 [#allocation7], 4
          %s533 = int_to_ptr.vmem [resolvable:$true] %s532
          %538 = dma.hbm_to_vmem [thread:$0]  %s6, 2048, %s533, [#allocation6], 128, 128, 8
        $region32: #{mesh_encoder_forward.1} parent=11 // pred_fallthru
          _
        // Predicated region
        $region33: #{mesh_encoder_forward.1} parent=11 // pred_check
          %p539 = pneg %p213
        $region34: #{mesh_encoder_forward.1} parent=11 // pred_check_branch
          %541 = sbr.rel (%p539) target = $region36
        $region35: #{mesh_encoder_forward.1} parent=11 // pred_region
          _
        $region36: #{mesh_encoder_forward.1} parent=11 // pred_fallthru
          _
        // Predicated region
        $region37: #{mesh_encoder_forward.1} parent=11 // pred_check
          %p542 = pneg %p234
        $region38: #{mesh_encoder_forward.1} parent=11 // pred_check_branch
          %544 = sbr.rel (%p542) target = $region40
        $region39: #{mesh_encoder_forward.1} parent=11 // pred_region
          _
        $region40: #{mesh_encoder_forward.1} parent=11 // pred_fallthru
          _
        // Predicated region
        $region41: #{mesh_encoder_forward.1} parent=11 // pred_check
          %p545 = pneg %p255
        $region42: #{mesh_encoder_forward.1} parent=11 // pred_check_branch
          %547 = sbr.rel (%p545) target = $region44
        $region43: #{mesh_encoder_forward.1} parent=11 // pred_region
          _
        $region44: #{mesh_encoder_forward.1} parent=11 // pred_fallthru
          _
        // Predicated region
        $region45: #{mesh_encoder_forward.1} parent=11 // pred_check
          %p548 = pneg %p276
        $region46: #{mesh_encoder_forward.1} parent=11 // pred_check_branch
          %550 = sbr.rel (%p548) target = $region48
        $region47: #{mesh_encoder_forward.1} parent=11 // pred_region
          %s552 = ssub.s32 4096, 4096
          %553 = vsyncadd [#allocation9], %s552
          %s554 = sshll.u32 [#allocation8], 4
          %s555 = int_to_ptr.vmem [resolvable:$true] %s554
          %560 = dma.hbm_to_vmem [thread:$0]  %s10, 4096, %s555, [#allocation9], 128, 128, 8
        $region48: #{mesh_encoder_forward.1} parent=11 // pred_fallthru
          _
        // Predicated region
        $region49: #{mesh_encoder_forward.1} parent=11 // pred_check
          %p561 = pneg %p297
        $region50: #{mesh_encoder_forward.1} parent=11 // pred_check_branch
          %563 = sbr.rel (%p561) target = $region52
        $region51: #{mesh_encoder_forward.1} parent=11 // pred_region
          _
        $region52: #{mesh_encoder_forward.1} parent=11 // pred_fallthru
          _
        // Predicated region
        $region53: #{mesh_encoder_forward.1} parent=11 // pred_check
          %p564 = pneg %p318
        $region54: #{mesh_encoder_forward.1} parent=11 // pred_check_branch
          %566 = sbr.rel (%p564) target = $region56
        $region55: #{mesh_encoder_forward.1} parent=11 // pred_region
          _
        $region56: #{mesh_encoder_forward.1} parent=11 // pred_fallthru
          _
        // Predicated region
        $region57: #{mesh_encoder_forward.1} parent=11 // pred_check
          %p567 = pneg %p339
        $region58: #{mesh_encoder_forward.1} parent=11 // pred_check_branch
          %569 = sbr.rel (%p567) target = $region60
        $region59: #{mesh_encoder_forward.1} parent=11 // pred_region
          _
        $region60: #{mesh_encoder_forward.1} parent=11 // pred_fallthru
          _
        // Predicated region
        $region61: #{mesh_encoder_forward.1} parent=11 // pred_check
          %p570 = pneg %p360
        $region62: #{mesh_encoder_forward.1} parent=11 // pred_check_branch
          %572 = sbr.rel (%p570) target = $region64
        $region63: #{mesh_encoder_forward.1} parent=11 // pred_region
          %s574 = ssub.s32 8192, 8192
          %575 = vsyncadd [#allocation9], %s574
          %s576 = sshll.u32 [#allocation10], 4
          %s577 = int_to_ptr.vmem [resolvable:$true] %s576
          %582 = dma.hbm_to_vmem [thread:$0]  %s14, 8192, %s577, [#allocation9], 256, 256, 16
        $region64: #{mesh_encoder_forward.1} parent=11 // pred_fallthru
          _
        // Predicated region
        $region65: #{mesh_encoder_forward.1} parent=11 // pred_check
          %p583 = pneg %p381
        $region66: #{mesh_encoder_forward.1} parent=11 // pred_check_branch
          %585 = sbr.rel (%p583) target = $region68
        $region67: #{mesh_encoder_forward.1} parent=11 // pred_region
          _
        $region68: #{mesh_encoder_forward.1} parent=11 // pred_fallthru
          _
        // Predicated region
        $region69: #{mesh_encoder_forward.1} parent=11 // pred_check
          %p586 = pneg %p402
        $region70: #{mesh_encoder_forward.1} parent=11 // pred_check_branch
          %588 = sbr.rel (%p586) target = $region72
        $region71: #{mesh_encoder_forward.1} parent=11 // pred_region
          _
        $region72: #{mesh_encoder_forward.1} parent=11 // pred_fallthru
          _
        // Predicated region
        $region73: #{mesh_encoder_forward.1} parent=11 // pred_check
          %p589 = pneg %p423
        $region74: #{mesh_encoder_forward.1} parent=11 // pred_check_branch
          %591 = sbr.rel (%p589) target = $region76
        $region75: #{mesh_encoder_forward.1} parent=11 // pred_region
          _
        $region76: #{mesh_encoder_forward.1} parent=11 // pred_fallthru
          _
        // Predicated region
        $region77: #{mesh_encoder_forward.1} parent=11 // pred_check
          %p592 = pneg %p444
        $region78: #{mesh_encoder_forward.1} parent=11 // pred_check_branch
          %594 = sbr.rel (%p592) target = $region80
        $region79: #{mesh_encoder_forward.1} parent=11 // pred_region
          %s596 = ssub.s32 20480, 20480
          %597 = vsyncadd [#allocation12], %s596
          %s598 = sshll.u32 [#allocation11], 4
          %s599 = int_to_ptr.vmem [resolvable:$true] %s598
          %604 = dma.hbm_to_vmem [thread:$0]  %s18, 20480, %s599, [#allocation12], 320, 320, 20
        $region80: #{mesh_encoder_forward.1} parent=11 // pred_fallthru
          _
        // Predicated region
        $region81: #{mesh_encoder_forward.1} parent=11 // pred_check
          %p605 = pneg %p465
        $region82: #{mesh_encoder_forward.1} parent=11 // pred_check_branch
          %607 = sbr.rel (%p605) target = $region84
        $region83: #{mesh_encoder_forward.1} parent=11 // pred_region
          _
        $region84: #{mesh_encoder_forward.1} parent=11 // pred_fallthru
          _
      $region12: #{mesh_encoder_forward.1} parent=5 // pred_fallthru
        _
      %p608 = scmp.lt.s32.totalorder %s35, 2
      // Predicated region
      $region85: #{mesh_encoder_forward.1} parent=5 // pred_check
        %p609 = pneg %p608
      $region86: #{mesh_encoder_forward.1} parent=5 // pred_check_branch
        %611 = sbr.rel (%p609) target = $region88
      $region87: #{mesh_encoder_forward.1} parent=5 // pred_region
        // Predicated region
        $region89: #{mesh_encoder_forward.1} parent=87 // pred_check
          %p612 = pneg %p55
        $region90: #{mesh_encoder_forward.1} parent=87 // pred_check_branch
          %614 = sbr.rel (%p612) target = $region92
        $region91: #{mesh_encoder_forward.1} parent=87 // pred_region
          %s615 = sand.u32 %s45, 1
          %s616 = scalar_lea.sflag [#allocation3], %s615
          %s617 = sand.u32 %s45, 1
          %s618 = smul.addr %s617, 16
          %s619 = scalar_lea.vmem [#allocation2], %s618
          %s621 = ssub.s32 256, 256
          %622 = vsyncadd %s616, %s621
          %s623 = smul.addr %s35, 4
          %s624 = smul.addr %s623, 64
          %s625 = scalar_lea.hbm %s0, %s624
          %s626 = sshll.u32 %s619, 4
          %s627 = int_to_ptr.vmem [resolvable:$true] %s626
          %632 = dma.hbm_to_vmem [thread:$0]  %s625, 256, %s627, %s616, 64, 64, 4
        $region92: #{mesh_encoder_forward.1} parent=87 // pred_fallthru
          _
        // Predicated region
        $region93: #{mesh_encoder_forward.1} parent=87 // pred_check
          %p633 = pneg %p81
        $region94: #{mesh_encoder_forward.1} parent=87 // pred_check_branch
          %635 = sbr.rel (%p633) target = $region96
        $region95: #{mesh_encoder_forward.1} parent=87 // pred_region
          %p636 = scmp.lt.s32.totalorder %s35, 1
          %s637 = scalar_select %p636, %s35, 1
          %s638 = smul.addr %s637, 8
          %s639 = smul.addr %s638, 8
          %s640 = scalar_lea.vmem %s1, %s639
        $region96: #{mesh_encoder_forward.1} parent=87 // pred_fallthru
          _
      $region88: #{mesh_encoder_forward.1} parent=5 // pred_fallthru
        _
      %p641 = scmp.le.s32.totalorder 1, %s35
      %p642 = scmp.lt.s32.totalorder %s35, 3
      %p643 = pnand %p641, %p642
      %p644 = pneg %p643
      // Predicated region
      $region97: #{mesh_encoder_forward.1} parent=5 // pred_check
        _
      $region98: #{mesh_encoder_forward.1} parent=5 // pred_check_branch
        %646 = sbr.rel (%p643) target = $region100
      $region99: #{mesh_encoder_forward.1} parent=5 // pred_region
        %s647 = ssub.s32 %s35, 1
        %s648 = sand.u32 %s48, 1
        %s649 = scalar_lea.sflag [#allocation3], %s648
        %s650 = sand.u32 %s48, 1
        %s651 = smul.addr %s650, 16
        %s652 = scalar_lea.vmem [#allocation2], %s651
        // Predicated region
        $region101: #{mesh_encoder_forward.1} parent=99 // pred_check
          %p653 = pneg %p61
        $region102: #{mesh_encoder_forward.1} parent=99 // pred_check_branch
          %655 = sbr.rel (%p653) target = $region104
        $region103: #{mesh_encoder_forward.1} parent=99 // pred_region
          %656 = dma.done %s649, 256
        $region104: #{mesh_encoder_forward.1} parent=99 // pred_fallthru
          _
        // Predicated region
        $region105: #{mesh_encoder_forward.1} parent=99 // pred_check
          %p657 = pneg %p150
        $region106: #{mesh_encoder_forward.1} parent=99 // pred_check_branch
          %659 = sbr.rel (%p657) target = $region108
        $region107: #{mesh_encoder_forward.1} parent=99 // pred_region
          %660 = dma.done [#allocation6], 16
        $region108: #{mesh_encoder_forward.1} parent=99 // pred_fallthru
          _
        // Predicated region
        $region109: #{mesh_encoder_forward.1} parent=99 // pred_check
          %p661 = pneg %p192
        $region110: #{mesh_encoder_forward.1} parent=99 // pred_check_branch
          %663 = sbr.rel (%p661) target = $region112
        $region111: #{mesh_encoder_forward.1} parent=99 // pred_region
          %664 = dma.done [#allocation6], 2048
        $region112: #{mesh_encoder_forward.1} parent=99 // pred_fallthru
          _
        // Predicated region
        $region113: #{mesh_encoder_forward.1} parent=99 // pred_check
          %p665 = pneg %p276
        $region114: #{mesh_encoder_forward.1} parent=99 // pred_check_branch
          %667 = sbr.rel (%p665) target = $region116
        $region115: #{mesh_encoder_forward.1} parent=99 // pred_region
          %668 = dma.done [#allocation9], 4096
        $region116: #{mesh_encoder_forward.1} parent=99 // pred_fallthru
          _
        // Predicated region
        $region117: #{mesh_encoder_forward.1} parent=99 // pred_check
          %p669 = pneg %p360
        $region118: #{mesh_encoder_forward.1} parent=99 // pred_check_branch
          %671 = sbr.rel (%p669) target = $region120
        $region119: #{mesh_encoder_forward.1} parent=99 // pred_region
          %672 = dma.done [#allocation9], 8192
        $region120: #{mesh_encoder_forward.1} parent=99 // pred_fallthru
          _
        // Predicated region
        $region121: #{mesh_encoder_forward.1} parent=99 // pred_check
          %p673 = pneg %p444
        $region122: #{mesh_encoder_forward.1} parent=99 // pred_check_branch
          %675 = sbr.rel (%p673) target = $region124
        $region123: #{mesh_encoder_forward.1} parent=99 // pred_region
          %676 = dma.done [#allocation12], 20480
        $region124: #{mesh_encoder_forward.1} parent=99 // pred_fallthru
          _
        %s677 = sand.u32 %s48, 1
        %s678 = scalar_lea.sflag [#allocation3], %s677
        %s679 = sand.u32 %s48, 1
        %s680 = smul.addr %s679, 16
        %s681 = scalar_lea.vmem [#allocation2], %s680
        %p682 = pneg %p61
        %p683 = pneg %p58
        %p684 = scmp.lt.s32.totalorder %s40, 1
        %s685 = scalar_select %p684, %s40, 1
        %s686 = smul.addr %s685, 8
        %s687 = smul.addr %s686, 8
        %s688 = scalar_lea.vmem %s1, %s687
        %p689 = pneg %p87
        %p690 = pneg %p84
        %p691 = pneg %p108
        %p692 = pneg %p105
        %p693 = pneg %p129
        %p694 = pneg %p126
        %p695 = pneg %p150
        %p696 = pneg %p147
        %p697 = pneg %p171
        %p698 = pneg %p168
        %p699 = pneg %p192
        %p700 = pneg %p189
        %p701 = pneg %p213
        %p702 = pneg %p210
        %p703 = pneg %p234
        %p704 = pneg %p231
        %p705 = pneg %p255
        %p706 = pneg %p252
        %p707 = pneg %p276
        %p708 = pneg %p273
        %p709 = pneg %p297
        %p710 = pneg %p294
        %p711 = pneg %p318
        %p712 = pneg %p315
        %p713 = pneg %p339
        %p714 = pneg %p336
        %p715 = pneg %p360
        %p716 = pneg %p357
        %p717 = pneg %p381
        %p718 = pneg %p378
        %p719 = pneg %p402
        %p720 = pneg %p399
        %p721 = pneg %p423
        %p722 = pneg %p420
        %p723 = pneg %p444
        %p724 = pneg %p441
        %p725 = pneg %p465
        %p726 = pneg %p462
        %p727 = pneg %p491
        %p728 = pneg %p488
        %s729 = sand.u32 %s478, 1
        %s730 = scalar_lea.sflag [#allocation4], %s729
        %s731 = sand.u32 %s478, 1
        %s732 = smul.addr %s731, 160
        %s733 = scalar_lea.vmem [#allocation13], %s732
        %p734 = scmp.lt.s32.totalorder %s40, 1
        %s735 = scalar_select %p734, %s40, 1
        %s736 = smul.addr %s735, 8
        %s737 = smul.addr %s736, 8
        %s738 = scalar_lea.vmem %s1, %s737
        %v740 = vld [vmem:[%s652] sm:$0xf]
        %v741 = vld [vmem:[%s652 + $0x4] sm:$0xf]
        %v742 = vld [vmem:[%s652 + $0x8] sm:$0xf]
        %v743 = vld [vmem:[%s652 + $0xc] sm:$0xf]
        %v744 = vld [vmem:[%s738] sm:$0xff]
        %v745 = vld [vmem:[%s738 + $0x8] sm:$0xff]
        %v746 = vld [vmem:[%s738 + $0x10] sm:$0xff]
        %v747 = vld [vmem:[%s738 + $0x18] sm:$0xff]
        %v748 = vld [vmem:[%s738 + $0x20] sm:$0xff]
        %v749 = vld [vmem:[%s738 + $0x28] sm:$0xff]
        %v750 = vld [vmem:[%s738 + $0x30] sm:$0xff]
        %v751 = vld [vmem:[%s738 + $0x38] sm:$0xff]
        %v752 = vpack.c.bf16 %v746, %v744
        %v753 = vpack.c.bf16 %v747, %v745
        %v754 = vpack.c.bf16 %v750, %v748
        %v755 = vpack.c.bf16 %v751, %v749
        %v756 = vld [vmem:[%s2] sm:$0xff]
        %v757 = vld [vmem:[%s2 + $0x8] sm:$0xff]
        %v758 = vld [vmem:[%s2 + $0x10] sm:$0xff]
        %v759 = vld [vmem:[%s2 + $0x18] sm:$0xff]
        %v760 = vld [vmem:[%s2 + $0x20] sm:$0xff]
        %v761 = vld [vmem:[%s2 + $0x28] sm:$0xff]
        %v762 = vld [vmem:[%s2 + $0x30] sm:$0xff]
        %v763 = vld [vmem:[%s2 + $0x38] sm:$0xff]
        %v764 = vld [vmem:[%s2 + $0x40] sm:$0xff]
        %v765 = vld [vmem:[%s2 + $0x48] sm:$0xff]
        %v766 = vld [vmem:[%s2 + $0x50] sm:$0xff]
        %v767 = vld [vmem:[%s2 + $0x58] sm:$0xff]
        %v768 = vld [vmem:[%s2 + $0x60] sm:$0xff]
        %v769 = vld [vmem:[%s2 + $0x68] sm:$0xff]
        %v770 = vld [vmem:[%s2 + $0x70] sm:$0xff]
        %v771 = vld [vmem:[%s2 + $0x78] sm:$0xff]
        %v772 = vld [vmem:[%s2 + $0x80] sm:$0xff]
        %v773 = vld [vmem:[%s2 + $0x88] sm:$0xff]
        %v774 = vld [vmem:[%s2 + $0x90] sm:$0xff]
        %v775 = vld [vmem:[%s2 + $0x98] sm:$0xff]
        %v776 = vld [vmem:[%s2 + $0xa0] sm:$0xff]
        %v777 = vld [vmem:[%s2 + $0xa8] sm:$0xff]
        %v778 = vld [vmem:[%s2 + $0xb0] sm:$0xff]
        %v779 = vld [vmem:[%s2 + $0xb8] sm:$0xff]
        %v780 = vld [vmem:[%s2 + $0xc0] sm:$0xff]
        %v781 = vld [vmem:[%s2 + $0xc8] sm:$0xff]
        %v782 = vld [vmem:[%s2 + $0xd0] sm:$0xff]
        %v783 = vld [vmem:[%s2 + $0xd8] sm:$0xff]
        %v784 = vld [vmem:[%s2 + $0xe0] sm:$0xff]
        %v785 = vld [vmem:[%s2 + $0xe8] sm:$0xff]
        %v786 = vld [vmem:[%s2 + $0xf0] sm:$0xff]
        %v787 = vld [vmem:[%s2 + $0xf8] sm:$0xff]
        %v820 = vunpack.c.l.b16 %v756
        %v821 = vunpack.c.h.b16 %v756
        %v822 = vunpack.c.l.b16 %v757
        %v823 = vunpack.c.h.b16 %v757
        %v824 = vunpack.c.l.b16 %v758
        %v825 = vunpack.c.h.b16 %v758
        %v826 = vunpack.c.l.b16 %v759
        %v827 = vunpack.c.h.b16 %v759
        %v828 = vunpack.c.l.b16 %v760
        %v829 = vunpack.c.h.b16 %v760
        %v830 = vunpack.c.l.b16 %v761
        %v831 = vunpack.c.h.b16 %v761
        %v832 = vunpack.c.l.b16 %v762
        %v833 = vunpack.c.h.b16 %v762
        %v834 = vunpack.c.l.b16 %v763
        %v835 = vunpack.c.h.b16 %v763
        %v836 = vunpack.c.l.b16 %v764
        %v837 = vunpack.c.h.b16 %v764
        %v838 = vunpack.c.l.b16 %v765
        %v839 = vunpack.c.h.b16 %v765
        %v840 = vunpack.c.l.b16 %v766
        %v841 = vunpack.c.h.b16 %v766
        %v842 = vunpack.c.l.b16 %v767
        %v843 = vunpack.c.h.b16 %v767
        %v844 = vunpack.c.l.b16 %v768
        %v845 = vunpack.c.h.b16 %v768
        %v846 = vunpack.c.l.b16 %v769
        %v847 = vunpack.c.h.b16 %v769
        %v848 = vunpack.c.l.b16 %v770
        %v849 = vunpack.c.h.b16 %v770
        %v850 = vunpack.c.l.b16 %v771
        %v851 = vunpack.c.h.b16 %v771
        %v852 = vunpack.c.l.b16 %v772
        %v853 = vunpack.c.h.b16 %v772
        %v854 = vunpack.c.l.b16 %v773
        %v855 = vunpack.c.h.b16 %v773
        %v856 = vunpack.c.l.b16 %v774
        %v857 = vunpack.c.h.b16 %v774
        %v858 = vunpack.c.l.b16 %v775
        %v859 = vunpack.c.h.b16 %v775
        %v860 = vunpack.c.l.b16 %v776
        %v861 = vunpack.c.h.b16 %v776
        %v862 = vunpack.c.l.b16 %v777
        %v863 = vunpack.c.h.b16 %v777
        %v864 = vunpack.c.l.b16 %v778
        %v865 = vunpack.c.h.b16 %v778
        %v866 = vunpack.c.l.b16 %v779
        %v867 = vunpack.c.h.b16 %v779
        %v868 = vunpack.c.l.b16 %v780
        %v869 = vunpack.c.h.b16 %v780
        %v870 = vunpack.c.l.b16 %v781
        %v871 = vunpack.c.h.b16 %v781
        %v872 = vunpack.c.l.b16 %v782
        %v873 = vunpack.c.h.b16 %v782
        %v874 = vunpack.c.l.b16 %v783
        %v875 = vunpack.c.h.b16 %v783
        %v876 = vunpack.c.l.b16 %v784
        %v877 = vunpack.c.h.b16 %v784
        %v878 = vunpack.c.l.b16 %v785
        %v879 = vunpack.c.h.b16 %v785
        %v880 = vunpack.c.l.b16 %v786
        %v881 = vunpack.c.h.b16 %v786
        %v882 = vunpack.c.l.b16 %v787
        %v883 = vunpack.c.h.b16 %v787
        %v884 = vpack.c.b16 %v822, %v820
        %v885 = vpack.c.b16 %v823, %v821
        %v886 = vpack.c.b16 %v826, %v824
        %v887 = vpack.c.b16 %v827, %v825
        %v888 = vpack.c.b16 %v830, %v828
        %v889 = vpack.c.b16 %v831, %v829
        %v890 = vpack.c.b16 %v834, %v832
        %v891 = vpack.c.b16 %v835, %v833
        %v892 = vpack.c.b16 %v838, %v836
        %v893 = vpack.c.b16 %v839, %v837
        %v894 = vpack.c.b16 %v842, %v840
        %v895 = vpack.c.b16 %v843, %v841
        %v896 = vpack.c.b16 %v846, %v844
        %v897 = vpack.c.b16 %v847, %v845
        %v898 = vpack.c.b16 %v850, %v848
        %v899 = vpack.c.b16 %v851, %v849
        %v900 = vpack.c.b16 %v854, %v852
        %v901 = vpack.c.b16 %v855, %v853
        %v902 = vpack.c.b16 %v858, %v856
        %v903 = vpack.c.b16 %v859, %v857
        %v904 = vpack.c.b16 %v862, %v860
        %v905 = vpack.c.b16 %v863, %v861
        %v906 = vpack.c.b16 %v866, %v864
        %v907 = vpack.c.b16 %v867, %v865
        %v908 = vpack.c.b16 %v870, %v868
        %v909 = vpack.c.b16 %v871, %v869
        %v910 = vpack.c.b16 %v874, %v872
        %v911 = vpack.c.b16 %v875, %v873
        %v912 = vpack.c.b16 %v878, %v876
        %v913 = vpack.c.b16 %v879, %v877
        %v914 = vpack.c.b16 %v882, %v880
        %v915 = vpack.c.b16 %v883, %v881
        %948 = vmatprep.subr.bf16.mxu0 %v885
        %949 = vmatpush1.bf16.msra.mxu0 %v884
        %950 = vmatprep.subr.bf16.mxu0 %v887
        %951 = vmatpush1.bf16.msra.mxu0 %v886
        %952 = vmatprep.subr.bf16.mxu0 %v889
        %953 = vmatpush1.bf16.msra.mxu0 %v888
        %954 = vmatprep.subr.bf16.mxu0 %v891
        %955 = vmatpush1.bf16.msra.mxu0 %v890
        %956 = vmatprep.subr.bf16.mxu0 %v893
        %957 = vmatpush1.bf16.msra.mxu0 %v892
        %958 = vmatprep.subr.bf16.mxu0 %v895
        %959 = vmatpush1.bf16.msra.mxu0 %v894
        %960 = vmatprep.subr.bf16.mxu0 %v897
        %961 = vmatpush1.bf16.msra.mxu0 %v896
        %962 = vmatprep.subr.bf16.mxu0 %v899
        %963 = vmatpush1.bf16.msra.mxu0 %v898
        %964 = vmatprep.subr.bf16.mxu0 %v901
        %965 = vmatpush1.bf16.msra.mxu0 %v900
        %966 = vmatprep.subr.bf16.mxu0 %v903
        %967 = vmatpush1.bf16.msra.mxu0 %v902
        %968 = vmatprep.subr.bf16.mxu0 %v905
        %969 = vmatpush1.bf16.msra.mxu0 %v904
        %970 = vmatprep.subr.bf16.mxu0 %v907
        %971 = vmatpush1.bf16.msra.mxu0 %v906
        %972 = vmatprep.subr.bf16.mxu0 %v909
        %973 = vmatpush1.bf16.msra.mxu0 %v908
        %974 = vmatprep.subr.bf16.mxu0 %v911
        %975 = vmatpush1.bf16.msra.mxu0 %v910
        %976 = vmatprep.subr.bf16.mxu0 %v913
        %977 = vmatpush1.bf16.msra.mxu0 %v912
        %978 = vmatprep.subr.bf16.mxu0 %v915
        %979 = vmatpush1.bf16.msra.mxu0 %v914
        %980 = vmatprep.mubr.bf16.mxu0 %v753
        %981 = vmatmul.mubr.bf16.gmra.mrb[0].mxu0 %v752
        %v982 = vpop.f32.mrb[0].mxu0
        %v983 = vadd.f32 0.0, %v982
        %v984 = vpop.f32.mrb[0].mxu0
        %v985 = vadd.f32 0.0, %v984
        %v986 = vpop.f32.mrb[0].mxu0
        %v987 = vadd.f32 0.0, %v986
        %v988 = vpop.f32.mrb[0].mxu0
        %v989 = vadd.f32 0.0, %v988
        %990 = vmatprep.mubr.bf16.mxu0 %v755
        %991 = vmatmul.mubr.bf16.gmra.mrb[0].mxu0 %v754
        %v992 = vpop.f32.mrb[0].mxu0
        %v993 = vadd.f32 0.0, %v992
        %v994 = vpop.f32.mrb[0].mxu0
        %v995 = vadd.f32 0.0, %v994
        %v996 = vpop.f32.mrb[0].mxu0
        %v997 = vadd.f32 0.0, %v996
        %v998 = vpop.f32.mrb[0].mxu0
        %v999 = vadd.f32 0.0, %v998
        %1000 = vdwg.mxu0
        %v1001 = vpack.c.bf16 %v987, %v983
        %v1002 = vpack.c.bf16 %v997, %v993
        %v1007 = vunpack.c.l.b16 %v740
        %v1008 = vunpack.c.l.b16 %v741
        %v1009 = vunpack.c.l.b16 %v742
        %v1010 = vunpack.c.l.b16 %v743
        %v1011 = vpack.c.b16 %v1008, %v1007
        %v1012 = vpack.c.b16 %v1010, %v1009
        %vm1013 = vcmask 261120
        %v1015 = vsel %vm1013, %v1011, 0
        %v1018 = vsel %vm1013, %v1012, 0
        %1020 = vmatprep.subr.bf16.mxu0 0
        %1021 = vmatpush1.bf16.msra.mxu0 %v1001
        %1022 = vmatprep.subr.bf16.mxu0 0
        %1023 = vmatpush1.bf16.msra.mxu0 %v1002
        %1024 = vmatprep.subr.bf16.mxu0 0
        %1025 = vmatpush1.bf16.msra.mxu0 0
        %1026 = vmatprep.subr.bf16.mxu0 0
        %1027 = vmatpush1.bf16.msra.mxu0 0
        %1028 = vmatprep.subr.bf16.mxu0 0
        %1029 = vmatpush1.bf16.msra.mxu0 0
        %1030 = vmatprep.subr.bf16.mxu0 0
        %1031 = vmatpush1.bf16.msra.mxu0 0
        %1032 = vmatprep.subr.bf16.mxu0 0
        %1033 = vmatpush1.bf16.msra.mxu0 0
        %1034 = vmatprep.subr.bf16.mxu0 0
        %1035 = vmatpush1.bf16.msra.mxu0 0
        %1036 = vmatprep.subr.bf16.mxu0 0
        %1037 = vmatpush1.bf16.msra.mxu0 0
        %1038 = vmatprep.subr.bf16.mxu0 0
        %1039 = vmatpush1.bf16.msra.mxu0 0
        %1040 = vmatprep.subr.bf16.mxu0 0
        %1041 = vmatpush1.bf16.msra.mxu0 0
        %1042 = vmatprep.subr.bf16.mxu0 0
        %1043 = vmatpush1.bf16.msra.mxu0 0
        %1044 = vmatprep.subr.bf16.mxu0 0
        %1045 = vmatpush1.bf16.msra.mxu0 0
        %1046 = vmatprep.subr.bf16.mxu0 0
        %1047 = vmatpush1.bf16.msra.mxu0 0
        %1048 = vmatprep.subr.bf16.mxu0 0
        %1049 = vmatpush1.bf16.msra.mxu0 0
        %1050 = vmatprep.subr.bf16.mxu0 0
        %1051 = vmatpush1.bf16.msra.mxu0 0
        %1052 = vmatprep.mubr.bf16.mxu0 0
        %1053 = vmatmul.mubr.bf16.gmra.mrb[0].mxu0 %v1015
        %v1054 = vpop.f32.mrb[0].mxu0
        %v1055 = vadd.f32 %v985, %v1054
        %v1056 = vpop.f32.mrb[0].mxu0
        %v1057 = vpop.f32.mrb[0].mxu0
        %v1058 = vadd.f32 %v989, %v1057
        %v1059 = vpop.f32.mrb[0].mxu0
        %1060 = vmatprep.mubr.bf16.mxu0 0
        %1061 = vmatmul.mubr.bf16.gmra.mrb[0].mxu0 %v1018
        %v1062 = vpop.f32.mrb[0].mxu0
        %v1063 = vadd.f32 %v995, %v1062
        %v1064 = vpop.f32.mrb[0].mxu0
        %v1065 = vpop.f32.mrb[0].mxu0
        %v1066 = vadd.f32 %v999, %v1065
        %v1067 = vpop.f32.mrb[0].mxu0
        %1068 = vdwg.mxu0
        %v1069 = vld [vmem:[%s3] sm:$0x1]
        %v1071 = vlaneseq
        %v1072 = vshrl.u32 %v1071, 7
        %v1073 = vsub.s32 0, %v1072
        %v1074 = vrot.slane %v1069, %v1073
        %v1076 = vadd.f32 %v1055, %v1074
        %v1077 = vadd.f32 %v1058, %v1074
        %v1078 = vadd.f32 %v1063, %v1074
        %v1079 = vadd.f32 %v1066, %v1074
        %v1080 = vadd.f32 %v1076, %v1077
        %v1081 = vadd.f32 %v1080, %v1078
        %v1082 = vadd.f32 %v1081, %v1079
        %v1083 = vrot.slane %v1082, 4
        %v1084 = vadd.f32 %v1082, %v1083
        %v1085 = vrot.slane %v1084, 2
        %v1086 = vadd.f32 %v1084, %v1085
        %v1087 = vrot.slane %v1086, 1
        %v1088 = vadd.f32 %v1086, %v1087
        %v1089 = vrcp.pop 32.0
        %v1090 = vmul.f32 %v1088, %v1089
        %v1091 = vsub.f32 %v1076, %v1090
        %v1092 = vsub.f32 %v1077, %v1090
        %v1093 = vsub.f32 %v1078, %v1090
        %v1094 = vsub.f32 %v1079, %v1090
        %v1095 = vmul.f32 %v1091, %v1091
        %v1096 = vmul.f32 %v1092, %v1092
        %v1097 = vmul.f32 %v1093, %v1093
        %v1098 = vmul.f32 %v1094, %v1094
        %v1099 = vadd.f32 %v1095, %v1096
        %v1100 = vadd.f32 %v1099, %v1097
        %v1101 = vadd.f32 %v1100, %v1098
        %v1102 = vrot.slane %v1101, 4
        %v1103 = vadd.f32 %v1101, %v1102
        %v1104 = vrot.slane %v1103, 2
        %v1105 = vadd.f32 %v1103, %v1104
        %v1106 = vrot.slane %v1105, 1
        %v1107 = vadd.f32 %v1105, %v1106
        %v1108 = vmul.f32 %v1107, %v1089
        %v1109 = vadd.f32 %v1108, 1e-05
        %v1110 = vrsqrt.pop %v1109
        %v1111 = vmul.f32 %v1091, %v1110
        %v1112 = vmul.f32 %v1092, %v1110
        %v1113 = vmul.f32 %v1093, %v1110
        %v1114 = vmul.f32 %v1094, %v1110
        %v1115 = vld [vmem:[#allocation5] sm:$0x1]
        %v1117 = vlaneseq
        %v1118 = vshrl.u32 %v1117, 7
        %v1119 = vsub.s32 0, %v1118
        %v1120 = vrot.slane %v1115, %v1119
        %v1122 = vmul.f32 %v1111, %v1120
        %v1123 = vmul.f32 %v1112, %v1120
        %v1124 = vmul.f32 %v1113, %v1120
        %v1125 = vmul.f32 %v1114, %v1120
        %v1126 = vld [vmem:[%s5] sm:$0x1]
        %v1128 = vlaneseq
        %v1129 = vshrl.u32 %v1128, 7
        %v1130 = vsub.s32 0, %v1129
        %v1131 = vrot.slane %v1126, %v1130
        %v1133 = vadd.f32 %v1122, %v1131
        %v1134 = vadd.f32 %v1123, %v1131
        %v1135 = vadd.f32 %v1124, %v1131
        %v1136 = vadd.f32 %v1125, %v1131
        %v1137 = vmax.f32 %v1133, 0.0
        %v1138 = vmax.f32 %v1134, 0.0
        %v1139 = vmax.f32 %v1135, 0.0
        %v1140 = vmax.f32 %v1136, 0.0
        %v1141 = vpack.c.bf16 %v1138, %v1137
        %v1142 = vpack.c.bf16 %v1140, %v1139
        %v1143 = vld [vmem:[#allocation7] sm:$0xff]
        %v1144 = vld [vmem:[#allocation7 + $0x8] sm:$0xff]
        %v1145 = vld [vmem:[#allocation7 + $0x10] sm:$0xff]
        %v1146 = vld [vmem:[#allocation7 + $0x18] sm:$0xff]
        %v1147 = vld [vmem:[#allocation7 + $0x20] sm:$0xff]
        %v1148 = vld [vmem:[#allocation7 + $0x28] sm:$0xff]
        %v1149 = vld [vmem:[#allocation7 + $0x30] sm:$0xff]
        %v1150 = vld [vmem:[#allocation7 + $0x38] sm:$0xff]
        %v1151 = vld [vmem:[#allocation7 + $0x40] sm:$0xff]
        %v1152 = vld [vmem:[#allocation7 + $0x48] sm:$0xff]
        %v1153 = vld [vmem:[#allocation7 + $0x50] sm:$0xff]
        %v1154 = vld [vmem:[#allocation7 + $0x58] sm:$0xff]
        %v1155 = vld [vmem:[#allocation7 + $0x60] sm:$0xff]
        %v1156 = vld [vmem:[#allocation7 + $0x68] sm:$0xff]
        %v1157 = vld [vmem:[#allocation7 + $0x70] sm:$0xff]
        %v1158 = vld [vmem:[#allocation7 + $0x78] sm:$0xff]
        %v1175 = vunpack.c.l.b16 %v1143
        %v1176 = vunpack.c.h.b16 %v1143
        %v1177 = vunpack.c.l.b16 %v1144
        %v1178 = vunpack.c.h.b16 %v1144
        %v1179 = vunpack.c.l.b16 %v1145
        %v1180 = vunpack.c.h.b16 %v1145
        %v1181 = vunpack.c.l.b16 %v1146
        %v1182 = vunpack.c.h.b16 %v1146
        %v1183 = vunpack.c.l.b16 %v1147
        %v1184 = vunpack.c.h.b16 %v1147
        %v1185 = vunpack.c.l.b16 %v1148
        %v1186 = vunpack.c.h.b16 %v1148
        %v1187 = vunpack.c.l.b16 %v1149
        %v1188 = vunpack.c.h.b16 %v1149
        %v1189 = vunpack.c.l.b16 %v1150
        %v1190 = vunpack.c.h.b16 %v1150
        %v1191 = vunpack.c.l.b16 %v1151
        %v1192 = vunpack.c.h.b16 %v1151
        %v1193 = vunpack.c.l.b16 %v1152
        %v1194 = vunpack.c.h.b16 %v1152
        %v1195 = vunpack.c.l.b16 %v1153
        %v1196 = vunpack.c.h.b16 %v1153
        %v1197 = vunpack.c.l.b16 %v1154
        %v1198 = vunpack.c.h.b16 %v1154
        %v1199 = vunpack.c.l.b16 %v1155
        %v1200 = vunpack.c.h.b16 %v1155
        %v1201 = vunpack.c.l.b16 %v1156
        %v1202 = vunpack.c.h.b16 %v1156
        %v1203 = vunpack.c.l.b16 %v1157
        %v1204 = vunpack.c.h.b16 %v1157
        %v1205 = vunpack.c.l.b16 %v1158
        %v1206 = vunpack.c.h.b16 %v1158
        %v1207 = vpack.c.b16 %v1177, %v1175
        %v1208 = vpack.c.b16 %v1178, %v1176
        %v1209 = vpack.c.b16 %v1181, %v1179
        %v1210 = vpack.c.b16 %v1182, %v1180
        %v1211 = vpack.c.b16 %v1185, %v1183
        %v1212 = vpack.c.b16 %v1186, %v1184
        %v1213 = vpack.c.b16 %v1189, %v1187
        %v1214 = vpack.c.b16 %v1190, %v1188
        %v1215 = vpack.c.b16 %v1193, %v1191
        %v1216 = vpack.c.b16 %v1194, %v1192
        %v1217 = vpack.c.b16 %v1197, %v1195
        %v1218 = vpack.c.b16 %v1198, %v1196
        %v1219 = vpack.c.b16 %v1201, %v1199
        %v1220 = vpack.c.b16 %v1202, %v1200
        %v1221 = vpack.c.b16 %v1205, %v1203
        %v1222 = vpack.c.b16 %v1206, %v1204
        %1239 = vmatprep.subr.bf16.mxu0 %v1208
        %1240 = vmatpush1.bf16.msra.mxu0 %v1207
        %1241 = vmatprep.subr.bf16.mxu0 %v1210
        %1242 = vmatpush1.bf16.msra.mxu0 %v1209
        %1243 = vmatprep.subr.bf16.mxu0 %v1212
        %1244 = vmatpush1.bf16.msra.mxu0 %v1211
        %1245 = vmatprep.subr.bf16.mxu0 %v1214
        %1246 = vmatpush1.bf16.msra.mxu0 %v1213
        %1247 = vmatprep.subr.bf16.mxu0 %v1216
        %1248 = vmatpush1.bf16.msra.mxu0 %v1215
        %1249 = vmatprep.subr.bf16.mxu0 %v1218
        %1250 = vmatpush1.bf16.msra.mxu0 %v1217
        %1251 = vmatprep.subr.bf16.mxu0 %v1220
        %1252 = vmatpush1.bf16.msra.mxu0 %v1219
        %1253 = vmatprep.subr.bf16.mxu0 %v1222
        %1254 = vmatpush1.bf16.msra.mxu0 %v1221
        %1255 = vmatprep.subr.bf16.mxu0 0
        %1256 = vmatpush1.bf16.msra.mxu0 0
        %1257 = vmatprep.subr.bf16.mxu0 0
        %1258 = vmatpush1.bf16.msra.mxu0 0
        %1259 = vmatprep.subr.bf16.mxu0 0
        %1260 = vmatpush1.bf16.msra.mxu0 0
        %1261 = vmatprep.subr.bf16.mxu0 0
        %1262 = vmatpush1.bf16.msra.mxu0 0
        %1263 = vmatprep.subr.bf16.mxu0 0
        %1264 = vmatpush1.bf16.msra.mxu0 0
        %1265 = vmatprep.subr.bf16.mxu0 0
        %1266 = vmatpush1.bf16.msra.mxu0 0
        %1267 = vmatprep.subr.bf16.mxu0 0
        %1268 = vmatpush1.bf16.msra.mxu0 0
        %1269 = vmatprep.subr.bf16.mxu0 0
        %1270 = vmatpush1.bf16.msra.mxu0 0
        %1271 = vmatprep.mubr.bf16.mxu0 0
        %1272 = vmatmul.mubr.bf16.gmra.mrb[0].mxu0 %v1141
        %v1273 = vpop.f32.mrb[0].mxu0
        %v1274 = vadd.f32 0.0, %v1273
        %v1275 = vpop.f32.mrb[0].mxu0
        %v1276 = vadd.f32 0.0, %v1275
        %v1277 = vpop.f32.mrb[0].mxu0
        %v1278 = vadd.f32 0.0, %v1277
        %v1279 = vpop.f32.mrb[0].mxu0
        %v1280 = vadd.f32 0.0, %v1279
        %1281 = vmatprep.mubr.bf16.mxu0 0
        %1282 = vmatmul.mubr.bf16.gmra.mrb[0].mxu0 %v1142
        %v1283 = vpop.f32.mrb[0].mxu0
        %v1284 = vadd.f32 0.0, %v1283
        %v1285 = vpop.f32.mrb[0].mxu0
        %v1286 = vadd.f32 0.0, %v1285
        %v1287 = vpop.f32.mrb[0].mxu0
        %v1288 = vadd.f32 0.0, %v1287
        %v1289 = vpop.f32.mrb[0].mxu0
        %v1290 = vadd.f32 0.0, %v1289
        %1291 = vdwg.mxu0
        %v1292 = vpack.c.bf16 %v1278, %v1274
        %v1293 = vpack.c.bf16 %v1288, %v1284
        %1294 = vmatprep.subr.bf16.mxu0 0
        %1295 = vmatpush1.bf16.msra.mxu0 %v1292
        %1296 = vmatprep.subr.bf16.mxu0 0
        %1297 = vmatpush1.bf16.msra.mxu0 %v1293
        %1298 = vmatprep.subr.bf16.mxu0 0
        %1299 = vmatpush1.bf16.msra.mxu0 0
        %1300 = vmatprep.subr.bf16.mxu0 0
        %1301 = vmatpush1.bf16.msra.mxu0 0
        %1302 = vmatprep.subr.bf16.mxu0 0
        %1303 = vmatpush1.bf16.msra.mxu0 0
        %1304 = vmatprep.subr.bf16.mxu0 0
        %1305 = vmatpush1.bf16.msra.mxu0 0
        %1306 = vmatprep.subr.bf16.mxu0 0
        %1307 = vmatpush1.bf16.msra.mxu0 0
        %1308 = vmatprep.subr.bf16.mxu0 0
        %1309 = vmatpush1.bf16.msra.mxu0 0
        %1310 = vmatprep.subr.bf16.mxu0 0
        %1311 = vmatpush1.bf16.msra.mxu0 0
        %1312 = vmatprep.subr.bf16.mxu0 0
        %1313 = vmatpush1.bf16.msra.mxu0 0
        %1314 = vmatprep.subr.bf16.mxu0 0
        %1315 = vmatpush1.bf16.msra.mxu0 0
        %1316 = vmatprep.subr.bf16.mxu0 0
        %1317 = vmatpush1.bf16.msra.mxu0 0
        %1318 = vmatprep.subr.bf16.mxu0 0
        %1319 = vmatpush1.bf16.msra.mxu0 0
        %1320 = vmatprep.subr.bf16.mxu0 0
        %1321 = vmatpush1.bf16.msra.mxu0 0
        %1322 = vmatprep.subr.bf16.mxu0 0
        %1323 = vmatpush1.bf16.msra.mxu0 0
        %1324 = vmatprep.subr.bf16.mxu0 0
        %1325 = vmatpush1.bf16.msra.mxu0 0
        %1326 = vmatprep.mubr.bf16.mxu0 0
        %1327 = vmatmul.mubr.bf16.gmra.mrb[0].mxu0 %v1015
        %v1328 = vpop.f32.mrb[0].mxu0
        %v1329 = vadd.f32 %v1276, %v1328
        %v1330 = vpop.f32.mrb[0].mxu0
        %v1331 = vpop.f32.mrb[0].mxu0
        %v1332 = vadd.f32 %v1280, %v1331
        %v1333 = vpop.f32.mrb[0].mxu0
        %1334 = vmatprep.mubr.bf16.mxu0 0
        %1335 = vmatmul.mubr.bf16.gmra.mrb[0].mxu0 %v1018
        %v1336 = vpop.f32.mrb[0].mxu0
        %v1337 = vadd.f32 %v1286, %v1336
        %v1338 = vpop.f32.mrb[0].mxu0
        %v1339 = vpop.f32.mrb[0].mxu0
        %v1340 = vadd.f32 %v1290, %v1339
        %v1341 = vpop.f32.mrb[0].mxu0
        %1342 = vdwg.mxu0
        %v1343 = vld [vmem:[%s7] sm:$0x1]
        %v1345 = vlaneseq
        %v1346 = vshrl.u32 %v1345, 7
        %v1347 = vsub.s32 0, %v1346
        %v1348 = vrot.slane %v1343, %v1347
        %v1350 = vadd.f32 %v1329, %v1348
        %v1351 = vadd.f32 %v1332, %v1348
        %v1352 = vadd.f32 %v1337, %v1348
        %v1353 = vadd.f32 %v1340, %v1348
        %v1354 = vadd.f32 %v1350, %v1351
        %v1355 = vadd.f32 %v1354, %v1352
        %v1356 = vadd.f32 %v1355, %v1353
        %v1357 = vrot.slane %v1356, 4
        %v1358 = vadd.f32 %v1356, %v1357
        %v1359 = vrot.slane %v1358, 2
        %v1360 = vadd.f32 %v1358, %v1359
        %v1361 = vrot.slane %v1360, 1
        %v1362 = vadd.f32 %v1360, %v1361
        %v1363 = vmul.f32 %v1362, %v1089
        %v1364 = vsub.f32 %v1350, %v1363
        %v1365 = vsub.f32 %v1351, %v1363
        %v1366 = vsub.f32 %v1352, %v1363
        %v1367 = vsub.f32 %v1353, %v1363
        %v1368 = vmul.f32 %v1364, %v1364
        %v1369 = vmul.f32 %v1365, %v1365
        %v1370 = vmul.f32 %v1366, %v1366
        %v1371 = vmul.f32 %v1367, %v1367
        %v1372 = vadd.f32 %v1368, %v1369
        %v1373 = vadd.f32 %v1372, %v1370
        %v1374 = vadd.f32 %v1373, %v1371
        %v1375 = vrot.slane %v1374, 4
        %v1376 = vadd.f32 %v1374, %v1375
        %v1377 = vrot.slane %v1376, 2
        %v1378 = vadd.f32 %v1376, %v1377
        %v1379 = vrot.slane %v1378, 1
        %v1380 = vadd.f32 %v1378, %v1379
        %v1381 = vmul.f32 %v1380, %v1089
        %v1382 = vadd.f32 %v1381, 1e-05
        %v1383 = vrsqrt.pop %v1382
        %v1384 = vmul.f32 %v1364, %v1383
        %v1385 = vmul.f32 %v1365, %v1383
        %v1386 = vmul.f32 %v1366, %v1383
        %v1387 = vmul.f32 %v1367, %v1383
        %v1388 = vld [vmem:[%s8] sm:$0x1]
        %v1390 = vlaneseq
        %v1391 = vshrl.u32 %v1390, 7
        %v1392 = vsub.s32 0, %v1391
        %v1393 = vrot.slane %v1388, %v1392
        %v1395 = vmul.f32 %v1384, %v1393
        %v1396 = vmul.f32 %v1385, %v1393
        %v1397 = vmul.f32 %v1386, %v1393
        %v1398 = vmul.f32 %v1387, %v1393
        %v1399 = vld [vmem:[%s9] sm:$0x1]
        %v1401 = vlaneseq
        %v1402 = vshrl.u32 %v1401, 7
        %v1403 = vsub.s32 0, %v1402
        %v1404 = vrot.slane %v1399, %v1403
        %v1406 = vadd.f32 %v1395, %v1404
        %v1407 = vadd.f32 %v1396, %v1404
        %v1408 = vadd.f32 %v1397, %v1404
        %v1409 = vadd.f32 %v1398, %v1404
        %v1410 = vmax.f32 %v1406, 0.0
        %v1411 = vmax.f32 %v1407, 0.0
        %v1412 = vmax.f32 %v1408, 0.0
        %v1413 = vmax.f32 %v1409, 0.0
        %v1414 = vpack.c.bf16 %v1411, %v1410
        %v1415 = vpack.c.bf16 %v1413, %v1412
        %1416 = vmatprep.subr.bf16.mxu0 0
        %1417 = vmatpush1.bf16.msra.mxu0 %v1414
        %1418 = vmatprep.subr.bf16.mxu0 0
        %1419 = vmatpush1.bf16.msra.mxu0 %v1415
        %1420 = vmatprep.subr.bf16.mxu0 0
        %1421 = vmatpush1.bf16.msra.mxu0 0
        %1422 = vmatprep.subr.bf16.mxu0 0
        %1423 = vmatpush1.bf16.msra.mxu0 0
        %1424 = vmatprep.subr.bf16.mxu0 0
        %1425 = vmatpush1.bf16.msra.mxu0 0
        %1426 = vmatprep.subr.bf16.mxu0 0
        %1427 = vmatpush1.bf16.msra.mxu0 0
        %1428 = vmatprep.subr.bf16.mxu0 0
        %1429 = vmatpush1.bf16.msra.mxu0 0
        %1430 = vmatprep.subr.bf16.mxu0 0
        %1431 = vmatpush1.bf16.msra.mxu0 0
        %1432 = vmatprep.subr.bf16.mxu0 0
        %1433 = vmatpush1.bf16.msra.mxu0 0
        %1434 = vmatprep.subr.bf16.mxu0 0
        %1435 = vmatpush1.bf16.msra.mxu0 0
        %1436 = vmatprep.subr.bf16.mxu0 0
        %1437 = vmatpush1.bf16.msra.mxu0 0
        %1438 = vmatprep.subr.bf16.mxu0 0
        %1439 = vmatpush1.bf16.msra.mxu0 0
        %1440 = vmatprep.subr.bf16.mxu0 0
        %1441 = vmatpush1.bf16.msra.mxu0 0
        %1442 = vmatprep.subr.bf16.mxu0 0
        %1443 = vmatpush1.bf16.msra.mxu0 0
        %1444 = vmatprep.subr.bf16.mxu0 0
        %1445 = vmatpush1.bf16.msra.mxu0 0
        %1446 = vmatprep.subr.bf16.mxu0 0
        %1447 = vmatpush1.bf16.msra.mxu0 0
        %1448 = vmatprep.mubr.bf16.mxu0 0
        %1449 = vmatmul.mubr.bf16.gmra.mrb[0].mxu0 %v1015
        %v1450 = vpop.f32.mrb[0].mxu0
        %v1451 = vadd.f32 0.0, %v1450
        %v1452 = vpop.f32.mrb[0].mxu0
        %v1453 = vpop.f32.mrb[0].mxu0
        %v1454 = vadd.f32 0.0, %v1453
        %v1455 = vpop.f32.mrb[0].mxu0
        %1456 = vmatprep.mubr.bf16.mxu0 0
        %1457 = vmatmul.mubr.bf16.gmra.mrb[0].mxu0 %v1018
        %v1458 = vpop.f32.mrb[0].mxu0
        %v1459 = vadd.f32 0.0, %v1458
        %v1460 = vpop.f32.mrb[0].mxu0
        %v1461 = vpop.f32.mrb[0].mxu0
        %v1462 = vadd.f32 0.0, %v1461
        %v1463 = vpop.f32.mrb[0].mxu0
        %1464 = vdwg.mxu0
        %v1465 = vpack.c.bf16 %v1454, %v1451
        %v1466 = vpack.c.bf16 %v1462, %v1459
        %v1467 = vld [vmem:[#allocation8] sm:$0xff]
        %v1468 = vld [vmem:[#allocation8 + $0x8] sm:$0xff]
        %v1469 = vld [vmem:[#allocation8 + $0x10] sm:$0xff]
        %v1470 = vld [vmem:[#allocation8 + $0x18] sm:$0xff]
        %v1471 = vld [vmem:[#allocation8 + $0x20] sm:$0xff]
        %v1472 = vld [vmem:[#allocation8 + $0x28] sm:$0xff]
        %v1473 = vld [vmem:[#allocation8 + $0x30] sm:$0xff]
        %v1474 = vld [vmem:[#allocation8 + $0x38] sm:$0xff]
        %v1475 = vld [vmem:[#allocation8 + $0x40] sm:$0xff]
        %v1476 = vld [vmem:[#allocation8 + $0x48] sm:$0xff]
        %v1477 = vld [vmem:[#allocation8 + $0x50] sm:$0xff]
        %v1478 = vld [vmem:[#allocation8 + $0x58] sm:$0xff]
        %v1479 = vld [vmem:[#allocation8 + $0x60] sm:$0xff]
        %v1480 = vld [vmem:[#allocation8 + $0x68] sm:$0xff]
        %v1481 = vld [vmem:[#allocation8 + $0x70] sm:$0xff]
        %v1482 = vld [vmem:[#allocation8 + $0x78] sm:$0xff]
        %v1483 = vld [vmem:[#allocation8 + $0x80] sm:$0xff]
        %v1484 = vld [vmem:[#allocation8 + $0x88] sm:$0xff]
        %v1485 = vld [vmem:[#allocation8 + $0x90] sm:$0xff]
        %v1486 = vld [vmem:[#allocation8 + $0x98] sm:$0xff]
        %v1487 = vld [vmem:[#allocation8 + $0xa0] sm:$0xff]
        %v1488 = vld [vmem:[#allocation8 + $0xa8] sm:$0xff]
        %v1489 = vld [vmem:[#allocation8 + $0xb0] sm:$0xff]
        %v1490 = vld [vmem:[#allocation8 + $0xb8] sm:$0xff]
        %v1491 = vld [vmem:[#allocation8 + $0xc0] sm:$0xff]
        %v1492 = vld [vmem:[#allocation8 + $0xc8] sm:$0xff]
        %v1493 = vld [vmem:[#allocation8 + $0xd0] sm:$0xff]
        %v1494 = vld [vmem:[#allocation8 + $0xd8] sm:$0xff]
        %v1495 = vld [vmem:[#allocation8 + $0xe0] sm:$0xff]
        %v1496 = vld [vmem:[#allocation8 + $0xe8] sm:$0xff]
        %v1497 = vld [vmem:[#allocation8 + $0xf0] sm:$0xff]
        %v1498 = vld [vmem:[#allocation8 + $0xf8] sm:$0xff]
        %v1515 = vunpack.c.l.b16 %v1483
        %v1516 = vunpack.c.h.b16 %v1483
        %v1517 = vunpack.c.l.b16 %v1484
        %v1518 = vunpack.c.h.b16 %v1484
        %v1519 = vunpack.c.l.b16 %v1485
        %v1520 = vunpack.c.h.b16 %v1485
        %v1521 = vunpack.c.l.b16 %v1486
        %v1522 = vunpack.c.h.b16 %v1486
        %v1523 = vunpack.c.l.b16 %v1487
        %v1524 = vunpack.c.h.b16 %v1487
        %v1525 = vunpack.c.l.b16 %v1488
        %v1526 = vunpack.c.h.b16 %v1488
        %v1527 = vunpack.c.l.b16 %v1489
        %v1528 = vunpack.c.h.b16 %v1489
        %v1529 = vunpack.c.l.b16 %v1490
        %v1530 = vunpack.c.h.b16 %v1490
        %v1531 = vunpack.c.l.b16 %v1491
        %v1532 = vunpack.c.h.b16 %v1491
        %v1533 = vunpack.c.l.b16 %v1492
        %v1534 = vunpack.c.h.b16 %v1492
        %v1535 = vunpack.c.l.b16 %v1493
        %v1536 = vunpack.c.h.b16 %v1493
        %v1537 = vunpack.c.l.b16 %v1494
        %v1538 = vunpack.c.h.b16 %v1494
        %v1539 = vunpack.c.l.b16 %v1495
        %v1540 = vunpack.c.h.b16 %v1495
        %v1541 = vunpack.c.l.b16 %v1496
        %v1542 = vunpack.c.h.b16 %v1496
        %v1543 = vunpack.c.l.b16 %v1497
        %v1544 = vunpack.c.h.b16 %v1497
        %v1545 = vunpack.c.l.b16 %v1498
        %v1546 = vunpack.c.h.b16 %v1498
        %v1547 = vpack.c.b16 %v1517, %v1515
        %v1548 = vpack.c.b16 %v1518, %v1516
        %v1549 = vpack.c.b16 %v1521, %v1519
        %v1550 = vpack.c.b16 %v1522, %v1520
        %v1551 = vpack.c.b16 %v1525, %v1523
        %v1552 = vpack.c.b16 %v1526, %v1524
        %v1553 = vpack.c.b16 %v1529, %v1527
        %v1554 = vpack.c.b16 %v1530, %v1528
        %v1555 = vpack.c.b16 %v1533, %v1531
        %v1556 = vpack.c.b16 %v1534, %v1532
        %v1557 = vpack.c.b16 %v1537, %v1535
        %v1558 = vpack.c.b16 %v1538, %v1536
        %v1559 = vpack.c.b16 %v1541, %v1539
        %v1560 = vpack.c.b16 %v1542, %v1540
        %v1561 = vpack.c.b16 %v1545, %v1543
        %v1562 = vpack.c.b16 %v1546, %v1544
        %1579 = vmatprep.subr.bf16.mxu0 %v1548
        %1580 = vmatpush1.bf16.msra.mxu0 %v1547
        %1581 = vmatprep.subr.bf16.mxu0 %v1550
        %1582 = vmatpush1.bf16.msra.mxu0 %v1549
        %1583 = vmatprep.subr.bf16.mxu0 %v1552
        %1584 = vmatpush1.bf16.msra.mxu0 %v1551
        %1585 = vmatprep.subr.bf16.mxu0 %v1554
        %1586 = vmatpush1.bf16.msra.mxu0 %v1553
        %1587 = vmatprep.subr.bf16.mxu0 %v1556
        %1588 = vmatpush1.bf16.msra.mxu0 %v1555
        %1589 = vmatprep.subr.bf16.mxu0 %v1558
        %1590 = vmatpush1.bf16.msra.mxu0 %v1557
        %1591 = vmatprep.subr.bf16.mxu0 %v1560
        %1592 = vmatpush1.bf16.msra.mxu0 %v1559
        %1593 = vmatprep.subr.bf16.mxu0 %v1562
        %1594 = vmatpush1.bf16.msra.mxu0 %v1561
        %1595 = vmatprep.subr.bf16.mxu0 0
        %1596 = vmatpush1.bf16.msra.mxu0 0
        %1597 = vmatprep.subr.bf16.mxu0 0
        %1598 = vmatpush1.bf16.msra.mxu0 0
        %1599 = vmatprep.subr.bf16.mxu0 0
        %1600 = vmatpush1.bf16.msra.mxu0 0
        %1601 = vmatprep.subr.bf16.mxu0 0
        %1602 = vmatpush1.bf16.msra.mxu0 0
        %1603 = vmatprep.subr.bf16.mxu0 0
        %1604 = vmatpush1.bf16.msra.mxu0 0
        %1605 = vmatprep.subr.bf16.mxu0 0
        %1606 = vmatpush1.bf16.msra.mxu0 0
        %1607 = vmatprep.subr.bf16.mxu0 0
        %1608 = vmatpush1.bf16.msra.mxu0 0
        %1609 = vmatprep.subr.bf16.mxu0 0
        %1610 = vmatpush1.bf16.msra.mxu0 0
        %1611 = vmatprep.mubr.bf16.mxu0 0
        %1612 = vmatmul.mubr.bf16.gmra.mrb[0].mxu0 %v1414
        %v1613 = vpop.f32.mrb[0].mxu0
        %v1614 = vadd.f32 0.0, %v1613
        %v1615 = vpop.f32.mrb[0].mxu0
        %v1616 = vadd.f32 0.0, %v1615
        %v1617 = vpop.f32.mrb[0].mxu0
        %v1618 = vadd.f32 0.0, %v1617
        %v1619 = vpop.f32.mrb[0].mxu0
        %v1620 = vadd.f32 0.0, %v1619
        %1621 = vmatprep.mubr.bf16.mxu0 0
        %1622 = vmatmul.mubr.bf16.gmra.mrb[0].mxu0 %v1415
        %v1623 = vpop.f32.mrb[0].mxu0
        %v1624 = vadd.f32 0.0, %v1623
        %v1625 = vpop.f32.mrb[0].mxu0
        %v1626 = vadd.f32 0.0, %v1625
        %v1627 = vpop.f32.mrb[0].mxu0
        %v1628 = vadd.f32 0.0, %v1627
        %v1629 = vpop.f32.mrb[0].mxu0
        %v1630 = vadd.f32 0.0, %v1629
        %1631 = vdwg.mxu0
        %v1648 = vunpack.c.l.b16 %v1467
        %v1649 = vunpack.c.h.b16 %v1467
        %v1650 = vunpack.c.l.b16 %v1468
        %v1651 = vunpack.c.h.b16 %v1468
        %v1652 = vunpack.c.l.b16 %v1469
        %v1653 = vunpack.c.h.b16 %v1469
        %v1654 = vunpack.c.l.b16 %v1470
        %v1655 = vunpack.c.h.b16 %v1470
        %v1656 = vunpack.c.l.b16 %v1471
        %v1657 = vunpack.c.h.b16 %v1471
        %v1658 = vunpack.c.l.b16 %v1472
        %v1659 = vunpack.c.h.b16 %v1472
        %v1660 = vunpack.c.l.b16 %v1473
        %v1661 = vunpack.c.h.b16 %v1473
        %v1662 = vunpack.c.l.b16 %v1474
        %v1663 = vunpack.c.h.b16 %v1474
        %v1664 = vunpack.c.l.b16 %v1475
        %v1665 = vunpack.c.h.b16 %v1475
        %v1666 = vunpack.c.l.b16 %v1476
        %v1667 = vunpack.c.h.b16 %v1476
        %v1668 = vunpack.c.l.b16 %v1477
        %v1669 = vunpack.c.h.b16 %v1477
        %v1670 = vunpack.c.l.b16 %v1478
        %v1671 = vunpack.c.h.b16 %v1478
        %v1672 = vunpack.c.l.b16 %v1479
        %v1673 = vunpack.c.h.b16 %v1479
        %v1674 = vunpack.c.l.b16 %v1480
        %v1675 = vunpack.c.h.b16 %v1480
        %v1676 = vunpack.c.l.b16 %v1481
        %v1677 = vunpack.c.h.b16 %v1481
        %v1678 = vunpack.c.l.b16 %v1482
        %v1679 = vunpack.c.h.b16 %v1482
        %v1680 = vpack.c.b16 %v1650, %v1648
        %v1681 = vpack.c.b16 %v1651, %v1649
        %v1682 = vpack.c.b16 %v1654, %v1652
        %v1683 = vpack.c.b16 %v1655, %v1653
        %v1684 = vpack.c.b16 %v1658, %v1656
        %v1685 = vpack.c.b16 %v1659, %v1657
        %v1686 = vpack.c.b16 %v1662, %v1660
        %v1687 = vpack.c.b16 %v1663, %v1661
        %v1688 = vpack.c.b16 %v1666, %v1664
        %v1689 = vpack.c.b16 %v1667, %v1665
        %v1690 = vpack.c.b16 %v1670, %v1668
        %v1691 = vpack.c.b16 %v1671, %v1669
        %v1692 = vpack.c.b16 %v1674, %v1672
        %v1693 = vpack.c.b16 %v1675, %v1673
        %v1694 = vpack.c.b16 %v1678, %v1676
        %v1695 = vpack.c.b16 %v1679, %v1677
        %1712 = vmatprep.subr.bf16.mxu0 %v1681
        %1713 = vmatpush1.bf16.msra.mxu0 %v1680
        %1714 = vmatprep.subr.bf16.mxu0 %v1683
        %1715 = vmatpush1.bf16.msra.mxu0 %v1682
        %1716 = vmatprep.subr.bf16.mxu0 %v1685
        %1717 = vmatpush1.bf16.msra.mxu0 %v1684
        %1718 = vmatprep.subr.bf16.mxu0 %v1687
        %1719 = vmatpush1.bf16.msra.mxu0 %v1686
        %1720 = vmatprep.subr.bf16.mxu0 %v1689
        %1721 = vmatpush1.bf16.msra.mxu0 %v1688
        %1722 = vmatprep.subr.bf16.mxu0 %v1691
        %1723 = vmatpush1.bf16.msra.mxu0 %v1690
        %1724 = vmatprep.subr.bf16.mxu0 %v1693
        %1725 = vmatpush1.bf16.msra.mxu0 %v1692
        %1726 = vmatprep.subr.bf16.mxu0 %v1695
        %1727 = vmatpush1.bf16.msra.mxu0 %v1694
        %1728 = vmatprep.subr.bf16.mxu0 0
        %1729 = vmatpush1.bf16.msra.mxu0 0
        %1730 = vmatprep.subr.bf16.mxu0 0
        %1731 = vmatpush1.bf16.msra.mxu0 0
        %1732 = vmatprep.subr.bf16.mxu0 0
        %1733 = vmatpush1.bf16.msra.mxu0 0
        %1734 = vmatprep.subr.bf16.mxu0 0
        %1735 = vmatpush1.bf16.msra.mxu0 0
        %1736 = vmatprep.subr.bf16.mxu0 0
        %1737 = vmatpush1.bf16.msra.mxu0 0
        %1738 = vmatprep.subr.bf16.mxu0 0
        %1739 = vmatpush1.bf16.msra.mxu0 0
        %1740 = vmatprep.subr.bf16.mxu0 0
        %1741 = vmatpush1.bf16.msra.mxu0 0
        %1742 = vmatprep.subr.bf16.mxu0 0
        %1743 = vmatpush1.bf16.msra.mxu0 0
        %1744 = vmatprep.mubr.bf16.mxu0 0
        %1745 = vmatmul.mubr.bf16.gmra.mrb[0].mxu0 %v1465
        %v1746 = vpop.f32.mrb[0].mxu0
        %v1747 = vadd.f32 %v1614, %v1746
        %v1748 = vpop.f32.mrb[0].mxu0
        %v1749 = vadd.f32 %v1616, %v1748
        %v1750 = vpop.f32.mrb[0].mxu0
        %v1751 = vadd.f32 %v1618, %v1750
        %v1752 = vpop.f32.mrb[0].mxu0
        %v1753 = vadd.f32 %v1620, %v1752
        %1754 = vmatprep.mubr.bf16.mxu0 0
        %1755 = vmatmul.mubr.bf16.gmra.mrb[0].mxu0 %v1466
        %v1756 = vpop.f32.mrb[0].mxu0
        %v1757 = vadd.f32 %v1624, %v1756
        %v1758 = vpop.f32.mrb[0].mxu0
        %v1759 = vadd.f32 %v1626, %v1758
        %v1760 = vpop.f32.mrb[0].mxu0
        %v1761 = vadd.f32 %v1628, %v1760
        %v1762 = vpop.f32.mrb[0].mxu0
        %v1763 = vadd.f32 %v1630, %v1762
        %1764 = vdwg.mxu0
        %v1765 = vld [vmem:[%s11] sm:$0x3]
        %v1767 = vlaneseq
        %v1768 = vshrl.u32 %v1767, 7
        %v1769 = vsub.s32 0, %v1768
        %v1770 = vrot.slane %v1765, %v1769
        %v1771 = vlaneseq
        %v1772 = vshrl.u32 %v1771, 7
        %v1773 = vsub.s32 1, %v1772
        %v1774 = vrot.slane %v1765, %v1773
        %v1777 = vadd.f32 %v1747, %v1770
        %v1778 = vadd.f32 %v1749, %v1774
        %v1779 = vadd.f32 %v1751, %v1770
        %v1780 = vadd.f32 %v1753, %v1774
        %v1781 = vadd.f32 %v1757, %v1770
        %v1782 = vadd.f32 %v1759, %v1774
        %v1783 = vadd.f32 %v1761, %v1770
        %v1784 = vadd.f32 %v1763, %v1774
        %v1785 = vadd.f32 %v1777, %v1779
        %v1786 = vadd.f32 %v1785, %v1781
        %v1787 = vadd.f32 %v1786, %v1783
        %v1788 = vrot.slane %v1787, 4
        %v1789 = vadd.f32 %v1787, %v1788
        %v1790 = vrot.slane %v1789, 2
        %v1791 = vadd.f32 %v1789, %v1790
        %v1792 = vrot.slane %v1791, 1
        %v1793 = vadd.f32 %v1791, %v1792
        %v1794 = vadd.f32 %v1778, %v1780
        %v1795 = vadd.f32 %v1794, %v1782
        %v1796 = vadd.f32 %v1795, %v1784
        %v1797 = vrot.slane %v1796, 4
        %v1798 = vadd.f32 %v1796, %v1797
        %v1799 = vrot.slane %v1798, 2
        %v1800 = vadd.f32 %v1798, %v1799
        %v1801 = vrot.slane %v1800, 1
        %v1802 = vadd.f32 %v1800, %v1801
        %v1803 = vmul.f32 %v1793, %v1089
        %v1804 = vmul.f32 %v1802, %v1089
        %v1805 = vsub.f32 %v1777, %v1803
        %v1806 = vsub.f32 %v1778, %v1804
        %v1807 = vsub.f32 %v1779, %v1803
        %v1808 = vsub.f32 %v1780, %v1804
        %v1809 = vsub.f32 %v1781, %v1803
        %v1810 = vsub.f32 %v1782, %v1804
        %v1811 = vsub.f32 %v1783, %v1803
        %v1812 = vsub.f32 %v1784, %v1804
        %v1813 = vmul.f32 %v1805, %v1805
        %v1814 = vmul.f32 %v1806, %v1806
        %v1815 = vmul.f32 %v1807, %v1807
        %v1816 = vmul.f32 %v1808, %v1808
        %v1817 = vmul.f32 %v1809, %v1809
        %v1818 = vmul.f32 %v1810, %v1810
        %v1819 = vmul.f32 %v1811, %v1811
        %v1820 = vmul.f32 %v1812, %v1812
        %v1821 = vadd.f32 %v1813, %v1815
        %v1822 = vadd.f32 %v1821, %v1817
        %v1823 = vadd.f32 %v1822, %v1819
        %v1824 = vrot.slane %v1823, 4
        %v1825 = vadd.f32 %v1823, %v1824
        %v1826 = vrot.slane %v1825, 2
        %v1827 = vadd.f32 %v1825, %v1826
        %v1828 = vrot.slane %v1827, 1
        %v1829 = vadd.f32 %v1827, %v1828
        %v1830 = vadd.f32 %v1814, %v1816
        %v1831 = vadd.f32 %v1830, %v1818
        %v1832 = vadd.f32 %v1831, %v1820
        %v1833 = vrot.slane %v1832, 4
        %v1834 = vadd.f32 %v1832, %v1833
        %v1835 = vrot.slane %v1834, 2
        %v1836 = vadd.f32 %v1834, %v1835
        %v1837 = vrot.slane %v1836, 1
        %v1838 = vadd.f32 %v1836, %v1837
        %v1839 = vmul.f32 %v1829, %v1089
        %v1840 = vmul.f32 %v1838, %v1089
        %v1841 = vadd.f32 %v1839, 1e-05
        %v1842 = vadd.f32 %v1840, 1e-05
        %v1843 = vrsqrt.pop %v1841
        %v1844 = vrsqrt.pop %v1842
        %v1845 = vmul.f32 %v1805, %v1843
        %v1846 = vmul.f32 %v1806, %v1844
        %v1847 = vmul.f32 %v1807, %v1843
        %v1848 = vmul.f32 %v1808, %v1844
        %v1849 = vmul.f32 %v1809, %v1843
        %v1850 = vmul.f32 %v1810, %v1844
        %v1851 = vmul.f32 %v1811, %v1843
        %v1852 = vmul.f32 %v1812, %v1844
        %v1853 = vld [vmem:[%s12] sm:$0x3]
        %v1855 = vlaneseq
        %v1856 = vshrl.u32 %v1855, 7
        %v1857 = vsub.s32 0, %v1856
        %v1858 = vrot.slane %v1853, %v1857
        %v1859 = vlaneseq
        %v1860 = vshrl.u32 %v1859, 7
        %v1861 = vsub.s32 1, %v1860
        %v1862 = vrot.slane %v1853, %v1861
        %v1865 = vmul.f32 %v1845, %v1858
        %v1866 = vmul.f32 %v1846, %v1862
        %v1867 = vmul.f32 %v1847, %v1858
        %v1868 = vmul.f32 %v1848, %v1862
        %v1869 = vmul.f32 %v1849, %v1858
        %v1870 = vmul.f32 %v1850, %v1862
        %v1871 = vmul.f32 %v1851, %v1858
        %v1872 = vmul.f32 %v1852, %v1862
        %v1873 = vld [vmem:[%s13] sm:$0x3]
        %v1875 = vlaneseq
        %v1876 = vshrl.u32 %v1875, 7
        %v1877 = vsub.s32 0, %v1876
        %v1878 = vrot.slane %v1873, %v1877
        %v1879 = vlaneseq
        %v1880 = vshrl.u32 %v1879, 7
        %v1881 = vsub.s32 1, %v1880
        %v1882 = vrot.slane %v1873, %v1881
        %v1885 = vadd.f32 %v1865, %v1878
        %v1886 = vadd.f32 %v1866, %v1882
        %v1887 = vadd.f32 %v1867, %v1878
        %v1888 = vadd.f32 %v1868, %v1882
        %v1889 = vadd.f32 %v1869, %v1878
        %v1890 = vadd.f32 %v1870, %v1882
        %v1891 = vadd.f32 %v1871, %v1878
        %v1892 = vadd.f32 %v1872, %v1882
        %v1893 = vmax.f32 %v1885, 0.0
        %v1894 = vmax.f32 %v1886, 0.0
        %v1895 = vmax.f32 %v1887, 0.0
        %v1896 = vmax.f32 %v1888, 0.0
        %v1897 = vmax.f32 %v1889, 0.0
        %v1898 = vmax.f32 %v1890, 0.0
        %v1899 = vmax.f32 %v1891, 0.0
        %v1900 = vmax.f32 %v1892, 0.0
        %v1901 = vpack.c.bf16 %v1895, %v1893
        %v1902 = vpack.c.bf16 %v1896, %v1894
        %v1903 = vpack.c.bf16 %v1899, %v1897
        %v1904 = vpack.c.bf16 %v1900, %v1898
        %v1905 = vld [vmem:[#allocation10] sm:$0xff]
        %v1906 = vld [vmem:[#allocation10 + $0x8] sm:$0xff]
        %v1907 = vld [vmem:[#allocation10 + $0x10] sm:$0xff]
        %v1908 = vld [vmem:[#allocation10 + $0x18] sm:$0xff]
        %v1909 = vld [vmem:[#allocation10 + $0x20] sm:$0xff]
        %v1910 = vld [vmem:[#allocation10 + $0x28] sm:$0xff]
        %v1911 = vld [vmem:[#allocation10 + $0x30] sm:$0xff]
        %v1912 = vld [vmem:[#allocation10 + $0x38] sm:$0xff]
        %v1913 = vld [vmem:[#allocation10 + $0x40] sm:$0xff]
        %v1914 = vld [vmem:[#allocation10 + $0x48] sm:$0xff]
        %v1915 = vld [vmem:[#allocation10 + $0x50] sm:$0xff]
        %v1916 = vld [vmem:[#allocation10 + $0x58] sm:$0xff]
        %v1917 = vld [vmem:[#allocation10 + $0x60] sm:$0xff]
        %v1918 = vld [vmem:[#allocation10 + $0x68] sm:$0xff]
        %v1919 = vld [vmem:[#allocation10 + $0x70] sm:$0xff]
        %v1920 = vld [vmem:[#allocation10 + $0x78] sm:$0xff]
        %v1921 = vld [vmem:[#allocation10 + $0x80] sm:$0xff]
        %v1922 = vld [vmem:[#allocation10 + $0x88] sm:$0xff]
        %v1923 = vld [vmem:[#allocation10 + $0x90] sm:$0xff]
        %v1924 = vld [vmem:[#allocation10 + $0x98] sm:$0xff]
        %v1925 = vld [vmem:[#allocation10 + $0xa0] sm:$0xff]
        %v1926 = vld [vmem:[#allocation10 + $0xa8] sm:$0xff]
        %v1927 = vld [vmem:[#allocation10 + $0xb0] sm:$0xff]
        %v1928 = vld [vmem:[#allocation10 + $0xb8] sm:$0xff]
        %v1929 = vld [vmem:[#allocation10 + $0xc0] sm:$0xff]
        %v1930 = vld [vmem:[#allocation10 + $0xc8] sm:$0xff]
        %v1931 = vld [vmem:[#allocation10 + $0xd0] sm:$0xff]
        %v1932 = vld [vmem:[#allocation10 + $0xd8] sm:$0xff]
        %v1933 = vld [vmem:[#allocation10 + $0xe0] sm:$0xff]
        %v1934 = vld [vmem:[#allocation10 + $0xe8] sm:$0xff]
        %v1935 = vld [vmem:[#allocation10 + $0xf0] sm:$0xff]
        %v1936 = vld [vmem:[#allocation10 + $0xf8] sm:$0xff]
        %v1937 = vld [vmem:[#allocation10 + $0x100] sm:$0xff]
        %v1938 = vld [vmem:[#allocation10 + $0x108] sm:$0xff]
        %v1939 = vld [vmem:[#allocation10 + $0x110] sm:$0xff]
        %v1940 = vld [vmem:[#allocation10 + $0x118] sm:$0xff]
        %v1941 = vld [vmem:[#allocation10 + $0x120] sm:$0xff]
        %v1942 = vld [vmem:[#allocation10 + $0x128] sm:$0xff]
        %v1943 = vld [vmem:[#allocation10 + $0x130] sm:$0xff]
        %v1944 = vld [vmem:[#allocation10 + $0x138] sm:$0xff]
        %v1945 = vld [vmem:[#allocation10 + $0x140] sm:$0xff]
        %v1946 = vld [vmem:[#allocation10 + $0x148] sm:$0xff]
        %v1947 = vld [vmem:[#allocation10 + $0x150] sm:$0xff]
        %v1948 = vld [vmem:[#allocation10 + $0x158] sm:$0xff]
        %v1949 = vld [vmem:[#allocation10 + $0x160] sm:$0xff]
        %v1950 = vld [vmem:[#allocation10 + $0x168] sm:$0xff]
        %v1951 = vld [vmem:[#allocation10 + $0x170] sm:$0xff]
        %v1952 = vld [vmem:[#allocation10 + $0x178] sm:$0xff]
        %v1953 = vld [vmem:[#allocation10 + $0x180] sm:$0xff]
        %v1954 = vld [vmem:[#allocation10 + $0x188] sm:$0xff]
        %v1955 = vld [vmem:[#allocation10 + $0x190] sm:$0xff]
        %v1956 = vld [vmem:[#allocation10 + $0x198] sm:$0xff]
        %v1957 = vld [vmem:[#allocation10 + $0x1a0] sm:$0xff]
        %v1958 = vld [vmem:[#allocation10 + $0x1a8] sm:$0xff]
        %v1959 = vld [vmem:[#allocation10 + $0x1b0] sm:$0xff]
        %v1960 = vld [vmem:[#allocation10 + $0x1b8] sm:$0xff]
        %v1961 = vld [vmem:[#allocation10 + $0x1c0] sm:$0xff]
        %v1962 = vld [vmem:[#allocation10 + $0x1c8] sm:$0xff]
        %v1963 = vld [vmem:[#allocation10 + $0x1d0] sm:$0xff]
        %v1964 = vld [vmem:[#allocation10 + $0x1d8] sm:$0xff]
        %v1965 = vld [vmem:[#allocation10 + $0x1e0] sm:$0xff]
        %v1966 = vld [vmem:[#allocation10 + $0x1e8] sm:$0xff]
        %v1967 = vld [vmem:[#allocation10 + $0x1f0] sm:$0xff]
        %v1968 = vld [vmem:[#allocation10 + $0x1f8] sm:$0xff]
        %v2033 = vunpack.c.l.b16 %v1905
        %v2034 = vunpack.c.h.b16 %v1905
        %v2035 = vunpack.c.l.b16 %v1906
        %v2036 = vunpack.c.h.b16 %v1906
        %v2037 = vunpack.c.l.b16 %v1907
        %v2038 = vunpack.c.h.b16 %v1907
        %v2039 = vunpack.c.l.b16 %v1908
        %v2040 = vunpack.c.h.b16 %v1908
        %v2041 = vunpack.c.l.b16 %v1909
        %v2042 = vunpack.c.h.b16 %v1909
        %v2043 = vunpack.c.l.b16 %v1910
        %v2044 = vunpack.c.h.b16 %v1910
        %v2045 = vunpack.c.l.b16 %v1911
        %v2046 = vunpack.c.h.b16 %v1911
        %v2047 = vunpack.c.l.b16 %v1912
        %v2048 = vunpack.c.h.b16 %v1912
        %v2049 = vunpack.c.l.b16 %v1913
        %v2050 = vunpack.c.h.b16 %v1913
        %v2051 = vunpack.c.l.b16 %v1914
        %v2052 = vunpack.c.h.b16 %v1914
        %v2053 = vunpack.c.l.b16 %v1915
        %v2054 = vunpack.c.h.b16 %v1915
        %v2055 = vunpack.c.l.b16 %v1916
        %v2056 = vunpack.c.h.b16 %v1916
        %v2057 = vunpack.c.l.b16 %v1917
        %v2058 = vunpack.c.h.b16 %v1917
        %v2059 = vunpack.c.l.b16 %v1918
        %v2060 = vunpack.c.h.b16 %v1918
        %v2061 = vunpack.c.l.b16 %v1919
        %v2062 = vunpack.c.h.b16 %v1919
        %v2063 = vunpack.c.l.b16 %v1920
        %v2064 = vunpack.c.h.b16 %v1920
        %v2065 = vunpack.c.l.b16 %v1921
        %v2066 = vunpack.c.h.b16 %v1921
        %v2067 = vunpack.c.l.b16 %v1922
        %v2068 = vunpack.c.h.b16 %v1922
        %v2069 = vunpack.c.l.b16 %v1923
        %v2070 = vunpack.c.h.b16 %v1923
        %v2071 = vunpack.c.l.b16 %v1924
        %v2072 = vunpack.c.h.b16 %v1924
        %v2073 = vunpack.c.l.b16 %v1925
        %v2074 = vunpack.c.h.b16 %v1925
        %v2075 = vunpack.c.l.b16 %v1926
        %v2076 = vunpack.c.h.b16 %v1926
        %v2077 = vunpack.c.l.b16 %v1927
        %v2078 = vunpack.c.h.b16 %v1927
        %v2079 = vunpack.c.l.b16 %v1928
        %v2080 = vunpack.c.h.b16 %v1928
        %v2081 = vunpack.c.l.b16 %v1929
        %v2082 = vunpack.c.h.b16 %v1929
        %v2083 = vunpack.c.l.b16 %v1930
        %v2084 = vunpack.c.h.b16 %v1930
        %v2085 = vunpack.c.l.b16 %v1931
        %v2086 = vunpack.c.h.b16 %v1931
        %v2087 = vunpack.c.l.b16 %v1932
        %v2088 = vunpack.c.h.b16 %v1932
        %v2089 = vunpack.c.l.b16 %v1933
        %v2090 = vunpack.c.h.b16 %v1933
        %v2091 = vunpack.c.l.b16 %v1934
        %v2092 = vunpack.c.h.b16 %v1934
        %v2093 = vunpack.c.l.b16 %v1935
        %v2094 = vunpack.c.h.b16 %v1935
        %v2095 = vunpack.c.l.b16 %v1936
        %v2096 = vunpack.c.h.b16 %v1936
        %v2097 = vunpack.c.l.b16 %v1937
        %v2098 = vunpack.c.h.b16 %v1937
        %v2099 = vunpack.c.l.b16 %v1938
        %v2100 = vunpack.c.h.b16 %v1938
        %v2101 = vunpack.c.l.b16 %v1939
        %v2102 = vunpack.c.h.b16 %v1939
        %v2103 = vunpack.c.l.b16 %v1940
        %v2104 = vunpack.c.h.b16 %v1940
        %v2105 = vunpack.c.l.b16 %v1941
        %v2106 = vunpack.c.h.b16 %v1941
        %v2107 = vunpack.c.l.b16 %v1942
        %v2108 = vunpack.c.h.b16 %v1942
        %v2109 = vunpack.c.l.b16 %v1943
        %v2110 = vunpack.c.h.b16 %v1943
        %v2111 = vunpack.c.l.b16 %v1944
        %v2112 = vunpack.c.h.b16 %v1944
        %v2113 = vunpack.c.l.b16 %v1945
        %v2114 = vunpack.c.h.b16 %v1945
        %v2115 = vunpack.c.l.b16 %v1946
        %v2116 = vunpack.c.h.b16 %v1946
        %v2117 = vunpack.c.l.b16 %v1947
        %v2118 = vunpack.c.h.b16 %v1947
        %v2119 = vunpack.c.l.b16 %v1948
        %v2120 = vunpack.c.h.b16 %v1948
        %v2121 = vunpack.c.l.b16 %v1949
        %v2122 = vunpack.c.h.b16 %v1949
        %v2123 = vunpack.c.l.b16 %v1950
        %v2124 = vunpack.c.h.b16 %v1950
        %v2125 = vunpack.c.l.b16 %v1951
        %v2126 = vunpack.c.h.b16 %v1951
        %v2127 = vunpack.c.l.b16 %v1952
        %v2128 = vunpack.c.h.b16 %v1952
        %v2129 = vunpack.c.l.b16 %v1953
        %v2130 = vunpack.c.h.b16 %v1953
        %v2131 = vunpack.c.l.b16 %v1954
        %v2132 = vunpack.c.h.b16 %v1954
        %v2133 = vunpack.c.l.b16 %v1955
        %v2134 = vunpack.c.h.b16 %v1955
        %v2135 = vunpack.c.l.b16 %v1956
        %v2136 = vunpack.c.h.b16 %v1956
        %v2137 = vunpack.c.l.b16 %v1957
        %v2138 = vunpack.c.h.b16 %v1957
        %v2139 = vunpack.c.l.b16 %v1958
        %v2140 = vunpack.c.h.b16 %v1958
        %v2141 = vunpack.c.l.b16 %v1959
        %v2142 = vunpack.c.h.b16 %v1959
        %v2143 = vunpack.c.l.b16 %v1960
        %v2144 = vunpack.c.h.b16 %v1960
        %v2145 = vunpack.c.l.b16 %v1961
        %v2146 = vunpack.c.h.b16 %v1961
        %v2147 = vunpack.c.l.b16 %v1962
        %v2148 = vunpack.c.h.b16 %v1962
        %v2149 = vunpack.c.l.b16 %v1963
        %v2150 = vunpack.c.h.b16 %v1963
        %v2151 = vunpack.c.l.b16 %v1964
        %v2152 = vunpack.c.h.b16 %v1964
        %v2153 = vunpack.c.l.b16 %v1965
        %v2154 = vunpack.c.h.b16 %v1965
        %v2155 = vunpack.c.l.b16 %v1966
        %v2156 = vunpack.c.h.b16 %v1966
        %v2157 = vunpack.c.l.b16 %v1967
        %v2158 = vunpack.c.h.b16 %v1967
        %v2159 = vunpack.c.l.b16 %v1968
        %v2160 = vunpack.c.h.b16 %v1968
        %v2161 = vpack.c.b16 %v2037, %v2033
        %v2162 = vpack.c.b16 %v2038, %v2034
        %v2163 = vpack.c.b16 %v2039, %v2035
        %v2164 = vpack.c.b16 %v2040, %v2036
        %v2165 = vpack.c.b16 %v2045, %v2041
        %v2166 = vpack.c.b16 %v2046, %v2042
        %v2167 = vpack.c.b16 %v2047, %v2043
        %v2168 = vpack.c.b16 %v2048, %v2044
        %v2169 = vpack.c.b16 %v2053, %v2049
        %v2170 = vpack.c.b16 %v2054, %v2050
        %v2171 = vpack.c.b16 %v2055, %v2051
        %v2172 = vpack.c.b16 %v2056, %v2052
        %v2173 = vpack.c.b16 %v2061, %v2057
        %v2174 = vpack.c.b16 %v2062, %v2058
        %v2175 = vpack.c.b16 %v2063, %v2059
        %v2176 = vpack.c.b16 %v2064, %v2060
        %v2177 = vpack.c.b16 %v2069, %v2065
        %v2178 = vpack.c.b16 %v2070, %v2066
        %v2179 = vpack.c.b16 %v2071, %v2067
        %v2180 = vpack.c.b16 %v2072, %v2068
        %v2181 = vpack.c.b16 %v2077, %v2073
        %v2182 = vpack.c.b16 %v2078, %v2074
        %v2183 = vpack.c.b16 %v2079, %v2075
        %v2184 = vpack.c.b16 %v2080, %v2076
        %v2185 = vpack.c.b16 %v2085, %v2081
        %v2186 = vpack.c.b16 %v2086, %v2082
        %v2187 = vpack.c.b16 %v2087, %v2083
        %v2188 = vpack.c.b16 %v2088, %v2084
        %v2189 = vpack.c.b16 %v2093, %v2089
        %v2190 = vpack.c.b16 %v2094, %v2090
        %v2191 = vpack.c.b16 %v2095, %v2091
        %v2192 = vpack.c.b16 %v2096, %v2092
        %v2193 = vpack.c.b16 %v2101, %v2097
        %v2194 = vpack.c.b16 %v2102, %v2098
        %v2195 = vpack.c.b16 %v2103, %v2099
        %v2196 = vpack.c.b16 %v2104, %v2100
        %v2197 = vpack.c.b16 %v2109, %v2105
        %v2198 = vpack.c.b16 %v2110, %v2106
        %v2199 = vpack.c.b16 %v2111, %v2107
        %v2200 = vpack.c.b16 %v2112, %v2108
        %v2201 = vpack.c.b16 %v2117, %v2113
        %v2202 = vpack.c.b16 %v2118, %v2114
        %v2203 = vpack.c.b16 %v2119, %v2115
        %v2204 = vpack.c.b16 %v2120, %v2116
        %v2205 = vpack.c.b16 %v2125, %v2121
        %v2206 = vpack.c.b16 %v2126, %v2122
        %v2207 = vpack.c.b16 %v2127, %v2123
        %v2208 = vpack.c.b16 %v2128, %v2124
        %v2209 = vpack.c.b16 %v2133, %v2129
        %v2210 = vpack.c.b16 %v2134, %v2130
        %v2211 = vpack.c.b16 %v2135, %v2131
        %v2212 = vpack.c.b16 %v2136, %v2132
        %v2213 = vpack.c.b16 %v2141, %v2137
        %v2214 = vpack.c.b16 %v2142, %v2138
        %v2215 = vpack.c.b16 %v2143, %v2139
        %v2216 = vpack.c.b16 %v2144, %v2140
        %v2217 = vpack.c.b16 %v2149, %v2145
        %v2218 = vpack.c.b16 %v2150, %v2146
        %v2219 = vpack.c.b16 %v2151, %v2147
        %v2220 = vpack.c.b16 %v2152, %v2148
        %v2221 = vpack.c.b16 %v2157, %v2153
        %v2222 = vpack.c.b16 %v2158, %v2154
        %v2223 = vpack.c.b16 %v2159, %v2155
        %v2224 = vpack.c.b16 %v2160, %v2156
        %2289 = vmatprep.subr.bf16.mxu0 %v2162
        %2290 = vmatpush1.bf16.msra.mxu0 %v2161
        %2291 = vmatprep.subr.bf16.mxu0 %v2166
        %2292 = vmatpush1.bf16.msra.mxu0 %v2165
        %2293 = vmatprep.subr.bf16.mxu0 %v2170
        %2294 = vmatpush1.bf16.msra.mxu0 %v2169
        %2295 = vmatprep.subr.bf16.mxu0 %v2174
        %2296 = vmatpush1.bf16.msra.mxu0 %v2173
        %2297 = vmatprep.subr.bf16.mxu0 %v2178
        %2298 = vmatpush1.bf16.msra.mxu0 %v2177
        %2299 = vmatprep.subr.bf16.mxu0 %v2182
        %2300 = vmatpush1.bf16.msra.mxu0 %v2181
        %2301 = vmatprep.subr.bf16.mxu0 %v2186
        %2302 = vmatpush1.bf16.msra.mxu0 %v2185
        %2303 = vmatprep.subr.bf16.mxu0 %v2190
        %2304 = vmatpush1.bf16.msra.mxu0 %v2189
        %2305 = vmatprep.subr.bf16.mxu0 %v2194
        %2306 = vmatpush1.bf16.msra.mxu0 %v2193
        %2307 = vmatprep.subr.bf16.mxu0 %v2198
        %2308 = vmatpush1.bf16.msra.mxu0 %v2197
        %2309 = vmatprep.subr.bf16.mxu0 %v2202
        %2310 = vmatpush1.bf16.msra.mxu0 %v2201
        %2311 = vmatprep.subr.bf16.mxu0 %v2206
        %2312 = vmatpush1.bf16.msra.mxu0 %v2205
        %2313 = vmatprep.subr.bf16.mxu0 %v2210
        %2314 = vmatpush1.bf16.msra.mxu0 %v2209
        %2315 = vmatprep.subr.bf16.mxu0 %v2214
        %2316 = vmatpush1.bf16.msra.mxu0 %v2213
        %2317 = vmatprep.subr.bf16.mxu0 %v2218
        %2318 = vmatpush1.bf16.msra.mxu0 %v2217
        %2319 = vmatprep.subr.bf16.mxu0 %v2222
        %2320 = vmatpush1.bf16.msra.mxu0 %v2221
        %2321 = vmatprep.mubr.bf16.mxu0 %v1902
        %2322 = vmatmul.mubr.bf16.gmra.mrb[0].mxu0 %v1901
        %v2323 = vpop.f32.mrb[0].mxu0
        %v2324 = vadd.f32 0.0, %v2323
        %v2325 = vpop.f32.mrb[0].mxu0
        %v2326 = vadd.f32 0.0, %v2325
        %v2327 = vpop.f32.mrb[0].mxu0
        %v2328 = vadd.f32 0.0, %v2327
        %v2329 = vpop.f32.mrb[0].mxu0
        %v2330 = vadd.f32 0.0, %v2329
        %2331 = vmatprep.mubr.bf16.mxu0 %v1904
        %2332 = vmatmul.mubr.bf16.gmra.mrb[0].mxu0 %v1903
        %v2333 = vpop.f32.mrb[0].mxu0
        %v2334 = vadd.f32 0.0, %v2333
        %v2335 = vpop.f32.mrb[0].mxu0
        %v2336 = vadd.f32 0.0, %v2335
        %v2337 = vpop.f32.mrb[0].mxu0
        %v2338 = vadd.f32 0.0, %v2337
        %v2339 = vpop.f32.mrb[0].mxu0
        %v2340 = vadd.f32 0.0, %v2339
        %2341 = vdwg.mxu0
        %2342 = vmatprep.subr.bf16.mxu0 %v2164
        %2343 = vmatpush1.bf16.msra.mxu0 %v2163
        %2344 = vmatprep.subr.bf16.mxu0 %v2168
        %2345 = vmatpush1.bf16.msra.mxu0 %v2167
        %2346 = vmatprep.subr.bf16.mxu0 %v2172
        %2347 = vmatpush1.bf16.msra.mxu0 %v2171
        %2348 = vmatprep.subr.bf16.mxu0 %v2176
        %2349 = vmatpush1.bf16.msra.mxu0 %v2175
        %2350 = vmatprep.subr.bf16.mxu0 %v2180
        %2351 = vmatpush1.bf16.msra.mxu0 %v2179
        %2352 = vmatprep.subr.bf16.mxu0 %v2184
        %2353 = vmatpush1.bf16.msra.mxu0 %v2183
        %2354 = vmatprep.subr.bf16.mxu0 %v2188
        %2355 = vmatpush1.bf16.msra.mxu0 %v2187
        %2356 = vmatprep.subr.bf16.mxu0 %v2192
        %2357 = vmatpush1.bf16.msra.mxu0 %v2191
        %2358 = vmatprep.subr.bf16.mxu0 %v2196
        %2359 = vmatpush1.bf16.msra.mxu0 %v2195
        %2360 = vmatprep.subr.bf16.mxu0 %v2200
        %2361 = vmatpush1.bf16.msra.mxu0 %v2199
        %2362 = vmatprep.subr.bf16.mxu0 %v2204
        %2363 = vmatpush1.bf16.msra.mxu0 %v2203
        %2364 = vmatprep.subr.bf16.mxu0 %v2208
        %2365 = vmatpush1.bf16.msra.mxu0 %v2207
        %2366 = vmatprep.subr.bf16.mxu0 %v2212
        %2367 = vmatpush1.bf16.msra.mxu0 %v2211
        %2368 = vmatprep.subr.bf16.mxu0 %v2216
        %2369 = vmatpush1.bf16.msra.mxu0 %v2215
        %2370 = vmatprep.subr.bf16.mxu0 %v2220
        %2371 = vmatpush1.bf16.msra.mxu0 %v2219
        %2372 = vmatprep.subr.bf16.mxu0 %v2224
        %2373 = vmatpush1.bf16.msra.mxu0 %v2223
        %2374 = vmatprep.mubr.bf16.mxu0 %v1902
        %2375 = vmatmul.mubr.bf16.gmra.mrb[0].mxu0 %v1901
        %v2376 = vpop.f32.mrb[0].mxu0
        %v2377 = vadd.f32 0.0, %v2376
        %v2378 = vpop.f32.mrb[0].mxu0
        %v2379 = vadd.f32 0.0, %v2378
        %v2380 = vpop.f32.mrb[0].mxu0
        %v2381 = vadd.f32 0.0, %v2380
        %v2382 = vpop.f32.mrb[0].mxu0
        %v2383 = vadd.f32 0.0, %v2382
        %2384 = vmatprep.mubr.bf16.mxu0 %v1904
        %2385 = vmatmul.mubr.bf16.gmra.mrb[0].mxu0 %v1903
        %v2386 = vpop.f32.mrb[0].mxu0
        %v2387 = vadd.f32 0.0, %v2386
        %v2388 = vpop.f32.mrb[0].mxu0
        %v2389 = vadd.f32 0.0, %v2388
        %v2390 = vpop.f32.mrb[0].mxu0
        %v2391 = vadd.f32 0.0, %v2390
        %v2392 = vpop.f32.mrb[0].mxu0
        %v2393 = vadd.f32 0.0, %v2392
        %2394 = vdwg.mxu0
        %v2395 = vpack.c.bf16 %v2328, %v2324
        %v2396 = vpack.c.bf16 %v2330, %v2326
        %v2397 = vpack.c.bf16 %v2338, %v2334
        %v2398 = vpack.c.bf16 %v2340, %v2336
        %2399 = vmatprep.subr.bf16.mxu0 %v2396
        %2400 = vmatpush1.bf16.msra.mxu0 %v2395
        %2401 = vmatprep.subr.bf16.mxu0 %v2398
        %2402 = vmatpush1.bf16.msra.mxu0 %v2397
        %2403 = vmatprep.subr.bf16.mxu0 0
        %2404 = vmatpush1.bf16.msra.mxu0 0
        %2405 = vmatprep.subr.bf16.mxu0 0
        %2406 = vmatpush1.bf16.msra.mxu0 0
        %2407 = vmatprep.subr.bf16.mxu0 0
        %2408 = vmatpush1.bf16.msra.mxu0 0
        %2409 = vmatprep.subr.bf16.mxu0 0
        %2410 = vmatpush1.bf16.msra.mxu0 0
        %2411 = vmatprep.subr.bf16.mxu0 0
        %2412 = vmatpush1.bf16.msra.mxu0 0
        %2413 = vmatprep.subr.bf16.mxu0 0
        %2414 = vmatpush1.bf16.msra.mxu0 0
        %2415 = vmatprep.subr.bf16.mxu0 0
        %2416 = vmatpush1.bf16.msra.mxu0 0
        %2417 = vmatprep.subr.bf16.mxu0 0
        %2418 = vmatpush1.bf16.msra.mxu0 0
        %2419 = vmatprep.subr.bf16.mxu0 0
        %2420 = vmatpush1.bf16.msra.mxu0 0
        %2421 = vmatprep.subr.bf16.mxu0 0
        %2422 = vmatpush1.bf16.msra.mxu0 0
        %2423 = vmatprep.subr.bf16.mxu0 0
        %2424 = vmatpush1.bf16.msra.mxu0 0
        %2425 = vmatprep.subr.bf16.mxu0 0
        %2426 = vmatpush1.bf16.msra.mxu0 0
        %2427 = vmatprep.subr.bf16.mxu0 0
        %2428 = vmatpush1.bf16.msra.mxu0 0
        %2429 = vmatprep.subr.bf16.mxu0 0
        %2430 = vmatpush1.bf16.msra.mxu0 0
        %2431 = vmatprep.mubr.bf16.mxu0 0
        %2432 = vmatmul.mubr.bf16.gmra.mrb[0].mxu0 %v1015
        %v2433 = vpop.f32.mrb[0].mxu0
        %v2434 = vadd.f32 %v2377, %v2433
        %v2435 = vpop.f32.mrb[0].mxu0
        %v2436 = vadd.f32 %v2379, %v2435
        %v2437 = vpop.f32.mrb[0].mxu0
        %v2438 = vadd.f32 %v2381, %v2437
        %v2439 = vpop.f32.mrb[0].mxu0
        %v2440 = vadd.f32 %v2383, %v2439
        %2441 = vmatprep.mubr.bf16.mxu0 0
        %2442 = vmatmul.mubr.bf16.gmra.mrb[0].mxu0 %v1018
        %v2443 = vpop.f32.mrb[0].mxu0
        %v2444 = vadd.f32 %v2387, %v2443
        %v2445 = vpop.f32.mrb[0].mxu0
        %v2446 = vadd.f32 %v2389, %v2445
        %v2447 = vpop.f32.mrb[0].mxu0
        %v2448 = vadd.f32 %v2391, %v2447
        %v2449 = vpop.f32.mrb[0].mxu0
        %v2450 = vadd.f32 %v2393, %v2449
        %2451 = vdwg.mxu0
        %v2452 = vld [vmem:[%s15] sm:$0x3]
        %v2454 = vlaneseq
        %v2455 = vshrl.u32 %v2454, 7
        %v2456 = vsub.s32 0, %v2455
        %v2457 = vrot.slane %v2452, %v2456
        %v2458 = vlaneseq
        %v2459 = vshrl.u32 %v2458, 7
        %v2460 = vsub.s32 1, %v2459
        %v2461 = vrot.slane %v2452, %v2460
        %v2464 = vadd.f32 %v2434, %v2457
        %v2465 = vadd.f32 %v2436, %v2461
        %v2466 = vadd.f32 %v2438, %v2457
        %v2467 = vadd.f32 %v2440, %v2461
        %v2468 = vadd.f32 %v2444, %v2457
        %v2469 = vadd.f32 %v2446, %v2461
        %v2470 = vadd.f32 %v2448, %v2457
        %v2471 = vadd.f32 %v2450, %v2461
        %v2472 = vadd.f32 %v2464, %v2466
        %v2473 = vadd.f32 %v2472, %v2468
        %v2474 = vadd.f32 %v2473, %v2470
        %v2475 = vrot.slane %v2474, 4
        %v2476 = vadd.f32 %v2474, %v2475
        %v2477 = vrot.slane %v2476, 2
        %v2478 = vadd.f32 %v2476, %v2477
        %v2479 = vrot.slane %v2478, 1
        %v2480 = vadd.f32 %v2478, %v2479
        %v2481 = vadd.f32 %v2465, %v2467
        %v2482 = vadd.f32 %v2481, %v2469
        %v2483 = vadd.f32 %v2482, %v2471
        %v2484 = vrot.slane %v2483, 4
        %v2485 = vadd.f32 %v2483, %v2484
        %v2486 = vrot.slane %v2485, 2
        %v2487 = vadd.f32 %v2485, %v2486
        %v2488 = vrot.slane %v2487, 1
        %v2489 = vadd.f32 %v2487, %v2488
        %v2490 = vmul.f32 %v2480, %v1089
        %v2491 = vmul.f32 %v2489, %v1089
        %v2492 = vsub.f32 %v2464, %v2490
        %v2493 = vsub.f32 %v2465, %v2491
        %v2494 = vsub.f32 %v2466, %v2490
        %v2495 = vsub.f32 %v2467, %v2491
        %v2496 = vsub.f32 %v2468, %v2490
        %v2497 = vsub.f32 %v2469, %v2491
        %v2498 = vsub.f32 %v2470, %v2490
        %v2499 = vsub.f32 %v2471, %v2491
        %v2500 = vmul.f32 %v2492, %v2492
        %v2501 = vmul.f32 %v2493, %v2493
        %v2502 = vmul.f32 %v2494, %v2494
        %v2503 = vmul.f32 %v2495, %v2495
        %v2504 = vmul.f32 %v2496, %v2496
        %v2505 = vmul.f32 %v2497, %v2497
        %v2506 = vmul.f32 %v2498, %v2498
        %v2507 = vmul.f32 %v2499, %v2499
        %v2508 = vadd.f32 %v2500, %v2502
        %v2509 = vadd.f32 %v2508, %v2504
        %v2510 = vadd.f32 %v2509, %v2506
        %v2511 = vrot.slane %v2510, 4
        %v2512 = vadd.f32 %v2510, %v2511
        %v2513 = vrot.slane %v2512, 2
        %v2514 = vadd.f32 %v2512, %v2513
        %v2515 = vrot.slane %v2514, 1
        %v2516 = vadd.f32 %v2514, %v2515
        %v2517 = vadd.f32 %v2501, %v2503
        %v2518 = vadd.f32 %v2517, %v2505
        %v2519 = vadd.f32 %v2518, %v2507
        %v2520 = vrot.slane %v2519, 4
        %v2521 = vadd.f32 %v2519, %v2520
        %v2522 = vrot.slane %v2521, 2
        %v2523 = vadd.f32 %v2521, %v2522
        %v2524 = vrot.slane %v2523, 1
        %v2525 = vadd.f32 %v2523, %v2524
        %v2526 = vmul.f32 %v2516, %v1089
        %v2527 = vmul.f32 %v2525, %v1089
        %v2528 = vadd.f32 %v2526, 1e-05
        %v2529 = vadd.f32 %v2527, 1e-05
        %v2530 = vrsqrt.pop %v2528
        %v2531 = vrsqrt.pop %v2529
        %v2532 = vmul.f32 %v2492, %v2530
        %v2533 = vmul.f32 %v2493, %v2531
        %v2534 = vmul.f32 %v2494, %v2530
        %v2535 = vmul.f32 %v2495, %v2531
        %v2536 = vmul.f32 %v2496, %v2530
        %v2537 = vmul.f32 %v2497, %v2531
        %v2538 = vmul.f32 %v2498, %v2530
        %v2539 = vmul.f32 %v2499, %v2531
        %v2540 = vld [vmem:[%s16] sm:$0x3]
        %v2542 = vlaneseq
        %v2543 = vshrl.u32 %v2542, 7
        %v2544 = vsub.s32 0, %v2543
        %v2545 = vrot.slane %v2540, %v2544
        %v2546 = vlaneseq
        %v2547 = vshrl.u32 %v2546, 7
        %v2548 = vsub.s32 1, %v2547
        %v2549 = vrot.slane %v2540, %v2548
        %v2552 = vmul.f32 %v2532, %v2545
        %v2553 = vmul.f32 %v2533, %v2549
        %v2554 = vmul.f32 %v2534, %v2545
        %v2555 = vmul.f32 %v2535, %v2549
        %v2556 = vmul.f32 %v2536, %v2545
        %v2557 = vmul.f32 %v2537, %v2549
        %v2558 = vmul.f32 %v2538, %v2545
        %v2559 = vmul.f32 %v2539, %v2549
        %v2560 = vld [vmem:[%s17] sm:$0x3]
        %v2562 = vlaneseq
        %v2563 = vshrl.u32 %v2562, 7
        %v2564 = vsub.s32 0, %v2563
        %v2565 = vrot.slane %v2560, %v2564
        %v2566 = vlaneseq
        %v2567 = vshrl.u32 %v2566, 7
        %v2568 = vsub.s32 1, %v2567
        %v2569 = vrot.slane %v2560, %v2568
        %v2572 = vadd.f32 %v2552, %v2565
        %v2573 = vadd.f32 %v2553, %v2569
        %v2574 = vadd.f32 %v2554, %v2565
        %v2575 = vadd.f32 %v2555, %v2569
        %v2576 = vadd.f32 %v2556, %v2565
        %v2577 = vadd.f32 %v2557, %v2569
        %v2578 = vadd.f32 %v2558, %v2565
        %v2579 = vadd.f32 %v2559, %v2569
        %v2580 = vmax.f32 %v2572, 0.0
        %v2581 = vmax.f32 %v2573, 0.0
        %v2582 = vmax.f32 %v2574, 0.0
        %v2583 = vmax.f32 %v2575, 0.0
        %v2584 = vmax.f32 %v2576, 0.0
        %v2585 = vmax.f32 %v2577, 0.0
        %v2586 = vmax.f32 %v2578, 0.0
        %v2587 = vmax.f32 %v2579, 0.0
        %v2588 = vpack.c.bf16 %v2582, %v2580
        %v2589 = vpack.c.bf16 %v2583, %v2581
        %v2590 = vpack.c.bf16 %v2586, %v2584
        %v2591 = vpack.c.bf16 %v2587, %v2585
        %2592 = vmatprep.subr.bf16.mxu0 %v2589
        %2593 = vmatpush1.bf16.msra.mxu0 %v2588
        %2594 = vmatprep.subr.bf16.mxu0 %v2591
        %2595 = vmatpush1.bf16.msra.mxu0 %v2590
        %2596 = vmatprep.subr.bf16.mxu0 0
        %2597 = vmatpush1.bf16.msra.mxu0 0
        %2598 = vmatprep.subr.bf16.mxu0 0
        %2599 = vmatpush1.bf16.msra.mxu0 0
        %2600 = vmatprep.subr.bf16.mxu0 0
        %2601 = vmatpush1.bf16.msra.mxu0 0
        %2602 = vmatprep.subr.bf16.mxu0 0
        %2603 = vmatpush1.bf16.msra.mxu0 0
        %2604 = vmatprep.subr.bf16.mxu0 0
        %2605 = vmatpush1.bf16.msra.mxu0 0
        %2606 = vmatprep.subr.bf16.mxu0 0
        %2607 = vmatpush1.bf16.msra.mxu0 0
        %2608 = vmatprep.subr.bf16.mxu0 0
        %2609 = vmatpush1.bf16.msra.mxu0 0
        %2610 = vmatprep.subr.bf16.mxu0 0
        %2611 = vmatpush1.bf16.msra.mxu0 0
        %2612 = vmatprep.subr.bf16.mxu0 0
        %2613 = vmatpush1.bf16.msra.mxu0 0
        %2614 = vmatprep.subr.bf16.mxu0 0
        %2615 = vmatpush1.bf16.msra.mxu0 0
        %2616 = vmatprep.subr.bf16.mxu0 0
        %2617 = vmatpush1.bf16.msra.mxu0 0
        %2618 = vmatprep.subr.bf16.mxu0 0
        %2619 = vmatpush1.bf16.msra.mxu0 0
        %2620 = vmatprep.subr.bf16.mxu0 0
        %2621 = vmatpush1.bf16.msra.mxu0 0
        %2622 = vmatprep.subr.bf16.mxu0 0
        %2623 = vmatpush1.bf16.msra.mxu0 0
        %2624 = vmatprep.mubr.bf16.mxu0 0
        %2625 = vmatmul.mubr.bf16.gmra.mrb[0].mxu0 %v1015
        %v2626 = vpop.f32.mrb[0].mxu0
        %v2627 = vadd.f32 0.0, %v2626
        %v2628 = vpop.f32.mrb[0].mxu0
        %v2629 = vadd.f32 0.0, %v2628
        %v2630 = vpop.f32.mrb[0].mxu0
        %v2631 = vadd.f32 0.0, %v2630
        %v2632 = vpop.f32.mrb[0].mxu0
        %v2633 = vadd.f32 0.0, %v2632
        %2634 = vmatprep.mubr.bf16.mxu0 0
        %2635 = vmatmul.mubr.bf16.gmra.mrb[0].mxu0 %v1018
        %v2636 = vpop.f32.mrb[0].mxu0
        %v2637 = vadd.f32 0.0, %v2636
        %v2638 = vpop.f32.mrb[0].mxu0
        %v2639 = vadd.f32 0.0, %v2638
        %v2640 = vpop.f32.mrb[0].mxu0
        %v2641 = vadd.f32 0.0, %v2640
        %v2642 = vpop.f32.mrb[0].mxu0
        %v2643 = vadd.f32 0.0, %v2642
        %2644 = vdwg.mxu0
        %v2645 = vpack.c.bf16 %v2631, %v2627
        %v2646 = vpack.c.bf16 %v2633, %v2629
        %v2647 = vpack.c.bf16 %v2641, %v2637
        %v2648 = vpack.c.bf16 %v2643, %v2639
        %v2649 = vld [vmem:[#allocation11] sm:$0xff]
        %v2650 = vld [vmem:[#allocation11 + $0x8] sm:$0xff]
        %v2651 = vld [vmem:[#allocation11 + $0x10] sm:$0xf]
        %v2652 = vld [vmem:[#allocation11 + $0x14] sm:$0xff]
        %v2653 = vld [vmem:[#allocation11 + $0x1c] sm:$0xff]
        %v2654 = vld [vmem:[#allocation11 + $0x24] sm:$0xf]
        %v2655 = vld [vmem:[#allocation11 + $0x28] sm:$0xff]
        %v2656 = vld [vmem:[#allocation11 + $0x30] sm:$0xff]
        %v2657 = vld [vmem:[#allocation11 + $0x38] sm:$0xf]
        %v2658 = vld [vmem:[#allocation11 + $0x3c] sm:$0xff]
        %v2659 = vld [vmem:[#allocation11 + $0x44] sm:$0xff]
        %v2660 = vld [vmem:[#allocation11 + $0x4c] sm:$0xf]
        %v2661 = vld [vmem:[#allocation11 + $0x50] sm:$0xff]
        %v2662 = vld [vmem:[#allocation11 + $0x58] sm:$0xff]
        %v2663 = vld [vmem:[#allocation11 + $0x60] sm:$0xf]
        %v2664 = vld [vmem:[#allocation11 + $0x64] sm:$0xff]
        %v2665 = vld [vmem:[#allocation11 + $0x6c] sm:$0xff]
        %v2666 = vld [vmem:[#allocation11 + $0x74] sm:$0xf]
        %v2667 = vld [vmem:[#allocation11 + $0x78] sm:$0xff]
        %v2668 = vld [vmem:[#allocation11 + $0x80] sm:$0xff]
        %v2669 = vld [vmem:[#allocation11 + $0x88] sm:$0xf]
        %v2670 = vld [vmem:[#allocation11 + $0x8c] sm:$0xff]
        %v2671 = vld [vmem:[#allocation11 + $0x94] sm:$0xff]
        %v2672 = vld [vmem:[#allocation11 + $0x9c] sm:$0xf]
        %v2673 = vld [vmem:[#allocation11 + $0xa0] sm:$0xff]
        %v2674 = vld [vmem:[#allocation11 + $0xa8] sm:$0xff]
        %v2675 = vld [vmem:[#allocation11 + $0xb0] sm:$0xf]
        %v2676 = vld [vmem:[#allocation11 + $0xb4] sm:$0xff]
        %v2677 = vld [vmem:[#allocation11 + $0xbc] sm:$0xff]
        %v2678 = vld [vmem:[#allocation11 + $0xc4] sm:$0xf]
        %v2679 = vld [vmem:[#allocation11 + $0xc8] sm:$0xff]
        %v2680 = vld [vmem:[#allocation11 + $0xd0] sm:$0xff]
        %v2681 = vld [vmem:[#allocation11 + $0xd8] sm:$0xf]
        %v2682 = vld [vmem:[#allocation11 + $0xdc] sm:$0xff]
        %v2683 = vld [vmem:[#allocation11 + $0xe4] sm:$0xff]
        %v2684 = vld [vmem:[#allocation11 + $0xec] sm:$0xf]
        %v2685 = vld [vmem:[#allocation11 + $0xf0] sm:$0xff]
        %v2686 = vld [vmem:[#allocation11 + $0xf8] sm:$0xff]
        %v2687 = vld [vmem:[#allocation11 + $0x100] sm:$0xf]
        %v2688 = vld [vmem:[#allocation11 + $0x104] sm:$0xff]
        %v2689 = vld [vmem:[#allocation11 + $0x10c] sm:$0xff]
        %v2690 = vld [vmem:[#allocation11 + $0x114] sm:$0xf]
        %v2691 = vld [vmem:[#allocation11 + $0x118] sm:$0xff]
        %v2692 = vld [vmem:[#allocation11 + $0x120] sm:$0xff]
        %v2693 = vld [vmem:[#allocation11 + $0x128] sm:$0xf]
        %v2694 = vld [vmem:[#allocation11 + $0x12c] sm:$0xff]
        %v2695 = vld [vmem:[#allocation11 + $0x134] sm:$0xff]
        %v2696 = vld [vmem:[#allocation11 + $0x13c] sm:$0xf]
        %v2697 = vld [vmem:[#allocation11 + $0x140] sm:$0xff]
        %v2698 = vld [vmem:[#allocation11 + $0x148] sm:$0xff]
        %v2699 = vld [vmem:[#allocation11 + $0x150] sm:$0xf]
        %v2700 = vld [vmem:[#allocation11 + $0x154] sm:$0xff]
        %v2701 = vld [vmem:[#allocation11 + $0x15c] sm:$0xff]
        %v2702 = vld [vmem:[#allocation11 + $0x164] sm:$0xf]
        %v2703 = vld [vmem:[#allocation11 + $0x168] sm:$0xff]
        %v2704 = vld [vmem:[#allocation11 + $0x170] sm:$0xff]
        %v2705 = vld [vmem:[#allocation11 + $0x178] sm:$0xf]
        %v2706 = vld [vmem:[#allocation11 + $0x17c] sm:$0xff]
        %v2707 = vld [vmem:[#allocation11 + $0x184] sm:$0xff]
        %v2708 = vld [vmem:[#allocation11 + $0x18c] sm:$0xf]
        %v2709 = vld [vmem:[#allocation11 + $0x190] sm:$0xff]
        %v2710 = vld [vmem:[#allocation11 + $0x198] sm:$0xff]
        %v2711 = vld [vmem:[#allocation11 + $0x1a0] sm:$0xf]
        %v2712 = vld [vmem:[#allocation11 + $0x1a4] sm:$0xff]
        %v2713 = vld [vmem:[#allocation11 + $0x1ac] sm:$0xff]
        %v2714 = vld [vmem:[#allocation11 + $0x1b4] sm:$0xf]
        %v2715 = vld [vmem:[#allocation11 + $0x1b8] sm:$0xff]
        %v2716 = vld [vmem:[#allocation11 + $0x1c0] sm:$0xff]
        %v2717 = vld [vmem:[#allocation11 + $0x1c8] sm:$0xf]
        %v2718 = vld [vmem:[#allocation11 + $0x1cc] sm:$0xff]
        %v2719 = vld [vmem:[#allocation11 + $0x1d4] sm:$0xff]
        %v2720 = vld [vmem:[#allocation11 + $0x1dc] sm:$0xf]
        %v2721 = vld [vmem:[#allocation11 + $0x1e0] sm:$0xff]
        %v2722 = vld [vmem:[#allocation11 + $0x1e8] sm:$0xff]
        %v2723 = vld [vmem:[#allocation11 + $0x1f0] sm:$0xf]
        %v2724 = vld [vmem:[#allocation11 + $0x1f4] sm:$0xff]
        %v2725 = vld [vmem:[#allocation11 + $0x1fc] sm:$0xff]
        %v2726 = vld [vmem:[#allocation11 + $0x204] sm:$0xf]
        %v2727 = vld [vmem:[#allocation11 + $0x208] sm:$0xff]
        %v2728 = vld [vmem:[#allocation11 + $0x210] sm:$0xff]
        %v2729 = vld [vmem:[#allocation11 + $0x218] sm:$0xf]
        %v2730 = vld [vmem:[#allocation11 + $0x21c] sm:$0xff]
        %v2731 = vld [vmem:[#allocation11 + $0x224] sm:$0xff]
        %v2732 = vld [vmem:[#allocation11 + $0x22c] sm:$0xf]
        %v2733 = vld [vmem:[#allocation11 + $0x230] sm:$0xff]
        %v2734 = vld [vmem:[#allocation11 + $0x238] sm:$0xff]
        %v2735 = vld [vmem:[#allocation11 + $0x240] sm:$0xf]
        %v2736 = vld [vmem:[#allocation11 + $0x244] sm:$0xff]
        %v2737 = vld [vmem:[#allocation11 + $0x24c] sm:$0xff]
        %v2738 = vld [vmem:[#allocation11 + $0x254] sm:$0xf]
        %v2739 = vld [vmem:[#allocation11 + $0x258] sm:$0xff]
        %v2740 = vld [vmem:[#allocation11 + $0x260] sm:$0xff]
        %v2741 = vld [vmem:[#allocation11 + $0x268] sm:$0xf]
        %v2742 = vld [vmem:[#allocation11 + $0x26c] sm:$0xff]
        %v2743 = vld [vmem:[#allocation11 + $0x274] sm:$0xff]
        %v2744 = vld [vmem:[#allocation11 + $0x27c] sm:$0xf]
        %v2745 = vld [vmem:[#allocation11 + $0x280] sm:$0xff]
        %v2746 = vld [vmem:[#allocation11 + $0x288] sm:$0xff]
        %v2747 = vld [vmem:[#allocation11 + $0x290] sm:$0xf]
        %v2748 = vld [vmem:[#allocation11 + $0x294] sm:$0xff]
        %v2749 = vld [vmem:[#allocation11 + $0x29c] sm:$0xff]
        %v2750 = vld [vmem:[#allocation11 + $0x2a4] sm:$0xf]
        %v2751 = vld [vmem:[#allocation11 + $0x2a8] sm:$0xff]
        %v2752 = vld [vmem:[#allocation11 + $0x2b0] sm:$0xff]
        %v2753 = vld [vmem:[#allocation11 + $0x2b8] sm:$0xf]
        %v2754 = vld [vmem:[#allocation11 + $0x2bc] sm:$0xff]
        %v2755 = vld [vmem:[#allocation11 + $0x2c4] sm:$0xff]
        %v2756 = vld [vmem:[#allocation11 + $0x2cc] sm:$0xf]
        %v2757 = vld [vmem:[#allocation11 + $0x2d0] sm:$0xff]
        %v2758 = vld [vmem:[#allocation11 + $0x2d8] sm:$0xff]
        %v2759 = vld [vmem:[#allocation11 + $0x2e0] sm:$0xf]
        %v2760 = vld [vmem:[#allocation11 + $0x2e4] sm:$0xff]
        %v2761 = vld [vmem:[#allocation11 + $0x2ec] sm:$0xff]
        %v2762 = vld [vmem:[#allocation11 + $0x2f4] sm:$0xf]
        %v2763 = vld [vmem:[#allocation11 + $0x2f8] sm:$0xff]
        %v2764 = vld [vmem:[#allocation11 + $0x300] sm:$0xff]
        %v2765 = vld [vmem:[#allocation11 + $0x308] sm:$0xf]
        %v2766 = vld [vmem:[#allocation11 + $0x30c] sm:$0xff]
        %v2767 = vld [vmem:[#allocation11 + $0x314] sm:$0xff]
        %v2768 = vld [vmem:[#allocation11 + $0x31c] sm:$0xf]
        %v2769 = vld [vmem:[#allocation11 + $0x320] sm:$0xff]
        %v2770 = vld [vmem:[#allocation11 + $0x328] sm:$0xff]
        %v2771 = vld [vmem:[#allocation11 + $0x330] sm:$0xf]
        %v2772 = vld [vmem:[#allocation11 + $0x334] sm:$0xff]
        %v2773 = vld [vmem:[#allocation11 + $0x33c] sm:$0xff]
        %v2774 = vld [vmem:[#allocation11 + $0x344] sm:$0xf]
        %v2775 = vld [vmem:[#allocation11 + $0x348] sm:$0xff]
        %v2776 = vld [vmem:[#allocation11 + $0x350] sm:$0xff]
        %v2777 = vld [vmem:[#allocation11 + $0x358] sm:$0xf]
        %v2778 = vld [vmem:[#allocation11 + $0x35c] sm:$0xff]
        %v2779 = vld [vmem:[#allocation11 + $0x364] sm:$0xff]
        %v2780 = vld [vmem:[#allocation11 + $0x36c] sm:$0xf]
        %v2781 = vld [vmem:[#allocation11 + $0x370] sm:$0xff]
        %v2782 = vld [vmem:[#allocation11 + $0x378] sm:$0xff]
        %v2783 = vld [vmem:[#allocation11 + $0x380] sm:$0xf]
        %v2784 = vld [vmem:[#allocation11 + $0x384] sm:$0xff]
        %v2785 = vld [vmem:[#allocation11 + $0x38c] sm:$0xff]
        %v2786 = vld [vmem:[#allocation11 + $0x394] sm:$0xf]
        %v2787 = vld [vmem:[#allocation11 + $0x398] sm:$0xff]
        %v2788 = vld [vmem:[#allocation11 + $0x3a0] sm:$0xff]
        %v2789 = vld [vmem:[#allocation11 + $0x3a8] sm:$0xf]
        %v2790 = vld [vmem:[#allocation11 + $0x3ac] sm:$0xff]
        %v2791 = vld [vmem:[#allocation11 + $0x3b4] sm:$0xff]
        %v2792 = vld [vmem:[#allocation11 + $0x3bc] sm:$0xf]
        %v2793 = vld [vmem:[#allocation11 + $0x3c0] sm:$0xff]
        %v2794 = vld [vmem:[#allocation11 + $0x3c8] sm:$0xff]
        %v2795 = vld [vmem:[#allocation11 + $0x3d0] sm:$0xf]
        %v2796 = vld [vmem:[#allocation11 + $0x3d4] sm:$0xff]
        %v2797 = vld [vmem:[#allocation11 + $0x3dc] sm:$0xff]
        %v2798 = vld [vmem:[#allocation11 + $0x3e4] sm:$0xf]
        %v2799 = vld [vmem:[#allocation11 + $0x3e8] sm:$0xff]
        %v2800 = vld [vmem:[#allocation11 + $0x3f0] sm:$0xff]
        %v2801 = vld [vmem:[#allocation11 + $0x3f8] sm:$0xf]
        %v2802 = vld [vmem:[#allocation11 + $0x3fc] sm:$0xff]
        %v2803 = vld [vmem:[#allocation11 + $0x404] sm:$0xff]
        %v2804 = vld [vmem:[#allocation11 + $0x40c] sm:$0xf]
        %v2805 = vld [vmem:[#allocation11 + $0x410] sm:$0xff]
        %v2806 = vld [vmem:[#allocation11 + $0x418] sm:$0xff]
        %v2807 = vld [vmem:[#allocation11 + $0x420] sm:$0xf]
        %v2808 = vld [vmem:[#allocation11 + $0x424] sm:$0xff]
        %v2809 = vld [vmem:[#allocation11 + $0x42c] sm:$0xff]
        %v2810 = vld [vmem:[#allocation11 + $0x434] sm:$0xf]
        %v2811 = vld [vmem:[#allocation11 + $0x438] sm:$0xff]
        %v2812 = vld [vmem:[#allocation11 + $0x440] sm:$0xff]
        %v2813 = vld [vmem:[#allocation11 + $0x448] sm:$0xf]
        %v2814 = vld [vmem:[#allocation11 + $0x44c] sm:$0xff]
        %v2815 = vld [vmem:[#allocation11 + $0x454] sm:$0xff]
        %v2816 = vld [vmem:[#allocation11 + $0x45c] sm:$0xf]
        %v2817 = vld [vmem:[#allocation11 + $0x460] sm:$0xff]
        %v2818 = vld [vmem:[#allocation11 + $0x468] sm:$0xff]
        %v2819 = vld [vmem:[#allocation11 + $0x470] sm:$0xf]
        %v2820 = vld [vmem:[#allocation11 + $0x474] sm:$0xff]
        %v2821 = vld [vmem:[#allocation11 + $0x47c] sm:$0xff]
        %v2822 = vld [vmem:[#allocation11 + $0x484] sm:$0xf]
        %v2823 = vld [vmem:[#allocation11 + $0x488] sm:$0xff]
        %v2824 = vld [vmem:[#allocation11 + $0x490] sm:$0xff]
        %v2825 = vld [vmem:[#allocation11 + $0x498] sm:$0xf]
        %v2826 = vld [vmem:[#allocation11 + $0x49c] sm:$0xff]
        %v2827 = vld [vmem:[#allocation11 + $0x4a4] sm:$0xff]
        %v2828 = vld [vmem:[#allocation11 + $0x4ac] sm:$0xf]
        %v2829 = vld [vmem:[#allocation11 + $0x4b0] sm:$0xff]
        %v2830 = vld [vmem:[#allocation11 + $0x4b8] sm:$0xff]
        %v2831 = vld [vmem:[#allocation11 + $0x4c0] sm:$0xf]
        %v2832 = vld [vmem:[#allocation11 + $0x4c4] sm:$0xff]
        %v2833 = vld [vmem:[#allocation11 + $0x4cc] sm:$0xff]
        %v2834 = vld [vmem:[#allocation11 + $0x4d4] sm:$0xf]
        %v2835 = vld [vmem:[#allocation11 + $0x4d8] sm:$0xff]
        %v2836 = vld [vmem:[#allocation11 + $0x4e0] sm:$0xff]
        %v2837 = vld [vmem:[#allocation11 + $0x4e8] sm:$0xf]
        %v2838 = vld [vmem:[#allocation11 + $0x4ec] sm:$0xff]
        %v2839 = vld [vmem:[#allocation11 + $0x4f4] sm:$0xff]
        %v2840 = vld [vmem:[#allocation11 + $0x4fc] sm:$0xf]
        %v2937 = vunpack.c.l.b16 %v2745
        %v2938 = vunpack.c.h.b16 %v2745
        %v2939 = vunpack.c.l.b16 %v2746
        %v2940 = vunpack.c.h.b16 %v2746
        %v2941 = vunpack.c.l.b16 %v2747
        %v2942 = vunpack.c.l.b16 %v2748
        %v2943 = vunpack.c.h.b16 %v2748
        %v2944 = vunpack.c.l.b16 %v2749
        %v2945 = vunpack.c.h.b16 %v2749
        %v2946 = vunpack.c.l.b16 %v2750
        %v2947 = vunpack.c.l.b16 %v2751
        %v2948 = vunpack.c.h.b16 %v2751
        %v2949 = vunpack.c.l.b16 %v2752
        %v2950 = vunpack.c.h.b16 %v2752
        %v2951 = vunpack.c.l.b16 %v2753
        %v2952 = vunpack.c.l.b16 %v2754
        %v2953 = vunpack.c.h.b16 %v2754
        %v2954 = vunpack.c.l.b16 %v2755
        %v2955 = vunpack.c.h.b16 %v2755
        %v2956 = vunpack.c.l.b16 %v2756
        %v2957 = vunpack.c.l.b16 %v2757
        %v2958 = vunpack.c.h.b16 %v2757
        %v2959 = vunpack.c.l.b16 %v2758
        %v2960 = vunpack.c.h.b16 %v2758
        %v2961 = vunpack.c.l.b16 %v2759
        %v2962 = vunpack.c.l.b16 %v2760
        %v2963 = vunpack.c.h.b16 %v2760
        %v2964 = vunpack.c.l.b16 %v2761
        %v2965 = vunpack.c.h.b16 %v2761
        %v2966 = vunpack.c.l.b16 %v2762
        %v2967 = vunpack.c.l.b16 %v2763
        %v2968 = vunpack.c.h.b16 %v2763
        %v2969 = vunpack.c.l.b16 %v2764
        %v2970 = vunpack.c.h.b16 %v2764
        %v2971 = vunpack.c.l.b16 %v2765
        %v2972 = vunpack.c.l.b16 %v2766
        %v2973 = vunpack.c.h.b16 %v2766
        %v2974 = vunpack.c.l.b16 %v2767
        %v2975 = vunpack.c.h.b16 %v2767
        %v2976 = vunpack.c.l.b16 %v2768
        %v2977 = vunpack.c.l.b16 %v2769
        %v2978 = vunpack.c.h.b16 %v2769
        %v2979 = vunpack.c.l.b16 %v2770
        %v2980 = vunpack.c.h.b16 %v2770
        %v2981 = vunpack.c.l.b16 %v2771
        %v2982 = vunpack.c.l.b16 %v2772
        %v2983 = vunpack.c.h.b16 %v2772
        %v2984 = vunpack.c.l.b16 %v2773
        %v2985 = vunpack.c.h.b16 %v2773
        %v2986 = vunpack.c.l.b16 %v2774
        %v2987 = vunpack.c.l.b16 %v2775
        %v2988 = vunpack.c.h.b16 %v2775
        %v2989 = vunpack.c.l.b16 %v2776
        %v2990 = vunpack.c.h.b16 %v2776
        %v2991 = vunpack.c.l.b16 %v2777
        %v2992 = vunpack.c.l.b16 %v2778
        %v2993 = vunpack.c.h.b16 %v2778
        %v2994 = vunpack.c.l.b16 %v2779
        %v2995 = vunpack.c.h.b16 %v2779
        %v2996 = vunpack.c.l.b16 %v2780
        %v2997 = vunpack.c.l.b16 %v2781
        %v2998 = vunpack.c.h.b16 %v2781
        %v2999 = vunpack.c.l.b16 %v2782
        %v3000 = vunpack.c.h.b16 %v2782
        %v3001 = vunpack.c.l.b16 %v2783
        %v3002 = vunpack.c.l.b16 %v2784
        %v3003 = vunpack.c.h.b16 %v2784
        %v3004 = vunpack.c.l.b16 %v2785
        %v3005 = vunpack.c.h.b16 %v2785
        %v3006 = vunpack.c.l.b16 %v2786
        %v3007 = vunpack.c.l.b16 %v2787
        %v3008 = vunpack.c.h.b16 %v2787
        %v3009 = vunpack.c.l.b16 %v2788
        %v3010 = vunpack.c.h.b16 %v2788
        %v3011 = vunpack.c.l.b16 %v2789
        %v3012 = vunpack.c.l.b16 %v2790
        %v3013 = vunpack.c.h.b16 %v2790
        %v3014 = vunpack.c.l.b16 %v2791
        %v3015 = vunpack.c.h.b16 %v2791
        %v3016 = vunpack.c.l.b16 %v2792
        %v3017 = vunpack.c.l.b16 %v2793
        %v3018 = vunpack.c.h.b16 %v2793
        %v3019 = vunpack.c.l.b16 %v2794
        %v3020 = vunpack.c.h.b16 %v2794
        %v3021 = vunpack.c.l.b16 %v2795
        %v3022 = vunpack.c.l.b16 %v2796
        %v3023 = vunpack.c.h.b16 %v2796
        %v3024 = vunpack.c.l.b16 %v2797
        %v3025 = vunpack.c.h.b16 %v2797
        %v3026 = vunpack.c.l.b16 %v2798
        %v3027 = vunpack.c.l.b16 %v2799
        %v3028 = vunpack.c.h.b16 %v2799
        %v3029 = vunpack.c.l.b16 %v2800
        %v3030 = vunpack.c.h.b16 %v2800
        %v3031 = vunpack.c.l.b16 %v2801
        %v3032 = vunpack.c.l.b16 %v2802
        %v3033 = vunpack.c.h.b16 %v2802
        %v3034 = vunpack.c.l.b16 %v2803
        %v3035 = vunpack.c.h.b16 %v2803
        %v3036 = vunpack.c.l.b16 %v2804
        %v3037 = vunpack.c.l.b16 %v2805
        %v3038 = vunpack.c.h.b16 %v2805
        %v3039 = vunpack.c.l.b16 %v2806
        %v3040 = vunpack.c.h.b16 %v2806
        %v3041 = vunpack.c.l.b16 %v2807
        %v3042 = vunpack.c.l.b16 %v2808
        %v3043 = vunpack.c.h.b16 %v2808
        %v3044 = vunpack.c.l.b16 %v2809
        %v3045 = vunpack.c.h.b16 %v2809
        %v3046 = vunpack.c.l.b16 %v2810
        %v3047 = vunpack.c.l.b16 %v2811
        %v3048 = vunpack.c.h.b16 %v2811
        %v3049 = vunpack.c.l.b16 %v2812
        %v3050 = vunpack.c.h.b16 %v2812
        %v3051 = vunpack.c.l.b16 %v2813
        %v3052 = vunpack.c.l.b16 %v2814
        %v3053 = vunpack.c.h.b16 %v2814
        %v3054 = vunpack.c.l.b16 %v2815
        %v3055 = vunpack.c.h.b16 %v2815
        %v3056 = vunpack.c.l.b16 %v2816
        %v3057 = vunpack.c.l.b16 %v2817
        %v3058 = vunpack.c.h.b16 %v2817
        %v3059 = vunpack.c.l.b16 %v2818
        %v3060 = vunpack.c.h.b16 %v2818
        %v3061 = vunpack.c.l.b16 %v2819
        %v3062 = vunpack.c.l.b16 %v2820
        %v3063 = vunpack.c.h.b16 %v2820
        %v3064 = vunpack.c.l.b16 %v2821
        %v3065 = vunpack.c.h.b16 %v2821
        %v3066 = vunpack.c.l.b16 %v2822
        %v3067 = vunpack.c.l.b16 %v2823
        %v3068 = vunpack.c.h.b16 %v2823
        %v3069 = vunpack.c.l.b16 %v2824
        %v3070 = vunpack.c.h.b16 %v2824
        %v3071 = vunpack.c.l.b16 %v2825
        %v3072 = vunpack.c.l.b16 %v2826
        %v3073 = vunpack.c.h.b16 %v2826
        %v3074 = vunpack.c.l.b16 %v2827
        %v3075 = vunpack.c.h.b16 %v2827
        %v3076 = vunpack.c.l.b16 %v2828
        %v3077 = vunpack.c.l.b16 %v2829
        %v3078 = vunpack.c.h.b16 %v2829
        %v3079 = vunpack.c.l.b16 %v2830
        %v3080 = vunpack.c.h.b16 %v2830
        %v3081 = vunpack.c.l.b16 %v2831
        %v3082 = vunpack.c.l.b16 %v2832
        %v3083 = vunpack.c.h.b16 %v2832
        %v3084 = vunpack.c.l.b16 %v2833
        %v3085 = vunpack.c.h.b16 %v2833
        %v3086 = vunpack.c.l.b16 %v2834
        %v3087 = vunpack.c.l.b16 %v2835
        %v3088 = vunpack.c.h.b16 %v2835
        %v3089 = vunpack.c.l.b16 %v2836
        %v3090 = vunpack.c.h.b16 %v2836
        %v3091 = vunpack.c.l.b16 %v2837
        %v3092 = vunpack.c.l.b16 %v2838
        %v3093 = vunpack.c.h.b16 %v2838
        %v3094 = vunpack.c.l.b16 %v2839
        %v3095 = vunpack.c.h.b16 %v2839
        %v3096 = vunpack.c.l.b16 %v2840
        %v3097 = vpack.c.b16 %v2942, %v2937
        %v3098 = vpack.c.b16 %v2943, %v2938
        %v3099 = vpack.c.b16 %v2944, %v2939
        %v3100 = vpack.c.b16 %v2945, %v2940
        %v3101 = vpack.c.b16 %v2946, %v2941
        %v3102 = vpack.c.b16 %v2952, %v2947
        %v3103 = vpack.c.b16 %v2953, %v2948
        %v3104 = vpack.c.b16 %v2954, %v2949
        %v3105 = vpack.c.b16 %v2955, %v2950
        %v3106 = vpack.c.b16 %v2956, %v2951
        %v3107 = vpack.c.b16 %v2962, %v2957
        %v3108 = vpack.c.b16 %v2963, %v2958
        %v3109 = vpack.c.b16 %v2964, %v2959
        %v3110 = vpack.c.b16 %v2965, %v2960
        %v3111 = vpack.c.b16 %v2966, %v2961
        %v3112 = vpack.c.b16 %v2972, %v2967
        %v3113 = vpack.c.b16 %v2973, %v2968
        %v3114 = vpack.c.b16 %v2974, %v2969
        %v3115 = vpack.c.b16 %v2975, %v2970
        %v3116 = vpack.c.b16 %v2976, %v2971
        %v3117 = vpack.c.b16 %v2982, %v2977
        %v3118 = vpack.c.b16 %v2983, %v2978
        %v3119 = vpack.c.b16 %v2984, %v2979
        %v3120 = vpack.c.b16 %v2985, %v2980
        %v3121 = vpack.c.b16 %v2986, %v2981
        %v3122 = vpack.c.b16 %v2992, %v2987
        %v3123 = vpack.c.b16 %v2993, %v2988
        %v3124 = vpack.c.b16 %v2994, %v2989
        %v3125 = vpack.c.b16 %v2995, %v2990
        %v3126 = vpack.c.b16 %v2996, %v2991
        %v3127 = vpack.c.b16 %v3002, %v2997
        %v3128 = vpack.c.b16 %v3003, %v2998
        %v3129 = vpack.c.b16 %v3004, %v2999
        %v3130 = vpack.c.b16 %v3005, %v3000
        %v3131 = vpack.c.b16 %v3006, %v3001
        %v3132 = vpack.c.b16 %v3012, %v3007
        %v3133 = vpack.c.b16 %v3013, %v3008
        %v3134 = vpack.c.b16 %v3014, %v3009
        %v3135 = vpack.c.b16 %v3015, %v3010
        %v3136 = vpack.c.b16 %v3016, %v3011
        %v3137 = vpack.c.b16 %v3022, %v3017
        %v3138 = vpack.c.b16 %v3023, %v3018
        %v3139 = vpack.c.b16 %v3024, %v3019
        %v3140 = vpack.c.b16 %v3025, %v3020
        %v3141 = vpack.c.b16 %v3026, %v3021
        %v3142 = vpack.c.b16 %v3032, %v3027
        %v3143 = vpack.c.b16 %v3033, %v3028
        %v3144 = vpack.c.b16 %v3034, %v3029
        %v3145 = vpack.c.b16 %v3035, %v3030
        %v3146 = vpack.c.b16 %v3036, %v3031
        %v3147 = vpack.c.b16 %v3042, %v3037
        %v3148 = vpack.c.b16 %v3043, %v3038
        %v3149 = vpack.c.b16 %v3044, %v3039
        %v3150 = vpack.c.b16 %v3045, %v3040
        %v3151 = vpack.c.b16 %v3046, %v3041
        %v3152 = vpack.c.b16 %v3052, %v3047
        %v3153 = vpack.c.b16 %v3053, %v3048
        %v3154 = vpack.c.b16 %v3054, %v3049
        %v3155 = vpack.c.b16 %v3055, %v3050
        %v3156 = vpack.c.b16 %v3056, %v3051
        %v3157 = vpack.c.b16 %v3062, %v3057
        %v3158 = vpack.c.b16 %v3063, %v3058
        %v3159 = vpack.c.b16 %v3064, %v3059
        %v3160 = vpack.c.b16 %v3065, %v3060
        %v3161 = vpack.c.b16 %v3066, %v3061
        %v3162 = vpack.c.b16 %v3072, %v3067
        %v3163 = vpack.c.b16 %v3073, %v3068
        %v3164 = vpack.c.b16 %v3074, %v3069
        %v3165 = vpack.c.b16 %v3075, %v3070
        %v3166 = vpack.c.b16 %v3076, %v3071
        %v3167 = vpack.c.b16 %v3082, %v3077
        %v3168 = vpack.c.b16 %v3083, %v3078
        %v3169 = vpack.c.b16 %v3084, %v3079
        %v3170 = vpack.c.b16 %v3085, %v3080
        %v3171 = vpack.c.b16 %v3086, %v3081
        %v3172 = vpack.c.b16 %v3092, %v3087
        %v3173 = vpack.c.b16 %v3093, %v3088
        %v3174 = vpack.c.b16 %v3094, %v3089
        %v3175 = vpack.c.b16 %v3095, %v3090
        %v3176 = vpack.c.b16 %v3096, %v3091
        %3257 = vmatprep.subr.bf16.mxu0 %v3098
        %3258 = vmatpush1.bf16.msra.mxu0 %v3097
        %3259 = vmatprep.subr.bf16.mxu0 %v3103
        %3260 = vmatpush1.bf16.msra.mxu0 %v3102
        %3261 = vmatprep.subr.bf16.mxu0 %v3108
        %3262 = vmatpush1.bf16.msra.mxu0 %v3107
        %3263 = vmatprep.subr.bf16.mxu0 %v3113
        %3264 = vmatpush1.bf16.msra.mxu0 %v3112
        %3265 = vmatprep.subr.bf16.mxu0 %v3118
        %3266 = vmatpush1.bf16.msra.mxu0 %v3117
        %3267 = vmatprep.subr.bf16.mxu0 %v3123
        %3268 = vmatpush1.bf16.msra.mxu0 %v3122
        %3269 = vmatprep.subr.bf16.mxu0 %v3128
        %3270 = vmatpush1.bf16.msra.mxu0 %v3127
        %3271 = vmatprep.subr.bf16.mxu0 %v3133
        %3272 = vmatpush1.bf16.msra.mxu0 %v3132
        %3273 = vmatprep.subr.bf16.mxu0 %v3138
        %3274 = vmatpush1.bf16.msra.mxu0 %v3137
        %3275 = vmatprep.subr.bf16.mxu0 %v3143
        %3276 = vmatpush1.bf16.msra.mxu0 %v3142
        %3277 = vmatprep.subr.bf16.mxu0 %v3148
        %3278 = vmatpush1.bf16.msra.mxu0 %v3147
        %3279 = vmatprep.subr.bf16.mxu0 %v3153
        %3280 = vmatpush1.bf16.msra.mxu0 %v3152
        %3281 = vmatprep.subr.bf16.mxu0 %v3158
        %3282 = vmatpush1.bf16.msra.mxu0 %v3157
        %3283 = vmatprep.subr.bf16.mxu0 %v3163
        %3284 = vmatpush1.bf16.msra.mxu0 %v3162
        %3285 = vmatprep.subr.bf16.mxu0 %v3168
        %3286 = vmatpush1.bf16.msra.mxu0 %v3167
        %3287 = vmatprep.subr.bf16.mxu0 %v3173
        %3288 = vmatpush1.bf16.msra.mxu0 %v3172
        %3289 = vmatprep.mubr.bf16.mxu0 %v2589
        %3290 = vmatmul.mubr.bf16.gmra.mrb[0].mxu0 %v2588
        %v3291 = vpop.f32.mrb[0].mxu0
        %v3292 = vadd.f32 0.0, %v3291
        %v3293 = vpop.f32.mrb[0].mxu0
        %v3294 = vadd.f32 0.0, %v3293
        %v3295 = vpop.f32.mrb[0].mxu0
        %v3296 = vadd.f32 0.0, %v3295
        %v3297 = vpop.f32.mrb[0].mxu0
        %v3298 = vadd.f32 0.0, %v3297
        %3299 = vmatprep.mubr.bf16.mxu0 %v2591
        %3300 = vmatmul.mubr.bf16.gmra.mrb[0].mxu0 %v2590
        %v3301 = vpop.f32.mrb[0].mxu0
        %v3302 = vadd.f32 0.0, %v3301
        %v3303 = vpop.f32.mrb[0].mxu0
        %v3304 = vadd.f32 0.0, %v3303
        %v3305 = vpop.f32.mrb[0].mxu0
        %v3306 = vadd.f32 0.0, %v3305
        %v3307 = vpop.f32.mrb[0].mxu0
        %v3308 = vadd.f32 0.0, %v3307
        %3309 = vdwg.mxu0
        %3310 = vmatprep.subr.bf16.mxu0 %v3100
        %3311 = vmatpush1.bf16.msra.mxu0 %v3099
        %3312 = vmatprep.subr.bf16.mxu0 %v3105
        %3313 = vmatpush1.bf16.msra.mxu0 %v3104
        %3314 = vmatprep.subr.bf16.mxu0 %v3110
        %3315 = vmatpush1.bf16.msra.mxu0 %v3109
        %3316 = vmatprep.subr.bf16.mxu0 %v3115
        %3317 = vmatpush1.bf16.msra.mxu0 %v3114
        %3318 = vmatprep.subr.bf16.mxu0 %v3120
        %3319 = vmatpush1.bf16.msra.mxu0 %v3119
        %3320 = vmatprep.subr.bf16.mxu0 %v3125
        %3321 = vmatpush1.bf16.msra.mxu0 %v3124
        %3322 = vmatprep.subr.bf16.mxu0 %v3130
        %3323 = vmatpush1.bf16.msra.mxu0 %v3129
        %3324 = vmatprep.subr.bf16.mxu0 %v3135
        %3325 = vmatpush1.bf16.msra.mxu0 %v3134
        %3326 = vmatprep.subr.bf16.mxu0 %v3140
        %3327 = vmatpush1.bf16.msra.mxu0 %v3139
        %3328 = vmatprep.subr.bf16.mxu0 %v3145
        %3329 = vmatpush1.bf16.msra.mxu0 %v3144
        %3330 = vmatprep.subr.bf16.mxu0 %v3150
        %3331 = vmatpush1.bf16.msra.mxu0 %v3149
        %3332 = vmatprep.subr.bf16.mxu0 %v3155
        %3333 = vmatpush1.bf16.msra.mxu0 %v3154
        %3334 = vmatprep.subr.bf16.mxu0 %v3160
        %3335 = vmatpush1.bf16.msra.mxu0 %v3159
        %3336 = vmatprep.subr.bf16.mxu0 %v3165
        %3337 = vmatpush1.bf16.msra.mxu0 %v3164
        %3338 = vmatprep.subr.bf16.mxu0 %v3170
        %3339 = vmatpush1.bf16.msra.mxu0 %v3169
        %3340 = vmatprep.subr.bf16.mxu0 %v3175
        %3341 = vmatpush1.bf16.msra.mxu0 %v3174
        %3342 = vmatprep.mubr.bf16.mxu0 %v2589
        %3343 = vmatmul.mubr.bf16.gmra.mrb[0].mxu0 %v2588
        %v3344 = vpop.f32.mrb[0].mxu0
        %v3345 = vadd.f32 0.0, %v3344
        %v3346 = vpop.f32.mrb[0].mxu0
        %v3347 = vadd.f32 0.0, %v3346
        %v3348 = vpop.f32.mrb[0].mxu0
        %v3349 = vadd.f32 0.0, %v3348
        %v3350 = vpop.f32.mrb[0].mxu0
        %v3351 = vadd.f32 0.0, %v3350
        %3352 = vmatprep.mubr.bf16.mxu0 %v2591
        %3353 = vmatmul.mubr.bf16.gmra.mrb[0].mxu0 %v2590
        %v3354 = vpop.f32.mrb[0].mxu0
        %v3355 = vadd.f32 0.0, %v3354
        %v3356 = vpop.f32.mrb[0].mxu0
        %v3357 = vadd.f32 0.0, %v3356
        %v3358 = vpop.f32.mrb[0].mxu0
        %v3359 = vadd.f32 0.0, %v3358
        %v3360 = vpop.f32.mrb[0].mxu0
        %v3361 = vadd.f32 0.0, %v3360
        %3362 = vdwg.mxu0
        %3363 = vmatprep.subr.bf16.mxu0 0
        %3364 = vmatpush1.bf16.msra.mxu0 %v3101
        %3365 = vmatprep.subr.bf16.mxu0 0
        %3366 = vmatpush1.bf16.msra.mxu0 %v3106
        %3367 = vmatprep.subr.bf16.mxu0 0
        %3368 = vmatpush1.bf16.msra.mxu0 %v3111
        %3369 = vmatprep.subr.bf16.mxu0 0
        %3370 = vmatpush1.bf16.msra.mxu0 %v3116
        %3371 = vmatprep.subr.bf16.mxu0 0
        %3372 = vmatpush1.bf16.msra.mxu0 %v3121
        %3373 = vmatprep.subr.bf16.mxu0 0
        %3374 = vmatpush1.bf16.msra.mxu0 %v3126
        %3375 = vmatprep.subr.bf16.mxu0 0
        %3376 = vmatpush1.bf16.msra.mxu0 %v3131
        %3377 = vmatprep.subr.bf16.mxu0 0
        %3378 = vmatpush1.bf16.msra.mxu0 %v3136
        %3379 = vmatprep.subr.bf16.mxu0 0
        %3380 = vmatpush1.bf16.msra.mxu0 %v3141
        %3381 = vmatprep.subr.bf16.mxu0 0
        %3382 = vmatpush1.bf16.msra.mxu0 %v3146
        %3383 = vmatprep.subr.bf16.mxu0 0
        %3384 = vmatpush1.bf16.msra.mxu0 %v3151
        %3385 = vmatprep.subr.bf16.mxu0 0
        %3386 = vmatpush1.bf16.msra.mxu0 %v3156
        %3387 = vmatprep.subr.bf16.mxu0 0
        %3388 = vmatpush1.bf16.msra.mxu0 %v3161
        %3389 = vmatprep.subr.bf16.mxu0 0
        %3390 = vmatpush1.bf16.msra.mxu0 %v3166
        %3391 = vmatprep.subr.bf16.mxu0 0
        %3392 = vmatpush1.bf16.msra.mxu0 %v3171
        %3393 = vmatprep.subr.bf16.mxu0 0
        %3394 = vmatpush1.bf16.msra.mxu0 %v3176
        %3395 = vmatprep.mubr.bf16.mxu0 %v2589
        %3396 = vmatmul.mubr.bf16.gmra.mrb[0].mxu0 %v2588
        %v3397 = vpop.f32.mrb[0].mxu0
        %v3398 = vadd.f32 0.0, %v3397
        %v3399 = vpop.f32.mrb[0].mxu0
        %v3400 = vpop.f32.mrb[0].mxu0
        %v3401 = vadd.f32 0.0, %v3400
        %v3402 = vpop.f32.mrb[0].mxu0
        %3403 = vmatprep.mubr.bf16.mxu0 %v2591
        %3404 = vmatmul.mubr.bf16.gmra.mrb[0].mxu0 %v2590
        %v3405 = vpop.f32.mrb[0].mxu0
        %v3406 = vadd.f32 0.0, %v3405
        %v3407 = vpop.f32.mrb[0].mxu0
        %v3408 = vpop.f32.mrb[0].mxu0
        %v3409 = vadd.f32 0.0, %v3408
        %v3410 = vpop.f32.mrb[0].mxu0
        %3411 = vdwg.mxu0
        %v3508 = vunpack.c.l.b16 %v2649
        %v3509 = vunpack.c.h.b16 %v2649
        %v3510 = vunpack.c.l.b16 %v2650
        %v3511 = vunpack.c.h.b16 %v2650
        %v3512 = vunpack.c.l.b16 %v2651
        %v3513 = vunpack.c.l.b16 %v2652
        %v3514 = vunpack.c.h.b16 %v2652
        %v3515 = vunpack.c.l.b16 %v2653
        %v3516 = vunpack.c.h.b16 %v2653
        %v3517 = vunpack.c.l.b16 %v2654
        %v3518 = vunpack.c.l.b16 %v2655
        %v3519 = vunpack.c.h.b16 %v2655
        %v3520 = vunpack.c.l.b16 %v2656
        %v3521 = vunpack.c.h.b16 %v2656
        %v3522 = vunpack.c.l.b16 %v2657
        %v3523 = vunpack.c.l.b16 %v2658
        %v3524 = vunpack.c.h.b16 %v2658
        %v3525 = vunpack.c.l.b16 %v2659
        %v3526 = vunpack.c.h.b16 %v2659
        %v3527 = vunpack.c.l.b16 %v2660
        %v3528 = vunpack.c.l.b16 %v2661
        %v3529 = vunpack.c.h.b16 %v2661
        %v3530 = vunpack.c.l.b16 %v2662
        %v3531 = vunpack.c.h.b16 %v2662
        %v3532 = vunpack.c.l.b16 %v2663
        %v3533 = vunpack.c.l.b16 %v2664
        %v3534 = vunpack.c.h.b16 %v2664
        %v3535 = vunpack.c.l.b16 %v2665
        %v3536 = vunpack.c.h.b16 %v2665
        %v3537 = vunpack.c.l.b16 %v2666
        %v3538 = vunpack.c.l.b16 %v2667
        %v3539 = vunpack.c.h.b16 %v2667
        %v3540 = vunpack.c.l.b16 %v2668
        %v3541 = vunpack.c.h.b16 %v2668
        %v3542 = vunpack.c.l.b16 %v2669
        %v3543 = vunpack.c.l.b16 %v2670
        %v3544 = vunpack.c.h.b16 %v2670
        %v3545 = vunpack.c.l.b16 %v2671
        %v3546 = vunpack.c.h.b16 %v2671
        %v3547 = vunpack.c.l.b16 %v2672
        %v3548 = vunpack.c.l.b16 %v2673
        %v3549 = vunpack.c.h.b16 %v2673
        %v3550 = vunpack.c.l.b16 %v2674
        %v3551 = vunpack.c.h.b16 %v2674
        %v3552 = vunpack.c.l.b16 %v2675
        %v3553 = vunpack.c.l.b16 %v2676
        %v3554 = vunpack.c.h.b16 %v2676
        %v3555 = vunpack.c.l.b16 %v2677
        %v3556 = vunpack.c.h.b16 %v2677
        %v3557 = vunpack.c.l.b16 %v2678
        %v3558 = vunpack.c.l.b16 %v2679
        %v3559 = vunpack.c.h.b16 %v2679
        %v3560 = vunpack.c.l.b16 %v2680
        %v3561 = vunpack.c.h.b16 %v2680
        %v3562 = vunpack.c.l.b16 %v2681
        %v3563 = vunpack.c.l.b16 %v2682
        %v3564 = vunpack.c.h.b16 %v2682
        %v3565 = vunpack.c.l.b16 %v2683
        %v3566 = vunpack.c.h.b16 %v2683
        %v3567 = vunpack.c.l.b16 %v2684
        %v3568 = vunpack.c.l.b16 %v2685
        %v3569 = vunpack.c.h.b16 %v2685
        %v3570 = vunpack.c.l.b16 %v2686
        %v3571 = vunpack.c.h.b16 %v2686
        %v3572 = vunpack.c.l.b16 %v2687
        %v3573 = vunpack.c.l.b16 %v2688
        %v3574 = vunpack.c.h.b16 %v2688
        %v3575 = vunpack.c.l.b16 %v2689
        %v3576 = vunpack.c.h.b16 %v2689
        %v3577 = vunpack.c.l.b16 %v2690
        %v3578 = vunpack.c.l.b16 %v2691
        %v3579 = vunpack.c.h.b16 %v2691
        %v3580 = vunpack.c.l.b16 %v2692
        %v3581 = vunpack.c.h.b16 %v2692
        %v3582 = vunpack.c.l.b16 %v2693
        %v3583 = vunpack.c.l.b16 %v2694
        %v3584 = vunpack.c.h.b16 %v2694
        %v3585 = vunpack.c.l.b16 %v2695
        %v3586 = vunpack.c.h.b16 %v2695
        %v3587 = vunpack.c.l.b16 %v2696
        %v3588 = vunpack.c.l.b16 %v2697
        %v3589 = vunpack.c.h.b16 %v2697
        %v3590 = vunpack.c.l.b16 %v2698
        %v3591 = vunpack.c.h.b16 %v2698
        %v3592 = vunpack.c.l.b16 %v2699
        %v3593 = vunpack.c.l.b16 %v2700
        %v3594 = vunpack.c.h.b16 %v2700
        %v3595 = vunpack.c.l.b16 %v2701
        %v3596 = vunpack.c.h.b16 %v2701
        %v3597 = vunpack.c.l.b16 %v2702
        %v3598 = vunpack.c.l.b16 %v2703
        %v3599 = vunpack.c.h.b16 %v2703
        %v3600 = vunpack.c.l.b16 %v2704
        %v3601 = vunpack.c.h.b16 %v2704
        %v3602 = vunpack.c.l.b16 %v2705
        %v3603 = vunpack.c.l.b16 %v2706
        %v3604 = vunpack.c.h.b16 %v2706
        %v3605 = vunpack.c.l.b16 %v2707
        %v3606 = vunpack.c.h.b16 %v2707
        %v3607 = vunpack.c.l.b16 %v2708
        %v3608 = vunpack.c.l.b16 %v2709
        %v3609 = vunpack.c.h.b16 %v2709
        %v3610 = vunpack.c.l.b16 %v2710
        %v3611 = vunpack.c.h.b16 %v2710
        %v3612 = vunpack.c.l.b16 %v2711
        %v3613 = vunpack.c.l.b16 %v2712
        %v3614 = vunpack.c.h.b16 %v2712
        %v3615 = vunpack.c.l.b16 %v2713
        %v3616 = vunpack.c.h.b16 %v2713
        %v3617 = vunpack.c.l.b16 %v2714
        %v3618 = vunpack.c.l.b16 %v2715
        %v3619 = vunpack.c.h.b16 %v2715
        %v3620 = vunpack.c.l.b16 %v2716
        %v3621 = vunpack.c.h.b16 %v2716
        %v3622 = vunpack.c.l.b16 %v2717
        %v3623 = vunpack.c.l.b16 %v2718
        %v3624 = vunpack.c.h.b16 %v2718
        %v3625 = vunpack.c.l.b16 %v2719
        %v3626 = vunpack.c.h.b16 %v2719
        %v3627 = vunpack.c.l.b16 %v2720
        %v3628 = vunpack.c.l.b16 %v2721
        %v3629 = vunpack.c.h.b16 %v2721
        %v3630 = vunpack.c.l.b16 %v2722
        %v3631 = vunpack.c.h.b16 %v2722
        %v3632 = vunpack.c.l.b16 %v2723
        %v3633 = vunpack.c.l.b16 %v2724
        %v3634 = vunpack.c.h.b16 %v2724
        %v3635 = vunpack.c.l.b16 %v2725
        %v3636 = vunpack.c.h.b16 %v2725
        %v3637 = vunpack.c.l.b16 %v2726
        %v3638 = vunpack.c.l.b16 %v2727
        %v3639 = vunpack.c.h.b16 %v2727
        %v3640 = vunpack.c.l.b16 %v2728
        %v3641 = vunpack.c.h.b16 %v2728
        %v3642 = vunpack.c.l.b16 %v2729
        %v3643 = vunpack.c.l.b16 %v2730
        %v3644 = vunpack.c.h.b16 %v2730
        %v3645 = vunpack.c.l.b16 %v2731
        %v3646 = vunpack.c.h.b16 %v2731
        %v3647 = vunpack.c.l.b16 %v2732
        %v3648 = vunpack.c.l.b16 %v2733
        %v3649 = vunpack.c.h.b16 %v2733
        %v3650 = vunpack.c.l.b16 %v2734
        %v3651 = vunpack.c.h.b16 %v2734
        %v3652 = vunpack.c.l.b16 %v2735
        %v3653 = vunpack.c.l.b16 %v2736
        %v3654 = vunpack.c.h.b16 %v2736
        %v3655 = vunpack.c.l.b16 %v2737
        %v3656 = vunpack.c.h.b16 %v2737
        %v3657 = vunpack.c.l.b16 %v2738
        %v3658 = vunpack.c.l.b16 %v2739
        %v3659 = vunpack.c.h.b16 %v2739
        %v3660 = vunpack.c.l.b16 %v2740
        %v3661 = vunpack.c.h.b16 %v2740
        %v3662 = vunpack.c.l.b16 %v2741
        %v3663 = vunpack.c.l.b16 %v2742
        %v3664 = vunpack.c.h.b16 %v2742
        %v3665 = vunpack.c.l.b16 %v2743
        %v3666 = vunpack.c.h.b16 %v2743
        %v3667 = vunpack.c.l.b16 %v2744
        %v3668 = vpack.c.b16 %v3513, %v3508
        %v3669 = vpack.c.b16 %v3514, %v3509
        %v3670 = vpack.c.b16 %v3515, %v3510
        %v3671 = vpack.c.b16 %v3516, %v3511
        %v3672 = vpack.c.b16 %v3517, %v3512
        %v3673 = vpack.c.b16 %v3523, %v3518
        %v3674 = vpack.c.b16 %v3524, %v3519
        %v3675 = vpack.c.b16 %v3525, %v3520
        %v3676 = vpack.c.b16 %v3526, %v3521
        %v3677 = vpack.c.b16 %v3527, %v3522
        %v3678 = vpack.c.b16 %v3533, %v3528
        %v3679 = vpack.c.b16 %v3534, %v3529
        %v3680 = vpack.c.b16 %v3535, %v3530
        %v3681 = vpack.c.b16 %v3536, %v3531
        %v3682 = vpack.c.b16 %v3537, %v3532
        %v3683 = vpack.c.b16 %v3543, %v3538
        %v3684 = vpack.c.b16 %v3544, %v3539
        %v3685 = vpack.c.b16 %v3545, %v3540
        %v3686 = vpack.c.b16 %v3546, %v3541
        %v3687 = vpack.c.b16 %v3547, %v3542
        %v3688 = vpack.c.b16 %v3553, %v3548
        %v3689 = vpack.c.b16 %v3554, %v3549
        %v3690 = vpack.c.b16 %v3555, %v3550
        %v3691 = vpack.c.b16 %v3556, %v3551
        %v3692 = vpack.c.b16 %v3557, %v3552
        %v3693 = vpack.c.b16 %v3563, %v3558
        %v3694 = vpack.c.b16 %v3564, %v3559
        %v3695 = vpack.c.b16 %v3565, %v3560
        %v3696 = vpack.c.b16 %v3566, %v3561
        %v3697 = vpack.c.b16 %v3567, %v3562
        %v3698 = vpack.c.b16 %v3573, %v3568
        %v3699 = vpack.c.b16 %v3574, %v3569
        %v3700 = vpack.c.b16 %v3575, %v3570
        %v3701 = vpack.c.b16 %v3576, %v3571
        %v3702 = vpack.c.b16 %v3577, %v3572
        %v3703 = vpack.c.b16 %v3583, %v3578
        %v3704 = vpack.c.b16 %v3584, %v3579
        %v3705 = vpack.c.b16 %v3585, %v3580
        %v3706 = vpack.c.b16 %v3586, %v3581
        %v3707 = vpack.c.b16 %v3587, %v3582
        %v3708 = vpack.c.b16 %v3593, %v3588
        %v3709 = vpack.c.b16 %v3594, %v3589
        %v3710 = vpack.c.b16 %v3595, %v3590
        %v3711 = vpack.c.b16 %v3596, %v3591
        %v3712 = vpack.c.b16 %v3597, %v3592
        %v3713 = vpack.c.b16 %v3603, %v3598
        %v3714 = vpack.c.b16 %v3604, %v3599
        %v3715 = vpack.c.b16 %v3605, %v3600
        %v3716 = vpack.c.b16 %v3606, %v3601
        %v3717 = vpack.c.b16 %v3607, %v3602
        %v3718 = vpack.c.b16 %v3613, %v3608
        %v3719 = vpack.c.b16 %v3614, %v3609
        %v3720 = vpack.c.b16 %v3615, %v3610
        %v3721 = vpack.c.b16 %v3616, %v3611
        %v3722 = vpack.c.b16 %v3617, %v3612
        %v3723 = vpack.c.b16 %v3623, %v3618
        %v3724 = vpack.c.b16 %v3624, %v3619
        %v3725 = vpack.c.b16 %v3625, %v3620
        %v3726 = vpack.c.b16 %v3626, %v3621
        %v3727 = vpack.c.b16 %v3627, %v3622
        %v3728 = vpack.c.b16 %v3633, %v3628
        %v3729 = vpack.c.b16 %v3634, %v3629
        %v3730 = vpack.c.b16 %v3635, %v3630
        %v3731 = vpack.c.b16 %v3636, %v3631
        %v3732 = vpack.c.b16 %v3637, %v3632
        %v3733 = vpack.c.b16 %v3643, %v3638
        %v3734 = vpack.c.b16 %v3644, %v3639
        %v3735 = vpack.c.b16 %v3645, %v3640
        %v3736 = vpack.c.b16 %v3646, %v3641
        %v3737 = vpack.c.b16 %v3647, %v3642
        %v3738 = vpack.c.b16 %v3653, %v3648
        %v3739 = vpack.c.b16 %v3654, %v3649
        %v3740 = vpack.c.b16 %v3655, %v3650
        %v3741 = vpack.c.b16 %v3656, %v3651
        %v3742 = vpack.c.b16 %v3657, %v3652
        %v3743 = vpack.c.b16 %v3663, %v3658
        %v3744 = vpack.c.b16 %v3664, %v3659
        %v3745 = vpack.c.b16 %v3665, %v3660
        %v3746 = vpack.c.b16 %v3666, %v3661
        %v3747 = vpack.c.b16 %v3667, %v3662
        %3828 = vmatprep.subr.bf16.mxu0 %v3669
        %3829 = vmatpush1.bf16.msra.mxu0 %v3668
        %3830 = vmatprep.subr.bf16.mxu0 %v3674
        %3831 = vmatpush1.bf16.msra.mxu0 %v3673
        %3832 = vmatprep.subr.bf16.mxu0 %v3679
        %3833 = vmatpush1.bf16.msra.mxu0 %v3678
        %3834 = vmatprep.subr.bf16.mxu0 %v3684
        %3835 = vmatpush1.bf16.msra.mxu0 %v3683
        %3836 = vmatprep.subr.bf16.mxu0 %v3689
        %3837 = vmatpush1.bf16.msra.mxu0 %v3688
        %3838 = vmatprep.subr.bf16.mxu0 %v3694
        %3839 = vmatpush1.bf16.msra.mxu0 %v3693
        %3840 = vmatprep.subr.bf16.mxu0 %v3699
        %3841 = vmatpush1.bf16.msra.mxu0 %v3698
        %3842 = vmatprep.subr.bf16.mxu0 %v3704
        %3843 = vmatpush1.bf16.msra.mxu0 %v3703
        %3844 = vmatprep.subr.bf16.mxu0 %v3709
        %3845 = vmatpush1.bf16.msra.mxu0 %v3708
        %3846 = vmatprep.subr.bf16.mxu0 %v3714
        %3847 = vmatpush1.bf16.msra.mxu0 %v3713
        %3848 = vmatprep.subr.bf16.mxu0 %v3719
        %3849 = vmatpush1.bf16.msra.mxu0 %v3718
        %3850 = vmatprep.subr.bf16.mxu0 %v3724
        %3851 = vmatpush1.bf16.msra.mxu0 %v3723
        %3852 = vmatprep.subr.bf16.mxu0 %v3729
        %3853 = vmatpush1.bf16.msra.mxu0 %v3728
        %3854 = vmatprep.subr.bf16.mxu0 %v3734
        %3855 = vmatpush1.bf16.msra.mxu0 %v3733
        %3856 = vmatprep.subr.bf16.mxu0 %v3739
        %3857 = vmatpush1.bf16.msra.mxu0 %v3738
        %3858 = vmatprep.subr.bf16.mxu0 %v3744
        %3859 = vmatpush1.bf16.msra.mxu0 %v3743
        %3860 = vmatprep.mubr.bf16.mxu0 %v2646
        %3861 = vmatmul.mubr.bf16.gmra.mrb[0].mxu0 %v2645
        %v3862 = vpop.f32.mrb[0].mxu0
        %v3863 = vadd.f32 %v3292, %v3862
        %v3864 = vpop.f32.mrb[0].mxu0
        %v3865 = vadd.f32 %v3294, %v3864
        %v3866 = vpop.f32.mrb[0].mxu0
        %v3867 = vadd.f32 %v3296, %v3866
        %v3868 = vpop.f32.mrb[0].mxu0
        %v3869 = vadd.f32 %v3298, %v3868
        %3870 = vmatprep.mubr.bf16.mxu0 %v2648
        %3871 = vmatmul.mubr.bf16.gmra.mrb[0].mxu0 %v2647
        %v3872 = vpop.f32.mrb[0].mxu0
        %v3873 = vadd.f32 %v3302, %v3872
        %v3874 = vpop.f32.mrb[0].mxu0
        %v3875 = vadd.f32 %v3304, %v3874
        %v3876 = vpop.f32.mrb[0].mxu0
        %v3877 = vadd.f32 %v3306, %v3876
        %v3878 = vpop.f32.mrb[0].mxu0
        %v3879 = vadd.f32 %v3308, %v3878
        %3880 = vdwg.mxu0
        %3881 = vmatprep.subr.bf16.mxu0 %v3671
        %3882 = vmatpush1.bf16.msra.mxu0 %v3670
        %3883 = vmatprep.subr.bf16.mxu0 %v3676
        %3884 = vmatpush1.bf16.msra.mxu0 %v3675
        %3885 = vmatprep.subr.bf16.mxu0 %v3681
        %3886 = vmatpush1.bf16.msra.mxu0 %v3680
        %3887 = vmatprep.subr.bf16.mxu0 %v3686
        %3888 = vmatpush1.bf16.msra.mxu0 %v3685
        %3889 = vmatprep.subr.bf16.mxu0 %v3691
        %3890 = vmatpush1.bf16.msra.mxu0 %v3690
        %3891 = vmatprep.subr.bf16.mxu0 %v3696
        %3892 = vmatpush1.bf16.msra.mxu0 %v3695
        %3893 = vmatprep.subr.bf16.mxu0 %v3701
        %3894 = vmatpush1.bf16.msra.mxu0 %v3700
        %3895 = vmatprep.subr.bf16.mxu0 %v3706
        %3896 = vmatpush1.bf16.msra.mxu0 %v3705
        %3897 = vmatprep.subr.bf16.mxu0 %v3711
        %3898 = vmatpush1.bf16.msra.mxu0 %v3710
        %3899 = vmatprep.subr.bf16.mxu0 %v3716
        %3900 = vmatpush1.bf16.msra.mxu0 %v3715
        %3901 = vmatprep.subr.bf16.mxu0 %v3721
        %3902 = vmatpush1.bf16.msra.mxu0 %v3720
        %3903 = vmatprep.subr.bf16.mxu0 %v3726
        %3904 = vmatpush1.bf16.msra.mxu0 %v3725
        %3905 = vmatprep.subr.bf16.mxu0 %v3731
        %3906 = vmatpush1.bf16.msra.mxu0 %v3730
        %3907 = vmatprep.subr.bf16.mxu0 %v3736
        %3908 = vmatpush1.bf16.msra.mxu0 %v3735
        %3909 = vmatprep.subr.bf16.mxu0 %v3741
        %3910 = vmatpush1.bf16.msra.mxu0 %v3740
        %3911 = vmatprep.subr.bf16.mxu0 %v3746
        %3912 = vmatpush1.bf16.msra.mxu0 %v3745
        %3913 = vmatprep.mubr.bf16.mxu0 %v2646
        %3914 = vmatmul.mubr.bf16.gmra.mrb[0].mxu0 %v2645
        %v3915 = vpop.f32.mrb[0].mxu0
        %v3916 = vadd.f32 %v3345, %v3915
        %v3917 = vpop.f32.mrb[0].mxu0
        %v3918 = vadd.f32 %v3347, %v3917
        %v3919 = vpop.f32.mrb[0].mxu0
        %v3920 = vadd.f32 %v3349, %v3919
        %v3921 = vpop.f32.mrb[0].mxu0
        %v3922 = vadd.f32 %v3351, %v3921
        %3923 = vmatprep.mubr.bf16.mxu0 %v2648
        %3924 = vmatmul.mubr.bf16.gmra.mrb[0].mxu0 %v2647
        %v3925 = vpop.f32.mrb[0].mxu0
        %v3926 = vadd.f32 %v3355, %v3925
        %v3927 = vpop.f32.mrb[0].mxu0
        %v3928 = vadd.f32 %v3357, %v3927
        %v3929 = vpop.f32.mrb[0].mxu0
        %v3930 = vadd.f32 %v3359, %v3929
        %v3931 = vpop.f32.mrb[0].mxu0
        %v3932 = vadd.f32 %v3361, %v3931
        %3933 = vdwg.mxu0
        %3934 = vmatprep.subr.bf16.mxu0 0
        %3935 = vmatpush1.bf16.msra.mxu0 %v3672
        %3936 = vmatprep.subr.bf16.mxu0 0
        %3937 = vmatpush1.bf16.msra.mxu0 %v3677
        %3938 = vmatprep.subr.bf16.mxu0 0
        %3939 = vmatpush1.bf16.msra.mxu0 %v3682
        %3940 = vmatprep.subr.bf16.mxu0 0
        %3941 = vmatpush1.bf16.msra.mxu0 %v3687
        %3942 = vmatprep.subr.bf16.mxu0 0
        %3943 = vmatpush1.bf16.msra.mxu0 %v3692
        %3944 = vmatprep.subr.bf16.mxu0 0
        %3945 = vmatpush1.bf16.msra.mxu0 %v3697
        %3946 = vmatprep.subr.bf16.mxu0 0
        %3947 = vmatpush1.bf16.msra.mxu0 %v3702
        %3948 = vmatprep.subr.bf16.mxu0 0
        %3949 = vmatpush1.bf16.msra.mxu0 %v3707
        %3950 = vmatprep.subr.bf16.mxu0 0
        %3951 = vmatpush1.bf16.msra.mxu0 %v3712
        %3952 = vmatprep.subr.bf16.mxu0 0
        %3953 = vmatpush1.bf16.msra.mxu0 %v3717
        %3954 = vmatprep.subr.bf16.mxu0 0
        %3955 = vmatpush1.bf16.msra.mxu0 %v3722
        %3956 = vmatprep.subr.bf16.mxu0 0
        %3957 = vmatpush1.bf16.msra.mxu0 %v3727
        %3958 = vmatprep.subr.bf16.mxu0 0
        %3959 = vmatpush1.bf16.msra.mxu0 %v3732
        %3960 = vmatprep.subr.bf16.mxu0 0
        %3961 = vmatpush1.bf16.msra.mxu0 %v3737
        %3962 = vmatprep.subr.bf16.mxu0 0
        %3963 = vmatpush1.bf16.msra.mxu0 %v3742
        %3964 = vmatprep.subr.bf16.mxu0 0
        %3965 = vmatpush1.bf16.msra.mxu0 %v3747
        %3966 = vmatprep.mubr.bf16.mxu0 %v2646
        %3967 = vmatmul.mubr.bf16.gmra.mrb[0].mxu0 %v2645
        %v3968 = vpop.f32.mrb[0].mxu0
        %v3969 = vadd.f32 %v3398, %v3968
        %v3970 = vpop.f32.mrb[0].mxu0
        %v3971 = vpop.f32.mrb[0].mxu0
        %v3972 = vadd.f32 %v3401, %v3971
        %v3973 = vpop.f32.mrb[0].mxu0
        %3974 = vmatprep.mubr.bf16.mxu0 %v2648
        %3975 = vmatmul.mubr.bf16.gmra.mrb[0].mxu0 %v2647
        %v3976 = vpop.f32.mrb[0].mxu0
        %v3977 = vadd.f32 %v3406, %v3976
        %v3978 = vpop.f32.mrb[0].mxu0
        %v3979 = vpop.f32.mrb[0].mxu0
        %v3980 = vadd.f32 %v3409, %v3979
        %v3981 = vpop.f32.mrb[0].mxu0
        %3982 = vdwg.mxu0
        %v3983 = vld [vmem:[%s19] sm:$0x1f]
        %v3985 = vlaneseq
        %v3986 = vshrl.u32 %v3985, 7
        %v3987 = vsub.s32 0, %v3986
        %v3988 = vrot.slane %v3983, %v3987
        %v3989 = vlaneseq
        %v3990 = vshrl.u32 %v3989, 7
        %v3991 = vsub.s32 1, %v3990
        %v3992 = vrot.slane %v3983, %v3991
        %v3993 = vlaneseq
        %v3994 = vshrl.u32 %v3993, 7
        %v3995 = vsub.s32 2, %v3994
        %v3996 = vrot.slane %v3983, %v3995
        %v3997 = vlaneseq
        %v3998 = vshrl.u32 %v3997, 7
        %v3999 = vsub.s32 3, %v3998
        %v4000 = vrot.slane %v3983, %v3999
        %v4001 = vlaneseq
        %v4002 = vshrl.u32 %v4001, 7
        %v4003 = vsub.s32 4, %v4002
        %v4004 = vrot.slane %v3983, %v4003
        %v4010 = vadd.f32 %v3863, %v3988
        %v4011 = vadd.f32 %v3865, %v3992
        %v4012 = vadd.f32 %v3916, %v3996
        %v4013 = vadd.f32 %v3918, %v4000
        %v4014 = vadd.f32 %v3969, %v4004
        %v4015 = vadd.f32 %v3867, %v3988
        %v4016 = vadd.f32 %v3869, %v3992
        %v4017 = vadd.f32 %v3920, %v3996
        %v4018 = vadd.f32 %v3922, %v4000
        %v4019 = vadd.f32 %v3972, %v4004
        %v4020 = vadd.f32 %v3873, %v3988
        %v4021 = vadd.f32 %v3875, %v3992
        %v4022 = vadd.f32 %v3926, %v3996
        %v4023 = vadd.f32 %v3928, %v4000
        %v4024 = vadd.f32 %v3977, %v4004
        %v4025 = vadd.f32 %v3877, %v3988
        %v4026 = vadd.f32 %v3879, %v3992
        %v4027 = vadd.f32 %v3930, %v3996
        %v4028 = vadd.f32 %v3932, %v4000
        %v4029 = vadd.f32 %v3980, %v4004
        %4030 = vst [vmem:[%s733] sm:$0xff] %v4010
        %4031 = vst [vmem:[%s733 + $0x8] sm:$0xff] %v4011
        %4032 = vst [vmem:[%s733 + $0x10] sm:$0xff] %v4012
        %4033 = vst [vmem:[%s733 + $0x18] sm:$0xff] %v4013
        %4034 = vst [vmem:[%s733 + $0x20] sm:$0xff] %v4014
        %4035 = vst [vmem:[%s733 + $0x28] sm:$0xff] %v4015
        %4036 = vst [vmem:[%s733 + $0x30] sm:$0xff] %v4016
        %4037 = vst [vmem:[%s733 + $0x38] sm:$0xff] %v4017
        %4038 = vst [vmem:[%s733 + $0x40] sm:$0xff] %v4018
        %4039 = vst [vmem:[%s733 + $0x48] sm:$0xff] %v4019
        %4040 = vst [vmem:[%s733 + $0x50] sm:$0xff] %v4020
        %4041 = vst [vmem:[%s733 + $0x58] sm:$0xff] %v4021
        %4042 = vst [vmem:[%s733 + $0x60] sm:$0xff] %v4022
        %4043 = vst [vmem:[%s733 + $0x68] sm:$0xff] %v4023
        %4044 = vst [vmem:[%s733 + $0x70] sm:$0xff] %v4024
        %4045 = vst [vmem:[%s733 + $0x78] sm:$0xff] %v4025
        %4046 = vst [vmem:[%s733 + $0x80] sm:$0xff] %v4026
        %4047 = vst [vmem:[%s733 + $0x88] sm:$0xff] %v4027
        %4048 = vst [vmem:[%s733 + $0x90] sm:$0xff] %v4028
        %4049 = vst [vmem:[%s733 + $0x98] sm:$0xff] %v4029
        %s4050 = sand.u32 %s478, 1
        %s4051 = scalar_lea.sflag [#allocation4], %s4050
        %s4052 = sand.u32 %s478, 1
        %s4053 = smul.addr %s4052, 160
        %s4054 = scalar_lea.vmem [#allocation13], %s4053
        // Predicated region
        $region125: #{mesh_encoder_forward.1} parent=99 // pred_check
          %p4055 = pneg %p488
        $region126: #{mesh_encoder_forward.1} parent=99 // pred_check_branch
          %4057 = sbr.rel (%p4055) target = $region128
        $region127: #{mesh_encoder_forward.1} parent=99 // pred_region
          %s4059 = ssub.s32 2560, 2560
          %4060 = vsyncadd %s4051, %s4059
          %s4061 = smul.addr %s40, 20
          %s4062 = smul.addr %s4061, 128
          %s4063 = scalar_lea.hbm %s20, %s4062
          %s4064 = sshll.u32 %s4054, 4
          %s4065 = int_to_ptr.vmem [resolvable:$true] %s4064
          %4070 = dma.vmem_to_hbm [thread:$0]  %s4065, 2560, %s4063, %s4051, 640, 640, 40
        $region128: #{mesh_encoder_forward.1} parent=99 // pred_fallthru
          _
      $region100: #{mesh_encoder_forward.1} parent=5 // pred_fallthru
        _
      %p4071 = scmp.le.s32.totalorder 2, %s35
      // Predicated region
      $region129: #{mesh_encoder_forward.1} parent=5 // pred_check
        %p4072 = pneg %p4071
      $region130: #{mesh_encoder_forward.1} parent=5 // pred_check_branch
        %4074 = sbr.rel (%p4072) target = $region132
      $region131: #{mesh_encoder_forward.1} parent=5 // pred_region
        %s4075 = ssub.s32 %s35, 2
        // Predicated region
        $region133: #{mesh_encoder_forward.1} parent=131 // pred_check
          %p4076 = pneg %p494
        $region134: #{mesh_encoder_forward.1} parent=131 // pred_check_branch
          %4078 = sbr.rel (%p4076) target = $region136
        $region135: #{mesh_encoder_forward.1} parent=131 // pred_region
          %s4079 = sand.u32 %s479, 1
          %s4080 = scalar_lea.sflag [#allocation4], %s4079
          %s4081 = sand.u32 %s479, 1
          %s4082 = smul.addr %s4081, 160
          %s4083 = scalar_lea.vmem [#allocation13], %s4082
          %4084 = dma.done %s4080, 2560
        $region136: #{mesh_encoder_forward.1} parent=131 // pred_fallthru
          _
      $region132: #{mesh_encoder_forward.1} parent=5 // pred_fallthru
        _
    $region6: #{mesh_encoder_forward.1} parent=1 // loop_footer
      %s39 = sadd.s32 1, %s35
    $region7: #{mesh_encoder_forward.1} parent=1 // loop_footer_branch
      %34 = sbr.rel target = $region3
    $region8: #{mesh_encoder_forward.1} parent=1 // loop_exit
      _
    %4085 = vsyncpa [#allocation3], 1
    %s4086 = scalar_lea.sflag [#allocation3], 1
    %4087 = vsyncpa %s4086, 1
    %4088 = vsyncpa [#allocation6], 1
    %4089 = vsyncpa [#allocation9], 1
    %4090 = vsyncpa [#allocation12], 1
    %4091 = vsyncpa [#allocation4], 1
    %s4092 = scalar_lea.sflag [#allocation4], 1
    %4093 = vsyncpa %s4092, 1

</llo_original>
